<compile_context>
chip_gen: v7x
topology: tpu7x:2x2x1
jax: 0.10.0
libtpu: 0.0.40
codegen_flags: <defaults>
</compile_context>

<pallas_src>
import functools

import jax
import jax.numpy as jnp
from jax.experimental import pallas as pl
from jax.experimental.pallas import tpu as pltpu

LANES = 128  # padded output-channel width for every matmul (lane-dense stores)


# ----------------------------------------------------------------------------
# Pallas kernels
# ----------------------------------------------------------------------------
def _conv_pool_kernel(x_ref, w_ref, b_ref, o_ref, v_ref, *, W):
    """Fused conv-as-matmul + bias(+BN) + ReLU + 2x2/2 max-pool.

    x_ref : (g*2*W, K) bf16 patch rows for g image-row pairs, row order (h, w).
    w_ref : (K, 128)  bf16 BN-folded conv weights (channels padded to 128).
    b_ref : (1, 128)  f32 BN-folded bias.
    o_ref : (g*W//2, 128) bf16 pooled + activated output, row order (ho, wo).
    v_ref : VMEM scratch (g*W, 128) f32 holding the vertical pair max.
    """
    Wo = W // 2
    tm = x_ref.shape[0]
    g = tm // (2 * W)

    # Conv as MXU matmul, f32 accumulate, then bias(+BN) + ReLU in f32.
    acc = jnp.dot(x_ref[...], w_ref[...], preferred_element_type=jnp.float32)
    acc = jnp.maximum(acc + b_ref[...], 0.0)

    # Vertical (h) pair max: leading-dim select (W is a multiple of 8, so the
    # reshape splits whole sublane tiles -> no relayout).
    a4 = acc.reshape(g, 2, W, LANES)
    v = jnp.maximum(a4[:, 0, :, :], a4[:, 1, :, :])          # (g, W, 128)
    v_ref[...] = v.reshape(g * W, LANES)

    # Horizontal (w) pair max: stride-2 sublane reads of the scratch.
    left = v_ref[pl.ds(0, g * Wo, stride=2), :]               # w = 0, 2, 4, ...
    right = v_ref[pl.ds(1, g * Wo, stride=2), :]              # w = 1, 3, 5, ...
    o_ref[...] = jnp.maximum(left, right).astype(o_ref.dtype)


def _fc_tail_kernel(x_ref, w1_ref, b1_ref, w2_ref, b2_ref, w3_ref, b3_ref,
                    o_ref):
    # fc1+ReLU -> fc2+ReLU -> fc3 fused; intermediates never leave vregs.
    h = jnp.dot(x_ref[...], w1_ref[...], preferred_element_type=jnp.float32)
    h = jnp.maximum(h + b1_ref[...], 0.0)
    h = jnp.dot(h.astype(jnp.bfloat16), w2_ref[...],
                preferred_element_type=jnp.float32)
    h = jnp.maximum(h + b2_ref[...], 0.0)
    h = jnp.dot(h.astype(jnp.bfloat16), w3_ref[...],
                preferred_element_type=jnp.float32)
    o_ref[...] = h + b3_ref[...]


# ----------------------------------------------------------------------------
# Tiling heuristics
# ----------------------------------------------------------------------------
def _pick_groups_per_tile(G, W, target_rows=1024, min_steps=4):
    """g = image-row-pair groups per grid step for the fused conv+pool kernel.
    Constraints: g divides G; pooled out rows g*(W//2) are a multiple of 8 (or
    g == G).  Preferences: tile rows g*2*W <= target_rows (VMEM cap, holds for
    any batch), and >= min_steps grid steps when the problem allows it (v7x
    megacore gets >= 2 pipelined steps per TensorCore)."""
    Wo = W // 2
    cands = [g for g in range(1, G + 1)
             if G % g == 0 and ((g * Wo) % 8 == 0 or g == G)]
    fitting = [g for g in cands if g * 2 * W <= target_rows] or [cands[0]]
    deep = [g for g in fitting if G // g >= min_steps]
    return max(deep) if deep else max(fitting)


def _pick_row_tile(M, target_rows=512, min_steps=4):
    """Row tile for the fc tail: a multiple of 8 dividing M (M pre-padded to a
    multiple of 8), close to target_rows, preferring >= min_steps steps."""
    cands = [t for t in range(8, M + 1, 8) if M % t == 0]
    fitting = [t for t in cands if t <= target_rows] or [min(cands)]
    deep = [t for t in fitting if M // t >= min_steps]
    return max(deep) if deep else max(fitting)


# ----------------------------------------------------------------------------
# Wrappers
# ----------------------------------------------------------------------------
def fused_conv_pool(patches, w, b, B, H, W):
    """relu(patches @ w + b) followed by 2x2/2 max-pool, all in one kernel.
    patches: (B*H*W, K) bf16, rows in (b, h, w) order.
    Returns (B*(H//2)*(W//2), 128) bf16, rows in (b, ho, wo) order."""
    M, K = patches.shape
    Ho, Wo = H // 2, W // 2
    G = B * Ho                       # image-row-pair groups
    g = _pick_groups_per_tile(G, W)
    n_tiles = G // g
    tm = g * 2 * W                   # patch rows per grid step
    to = g * Wo                      # pooled output rows per grid step
    cost = pl.CostEstimate(
        flops=2 * M * K * LANES + 3 * M * LANES,
        transcendentals=0,
        bytes_accessed=M * K * 2 + K * LANES * 2 + (M // 4) * LANES * 2)
    return pl.pallas_call(
        functools.partial(_conv_pool_kernel, W=W),
        out_shape=jax.ShapeDtypeStruct((B * Ho * Wo, LANES), jnp.bfloat16),
        grid_spec=pltpu.PrefetchScalarGridSpec(
            num_scalar_prefetch=0,
            grid=(n_tiles,),
            in_specs=[
                pl.BlockSpec((tm, K), lambda i: (i, 0)),
                pl.BlockSpec((K, LANES), lambda i: (0, 0)),
                pl.BlockSpec((1, LANES), lambda i: (0, 0)),
            ],
            out_specs=pl.BlockSpec((to, LANES), lambda i: (i, 0)),
            scratch_shapes=[pltpu.VMEM((g * W, LANES), jnp.float32)],
        ),
        compiler_params=pltpu.CompilerParams(
            dimension_semantics=("parallel",)),
        cost_estimate=cost,
    )(patches, w, b)


def fused_fc_tail(feat, p):
    """ReLU(fc1) -> ReLU(fc2) -> fc3 as one pallas_call, row-tiled over the
    (padded) batch; weights keep a constant index_map so they stay VMEM
    resident across grid steps.  feat: (Mp, 2304) bf16, Mp % 8 == 0."""
    Mp, K1 = feat.shape
    tr = _pick_row_tile(Mp)
    n_tiles = Mp // tr
    const = lambda i: (0, 0)
    cost = pl.CostEstimate(
        flops=2 * Mp * (K1 + 2 * LANES) * LANES,
        transcendentals=0,
        bytes_accessed=Mp * K1 * 2 + (K1 + 2 * LANES) * LANES * 2
        + Mp * LANES * 4)
    return pl.pallas_call(
        _fc_tail_kernel,
        out_shape=jax.ShapeDtypeStruct((Mp, LANES), jnp.float32),
        grid_spec=pltpu.PrefetchScalarGridSpec(
            num_scalar_prefetch=0,
            grid=(n_tiles,),
            in_specs=[
                pl.BlockSpec((tr, K1), lambda i: (i, 0)),
                pl.BlockSpec((K1, LANES), const),
                pl.BlockSpec((1, LANES), const),
                pl.BlockSpec((LANES, LANES), const),
                pl.BlockSpec((1, LANES), const),
                pl.BlockSpec((LANES, LANES), const),
                pl.BlockSpec((1, LANES), const),
            ],
            out_specs=pl.BlockSpec((tr, LANES), lambda i: (i, 0)),
        ),
        compiler_params=pltpu.CompilerParams(
            dimension_semantics=("parallel",)),
        cost_estimate=cost,
    )(feat, p["fc1_w"], p["fc1_b"], p["fc2_w"], p["fc2_b"],
      p["fc3_w"], p["fc3_b"])


def conv_patches_bf16(x, k=5, pad=2):
    """NHWC -> (B*H*W, k*k*C) bf16 stride-1 patches via an identity-kernel
    conv.  Feature order is channel-major: index = cin*k*k + kh*k + kw.
    No K padding (the weights carry the lane padding; the MXU pads K)."""
    B, H, W, C = x.shape
    p = jax.lax.conv_general_dilated_patches(
        x.astype(jnp.bfloat16),
        filter_shape=(k, k),
        window_strides=(1, 1),
        padding=((pad, pad), (pad, pad)),
        dimension_numbers=("NHWC", "HWIO", "NHWC"),
    )                                                  # (B, H, W, C*k*k) bf16
    return p.reshape(B * H * W, C * k * k)


# ----------------------------------------------------------------------------
# Parameters (PyTorch-style init) + one-time packing
# ----------------------------------------------------------------------------
def _uniform(key, shape, bound):
    return jax.random.uniform(key, shape, jnp.float32, -bound, bound)


def init_params(key, input_channels=3, num_classes=2):
    ks = jax.random.split(key, 10)
    p = {}
    fan = input_channels * 25
    p["w_conv1"] = _uniform(ks[0], (6, input_channels, 5, 5), fan ** -0.5)
    p["b_conv1"] = _uniform(ks[1], (6,), fan ** -0.5)
    fan = 6 * 25
    p["w_conv2"] = _uniform(ks[2], (16, 6, 5, 5), fan ** -0.5)
    p["b_conv2"] = _uniform(ks[3], (16,), fan ** -0.5)
    fan = 16 * 12 * 12
    p["w_fc1"] = _uniform(ks[4], (120, fan), fan ** -0.5)
    p["b_fc1"] = _uniform(ks[5], (120,), fan ** -0.5)
    p["w_fc2"] = _uniform(ks[6], (84, 120), 120 ** -0.5)
    p["b_fc2"] = _uniform(ks[7], (84,), 120 ** -0.5)
    p["w_fc3"] = _uniform(ks[8], (num_classes, 84), 84 ** -0.5)
    p["b_fc3"] = _uniform(ks[9], (num_classes,), 84 ** -0.5)
    # BatchNorm at fresh init: gamma=1, beta=0, running mean=0, var=1.
    for i, c in ((1, 6), (2, 16)):
        p[f"bn{i}_gamma"] = jnp.ones((c,), jnp.float32)
        p[f"bn{i}_beta"] = jnp.zeros((c,), jnp.float32)
        p[f"bn{i}_mean"] = jnp.zeros((c,), jnp.float32)
        p[f"bn{i}_var"] = jnp.ones((c,), jnp.float32)
    return p


def prepare_params(p, eps=1e-5):
    """One-time packing: fold eval-mode BN into conv weights/bias, reorder conv
    kernels to (cin,kh,kw) rows (matching conv_general_dilated_patches),
    pre-transpose/permute FC weights, zero-pad channel dims to 128 lanes,
    cast all weights to bf16.  No per-call work."""
    q = {}

    def conv_pack(w, b, gamma, beta, mean, var):
        cout, cin, kh, kw = w.shape
        scale = gamma / jnp.sqrt(var + eps)
        shift = beta - mean * scale
        mat = jnp.transpose(w, (1, 2, 3, 0)).reshape(cin * kh * kw, cout)
        mat = mat * scale[None, :]                    # BN scale folded into W
        bias = b * scale + shift                      # BN shift folded into b
        wq = jnp.pad(mat, ((0, 0), (0, LANES - cout))).astype(jnp.bfloat16)
        bq = jnp.pad(bias, (0, LANES - cout)).reshape(1, LANES)
        return wq, bq.astype(jnp.float32)

    q["conv1_w"], q["conv1_b"] = conv_pack(
        p["w_conv1"], p["b_conv1"], p["bn1_gamma"], p["bn1_beta"],
        p["bn1_mean"], p["bn1_var"])
    q["conv2_w"], q["conv2_b"] = conv_pack(
        p["w_conv2"], p["b_conv2"], p["bn2_gamma"], p["bn2_beta"],
        p["bn2_mean"], p["bn2_var"])

    # fc1: PyTorch flattens (C=16, H=12, W=12); our activation flatten order is
    # (H, W, C16) -> permute the weight rows instead of the activations.
    w1 = p["w_fc1"].reshape(120, 16, 12, 12)          # (out, c, h, w)
    w1 = jnp.transpose(w1, (2, 3, 1, 0)).reshape(12 * 12 * 16, 120)
    q["fc1_w"] = jnp.pad(w1, ((0, 0), (0, LANES - 120))).astype(jnp.bfloat16)
    q["fc1_b"] = jnp.pad(p["b_fc1"], (0, LANES - 120)).reshape(1, LANES)

    q["fc2_w"] = jnp.pad(p["w_fc2"].T,
                         ((0, LANES - 120), (0, LANES - 84))).astype(jnp.bfloat16)
    q["fc2_b"] = jnp.pad(p["b_fc2"], (0, LANES - 84)).reshape(1, LANES)

    nc = p["w_fc3"].shape[0]
    q["fc3_w"] = jnp.pad(p["w_fc3"].T,
                         ((0, LANES - 84), (0, LANES - nc))).astype(jnp.bfloat16)
    q["fc3_b"] = jnp.pad(p["b_fc3"], (0, LANES - nc)).reshape(1, LANES)
    return q


# ----------------------------------------------------------------------------
# Forward pass (eval / inference semantics)
# ----------------------------------------------------------------------------
def lenet_forward(params, x_nchw, *, num_classes=2):
    B, _, H, W = x_nchw.shape
    x = jnp.transpose(x_nchw, (0, 2, 3, 1))                       # NHWC

    # conv1 + bn1 + relu + pool1 (fused): (B,H,W,3) -> (B*H/2*W/2, 128) bf16
    p1 = conv_patches_bf16(x, k=5, pad=2)                         # (B*H*W, 75)
    y1 = fused_conv_pool(p1, params["conv1_w"], params["conv1_b"], B, H, W)

    # conv2 + bn2 + relu + pool2 (fused)
    H2, W2 = H // 2, W // 2
    y1 = y1.reshape(B, H2, W2, LANES)[..., :6]                    # real channels
    p2 = conv_patches_bf16(y1, k=5, pad=2)                        # (B*H2*W2,150)
    y2 = fused_conv_pool(p2, params["conv2_w"], params["conv2_b"], B, H2, W2)

    # flatten in (H, W, C16) order -- fc1 weight rows were pre-permuted to match
    H4, W4 = H2 // 2, W2 // 2
    feat = y2.reshape(B, H4 * W4, LANES)[:, :, :16].reshape(B, H4 * W4 * 16)
    Mp = max(8, ((B + 7) // 8) * 8)
    feat = jnp.pad(feat, ((0, Mp - B), (0, 0)))                   # bf16 already

    # fc1+relu -> dropout(identity) -> fc2+relu -> dropout(identity) -> fc3
    logits = fused_fc_tail(feat, params)                          # (Mp,128) f32
    return logits[:B, :num_classes]


# ----------------------------------------------------------------------------
# Pure-XLA float32 reference (eval-mode BN, dropout = identity)
# ----------------------------------------------------------------------------
def lenet_reference(p, x_nchw, eps=1e-5):
    def bn(x, g, b, m, v):
        inv = g / jnp.sqrt(v + eps)
        return x * inv[None, :, None, None] + (b - m * inv)[None, :, None, None]

    def conv(x, w, b):
        y = jax.lax.conv_general_dilated(
            x, w, window_strides=(1, 1), padding=((2, 2), (2, 2)),
            dimension_numbers=("NCHW", "OIHW", "NCHW"))
        return y + b[None, :, None, None]

    def pool(x):
        b, c, h, w = x.shape
        return jnp.max(x.reshape(b, c, h // 2, 2, w // 2, 2), axis=(3, 5))

    x = x_nchw.astype(jnp.float32)
    y = pool(jax.nn.relu(bn(conv(x, p["w_conv1"], p["b_conv1"]),
                            p["bn1_gamma"], p["bn1_beta"],
                            p["bn1_mean"], p["bn1_var"])))
    y = pool(jax.nn.relu(bn(conv(y, p["w_conv2"], p["b_conv2"]),
                            p["bn2_gamma"], p["bn2_beta"],
                            p["bn2_mean"], p["bn2_var"])))
    f = y.reshape(y.shape[0], -1)                 # (B, 16*12*12), (C,H,W) order
    f = jax.nn.relu(f @ p["w_fc1"].T + p["b_fc1"])
    f = jax.nn.relu(f @ p["w_fc2"].T + p["b_fc2"])
    return f @ p["w_fc3"].T + p["b_fc3"]


if __name__ == "__main__":
    key = jax.random.PRNGKey(0)
    k_param, k_x = jax.random.split(key)
    raw = init_params(k_param, input_channels=3, num_classes=2)
    params = prepare_params(raw)   # one-time weight packing (not per call)
    # fc1 expects 16*12*12 features => the model implies 48x48 spatial input.
    x = jax.random.normal(k_x, (2, 3, 48, 48), jnp.float32)       # NCHW
    fwd = jax.jit(functools.partial(lenet_forward, num_classes=2))
    out = jax.block_until_ready(fwd(params, x))
    assert out.shape == (2, 2), out.shape
    # bf16-tolerance smoke check against the pure-XLA f32 reference.
    ref = jax.block_until_ready(jax.jit(lenet_reference)(raw, x))
    err = float(jnp.max(jnp.abs(out - ref)))
    assert err < 5e-2, f"max |kernel - reference| = {err}"
    print("KERNEL_OK")
</pallas_src>

<mosaic_0001>
module attributes {stable_mosaic.version = 11 : i64} {
  func.func @_conv_pool_kernel(%arg0: i32, %arg1: memref<768x75xbf16, #tpu.memory_space<vmem>>, %arg2: memref<75x128xbf16, #tpu.memory_space<vmem>>, %arg3: memref<1x128xf32, #tpu.memory_space<vmem>>, %arg4: memref<192x128xbf16, #tpu.memory_space<vmem>>, %arg5: memref<384x128xf32, #tpu.memory_space<vmem>>) attributes {dimension_semantics = [#tpu.dimension_semantics<parallel>], iteration_bounds = array<i64: 6>, scalar_prefetch = 0 : i64, scratch_operands = 1 : i64, tpu.core_type = #tpu.core_type<tc>, window_params = [{transform_indices = @transform_0, window_bounds = array<i64: 768, 75>}, {pipeline_mode = #tpu.pipeline_mode<synchronous>, transform_indices = @transform_1, window_bounds = array<i64: 75, 128>}, {pipeline_mode = #tpu.pipeline_mode<synchronous>, transform_indices = @transform_2, window_bounds = array<i64: 1, 128>}, {transform_indices = @transform_3, window_bounds = array<i64: 192, 128>}]} {
    %c0 = arith.constant 0 : index
    %c0_0 = arith.constant 0 : index
    %0 = vector.load %arg1[%c0, %c0_0] : memref<768x75xbf16, #tpu.memory_space<vmem>>, vector<768x75xbf16>
    %c0_1 = arith.constant 0 : index
    %c0_2 = arith.constant 0 : index
    %1 = vector.load %arg2[%c0_1, %c0_2] : memref<75x128xbf16, #tpu.memory_space<vmem>>, vector<75x128xbf16>
    %cst = arith.constant dense<0.000000e+00> : vector<768x128xf32>
    %2 = tpu.matmul %0, %1, %cst {dimension_numbers = #tpu.dot_dimension_numbers<[1], [0], [0], [1], [0, 0, 1, 1], [], []>} : vector<768x75xbf16>, vector<75x128xbf16>, vector<768x128xf32> -> vector<768x128xf32>
    %c0_3 = arith.constant 0 : index
    %c0_4 = arith.constant 0 : index
    %3 = vector.load %arg3[%c0_3, %c0_4] : memref<1x128xf32, #tpu.memory_space<vmem>>, vector<1x128xf32>
    %4 = vector.broadcast %3 : vector<1x128xf32> to vector<768x128xf32>
    %5 = arith.addf %2, %4 : vector<768x128xf32>
    %cst_5 = arith.constant 0.000000e+00 : f32
    %6 = vector.broadcast %cst_5 : f32 to vector<768x128xf32>
    %7 = arith.maximumf %5, %6 : vector<768x128xf32>
    %8 = vector.shape_cast %7 : vector<768x128xf32> to vector<8x2x48x128xf32>
    %9 = vector.extract_strided_slice %8 {offsets = [0, 0, 0, 0], sizes = [8, 1, 48, 128], strides = [1, 1, 1, 1]} : vector<8x2x48x128xf32> to vector<8x1x48x128xf32>
    %10 = vector.shape_cast %9 : vector<8x1x48x128xf32> to vector<8x48x128xf32>
    %11 = vector.extract_strided_slice %8 {offsets = [0, 1, 0, 0], sizes = [8, 1, 48, 128], strides = [1, 1, 1, 1]} : vector<8x2x48x128xf32> to vector<8x1x48x128xf32>
    %12 = vector.shape_cast %11 : vector<8x1x48x128xf32> to vector<8x48x128xf32>
    %13 = arith.maximumf %10, %12 : vector<8x48x128xf32>
    %14 = vector.shape_cast %13 : vector<8x48x128xf32> to vector<384x128xf32>
    %c0_6 = arith.constant 0 : index
    %c0_7 = arith.constant 0 : index
    %15 = vector.load %arg5[%c0_6, %c0_7] : memref<384x128xf32, #tpu.memory_space<vmem>>, vector<384x128xf32>
    tpu.vector_store %arg5[%c0_6, %c0_7], %14 {strides = array<i32>} : memref<384x128xf32, #tpu.memory_space<vmem>>, vector<384x128xf32>,
    %c0_8 = arith.constant 0 : index
    %c0_9 = arith.constant 0 : index
    %16 = tpu.strided_load %arg5[%c0_8, %c0_9] {strides = array<i32: 2, 1>} : memref<384x128xf32, #tpu.memory_space<vmem>>, vector<192x128xf32>
    %c1 = arith.constant 1 : index
    %c0_10 = arith.constant 0 : index
    %17 = tpu.strided_load %arg5[%c1, %c0_10] {strides = array<i32: 2, 1>} : memref<384x128xf32, #tpu.memory_space<vmem>>, vector<192x128xf32>
    %18 = arith.maximumf %16, %17 : vector<192x128xf32>
    %19 = arith.truncf %18 : vector<192x128xf32> to vector<192x128xbf16>
    %c0_11 = arith.constant 0 : index
    %c0_12 = arith.constant 0 : index
    %20 = vector.load %arg4[%c0_11, %c0_12] : memref<192x128xbf16, #tpu.memory_space<vmem>>, vector<192x128xbf16>
    tpu.vector_store %arg4[%c0_11, %c0_12], %19 {strides = array<i32>} : memref<192x128xbf16, #tpu.memory_space<vmem>>, vector<192x128xbf16>,
    return
  }
  func.func @transform_0(%arg0: i32) -> (i32, i32) {
    %c0_i32 = arith.constant 0 : i32
    %c0_i32_0 = arith.constant 0 : i32
    return %arg0, %c0_i32 : i32, i32
  }
  func.func @transform_1(%arg0: i32) -> (i32, i32) {
    %c0_i32 = arith.constant 0 : i32
    %c0_i32_0 = arith.constant 0 : i32
    %c0_i32_1 = arith.constant 0 : i32
    return %c0_i32, %c0_i32_0 : i32, i32
  }
  func.func @transform_2(%arg0: i32) -> (i32, i32) {
    %c0_i32 = arith.constant 0 : i32
    %c0_i32_0 = arith.constant 0 : i32
    %c0_i32_1 = arith.constant 0 : i32
    return %c0_i32, %c0_i32_0 : i32, i32
  }
  func.func @transform_3(%arg0: i32) -> (i32, i32) {
    %c0_i32 = arith.constant 0 : i32
    %c0_i32_0 = arith.constant 0 : i32
    return %arg0, %c0_i32 : i32, i32
  }
}

module attributes {stable_mosaic.version = 11 : i64} {
  func.func @_conv_pool_kernel(%arg0: i32, %arg1: memref<288x150xbf16, #tpu.memory_space<vmem>>, %arg2: memref<150x128xbf16, #tpu.memory_space<vmem>>, %arg3: memref<1x128xf32, #tpu.memory_space<vmem>>, %arg4: memref<72x128xbf16, #tpu.memory_space<vmem>>, %arg5: memref<144x128xf32, #tpu.memory_space<vmem>>) attributes {dimension_semantics = [#tpu.dimension_semantics<parallel>], iteration_bounds = array<i64: 4>, scalar_prefetch = 0 : i64, scratch_operands = 1 : i64, tpu.core_type = #tpu.core_type<tc>, window_params = [{transform_indices = @transform_0, window_bounds = array<i64: 288, 150>}, {pipeline_mode = #tpu.pipeline_mode<synchronous>, transform_indices = @transform_1, window_bounds = array<i64: 150, 128>}, {pipeline_mode = #tpu.pipeline_mode<synchronous>, transform_indices = @transform_2, window_bounds = array<i64: 1, 128>}, {transform_indices = @transform_3, window_bounds = array<i64: 72, 128>}]} {
    %c0 = arith.constant 0 : index
    %c0_0 = arith.constant 0 : index
    %0 = vector.load %arg1[%c0, %c0_0] : memref<288x150xbf16, #tpu.memory_space<vmem>>, vector<288x150xbf16>
    %c0_1 = arith.constant 0 : index
    %c0_2 = arith.constant 0 : index
    %1 = vector.load %arg2[%c0_1, %c0_2] : memref<150x128xbf16, #tpu.memory_space<vmem>>, vector<150x128xbf16>
    %cst = arith.constant dense<0.000000e+00> : vector<288x128xf32>
    %2 = tpu.matmul %0, %1, %cst {dimension_numbers = #tpu.dot_dimension_numbers<[1], [0], [0], [1], [0, 0, 1, 1], [], []>} : vector<288x150xbf16>, vector<150x128xbf16>, vector<288x128xf32> -> vector<288x128xf32>
    %c0_3 = arith.constant 0 : index
    %c0_4 = arith.constant 0 : index
    %3 = vector.load %arg3[%c0_3, %c0_4] : memref<1x128xf32, #tpu.memory_space<vmem>>, vector<1x128xf32>
    %4 = vector.broadcast %3 : vector<1x128xf32> to vector<288x128xf32>
    %5 = arith.addf %2, %4 : vector<288x128xf32>
    %cst_5 = arith.constant 0.000000e+00 : f32
    %6 = vector.broadcast %cst_5 : f32 to vector<288x128xf32>
    %7 = arith.maximumf %5, %6 : vector<288x128xf32>
    %8 = vector.shape_cast %7 : vector<288x128xf32> to vector<6x2x24x128xf32>
    %9 = vector.extract_strided_slice %8 {offsets = [0, 0, 0, 0], sizes = [6, 1, 24, 128], strides = [1, 1, 1, 1]} : vector<6x2x24x128xf32> to vector<6x1x24x128xf32>
    %10 = vector.shape_cast %9 : vector<6x1x24x128xf32> to vector<6x24x128xf32>
    %11 = vector.extract_strided_slice %8 {offsets = [0, 1, 0, 0], sizes = [6, 1, 24, 128], strides = [1, 1, 1, 1]} : vector<6x2x24x128xf32> to vector<6x1x24x128xf32>
    %12 = vector.shape_cast %11 : vector<6x1x24x128xf32> to vector<6x24x128xf32>
    %13 = arith.maximumf %10, %12 : vector<6x24x128xf32>
    %14 = vector.shape_cast %13 : vector<6x24x128xf32> to vector<144x128xf32>
    %c0_6 = arith.constant 0 : index
    %c0_7 = arith.constant 0 : index
    %15 = vector.load %arg5[%c0_6, %c0_7] : memref<144x128xf32, #tpu.memory_space<vmem>>, vector<144x128xf32>
    tpu.vector_store %arg5[%c0_6, %c0_7], %14 {strides = array<i32>} : memref<144x128xf32, #tpu.memory_space<vmem>>, vector<144x128xf32>,
    %c0_8 = arith.constant 0 : index
    %c0_9 = arith.constant 0 : index
    %16 = tpu.strided_load %arg5[%c0_8, %c0_9] {strides = array<i32: 2, 1>} : memref<144x128xf32, #tpu.memory_space<vmem>>, vector<72x128xf32>
    %c1 = arith.constant 1 : index
    %c0_10 = arith.constant 0 : index
    %17 = tpu.strided_load %arg5[%c1, %c0_10] {strides = array<i32: 2, 1>} : memref<144x128xf32, #tpu.memory_space<vmem>>, vector<72x128xf32>
    %18 = arith.maximumf %16, %17 : vector<72x128xf32>
    %19 = arith.truncf %18 : vector<72x128xf32> to vector<72x128xbf16>
    %c0_11 = arith.constant 0 : index
    %c0_12 = arith.constant 0 : index
    %20 = vector.load %arg4[%c0_11, %c0_12] : memref<72x128xbf16, #tpu.memory_space<vmem>>, vector<72x128xbf16>
    tpu.vector_store %arg4[%c0_11, %c0_12], %19 {strides = array<i32>} : memref<72x128xbf16, #tpu.memory_space<vmem>>, vector<72x128xbf16>,
    return
  }
  func.func @transform_0(%arg0: i32) -> (i32, i32) {
    %c0_i32 = arith.constant 0 : i32
    %c0_i32_0 = arith.constant 0 : i32
    return %arg0, %c0_i32 : i32, i32
  }
  func.func @transform_1(%arg0: i32) -> (i32, i32) {
    %c0_i32 = arith.constant 0 : i32
    %c0_i32_0 = arith.constant 0 : i32
    %c0_i32_1 = arith.constant 0 : i32
    return %c0_i32, %c0_i32_0 : i32, i32
  }
  func.func @transform_2(%arg0: i32) -> (i32, i32) {
    %c0_i32 = arith.constant 0 : i32
    %c0_i32_0 = arith.constant 0 : i32
    %c0_i32_1 = arith.constant 0 : i32
    return %c0_i32, %c0_i32_0 : i32, i32
  }
  func.func @transform_3(%arg0: i32) -> (i32, i32) {
    %c0_i32 = arith.constant 0 : i32
    %c0_i32_0 = arith.constant 0 : i32
    return %arg0, %c0_i32 : i32, i32
  }
}

module attributes {stable_mosaic.version = 11 : i64} {
  func.func @_fc_tail_kernel(%arg0: i32, %arg1: memref<8x2304xbf16, #tpu.memory_space<vmem>>, %arg2: memref<2304x128xbf16, #tpu.memory_space<vmem>>, %arg3: memref<1x128xf32, #tpu.memory_space<vmem>>, %arg4: memref<128x128xbf16, #tpu.memory_space<vmem>>, %arg5: memref<1x128xf32, #tpu.memory_space<vmem>>, %arg6: memref<128x128xbf16, #tpu.memory_space<vmem>>, %arg7: memref<1x128xf32, #tpu.memory_space<vmem>>, %arg8: memref<8x128xf32, #tpu.memory_space<vmem>>) attributes {dimension_semantics = [#tpu.dimension_semantics<parallel>], iteration_bounds = array<i64: 1>, scalar_prefetch = 0 : i64, scratch_operands = 0 : i64, tpu.core_type = #tpu.core_type<tc>, window_params = [{transform_indices = @transform_0, window_bounds = array<i64: 8, 2304>}, {pipeline_mode = #tpu.pipeline_mode<synchronous>, transform_indices = @transform_1, window_bounds = array<i64: 2304, 128>}, {pipeline_mode = #tpu.pipeline_mode<synchronous>, transform_indices = @transform_2, window_bounds = array<i64: 1, 128>}, {pipeline_mode = #tpu.pipeline_mode<synchronous>, transform_indices = @transform_3, window_bounds = array<i64: 128, 128>}, {pipeline_mode = #tpu.pipeline_mode<synchronous>, transform_indices = @transform_4, window_bounds = array<i64: 1, 128>}, {pipeline_mode = #tpu.pipeline_mode<synchronous>, transform_indices = @transform_5, window_bounds = array<i64: 128, 128>}, {pipeline_mode = #tpu.pipeline_mode<synchronous>, transform_indices = @transform_6, window_bounds = array<i64: 1, 128>}, {transform_indices = @transform_7, window_bounds = array<i64: 8, 128>}]} {
    %c0 = arith.constant 0 : index
    %c0_0 = arith.constant 0 : index
    %0 = vector.load %arg1[%c0, %c0_0] : memref<8x2304xbf16, #tpu.memory_space<vmem>>, vector<8x2304xbf16>
    %c0_1 = arith.constant 0 : index
    %c0_2 = arith.constant 0 : index
    %1 = vector.load %arg2[%c0_1, %c0_2] : memref<2304x128xbf16, #tpu.memory_space<vmem>>, vector<2304x128xbf16>
    %cst = arith.constant dense<0.000000e+00> : vector<8x128xf32>
    %2 = tpu.matmul %0, %1, %cst {dimension_numbers = #tpu.dot_dimension_numbers<[1], [0], [0], [1], [0, 0, 1, 1], [], []>} : vector<8x2304xbf16>, vector<2304x128xbf16>, vector<8x128xf32> -> vector<8x128xf32>
    %c0_3 = arith.constant 0 : index
    %c0_4 = arith.constant 0 : index
    %3 = vector.load %arg3[%c0_3, %c0_4] : memref<1x128xf32, #tpu.memory_space<vmem>>, vector<1x128xf32>
    %4 = vector.broadcast %3 : vector<1x128xf32> to vector<8x128xf32>
    %5 = arith.addf %2, %4 : vector<8x128xf32>
    %cst_5 = arith.constant 0.000000e+00 : f32
    %6 = vector.broadcast %cst_5 : f32 to vector<8x128xf32>
    %7 = arith.maximumf %5, %6 : vector<8x128xf32>
    %8 = arith.truncf %7 : vector<8x128xf32> to vector<8x128xbf16>
    %c0_6 = arith.constant 0 : index
    %c0_7 = arith.constant 0 : index
    %9 = vector.load %arg4[%c0_6, %c0_7] : memref<128x128xbf16, #tpu.memory_space<vmem>>, vector<128x128xbf16>
    %cst_8 = arith.constant dense<0.000000e+00> : vector<8x128xf32>
    %10 = tpu.matmul %8, %9, %cst_8 {dimension_numbers = #tpu.dot_dimension_numbers<[1], [0], [0], [1], [0, 0, 1, 1], [], []>} : vector<8x128xbf16>, vector<128x128xbf16>, vector<8x128xf32> -> vector<8x128xf32>
    %c0_9 = arith.constant 0 : index
    %c0_10 = arith.constant 0 : index
    %11 = vector.load %arg5[%c0_9, %c0_10] : memref<1x128xf32, #tpu.memory_space<vmem>>, vector<1x128xf32>
    %12 = vector.broadcast %11 : vector<1x128xf32> to vector<8x128xf32>
    %13 = arith.addf %10, %12 : vector<8x128xf32>
    %cst_11 = arith.constant 0.000000e+00 : f32
    %14 = vector.broadcast %cst_11 : f32 to vector<8x128xf32>
    %15 = arith.maximumf %13, %14 : vector<8x128xf32>
    %16 = arith.truncf %15 : vector<8x128xf32> to vector<8x128xbf16>
    %c0_12 = arith.constant 0 : index
    %c0_13 = arith.constant 0 : index
    %17 = vector.load %arg6[%c0_12, %c0_13] : memref<128x128xbf16, #tpu.memory_space<vmem>>, vector<128x128xbf16>
    %cst_14 = arith.constant dense<0.000000e+00> : vector<8x128xf32>
    %18 = tpu.matmul %16, %17, %cst_14 {dimension_numbers = #tpu.dot_dimension_numbers<[1], [0], [0], [1], [0, 0, 1, 1], [], []>} : vector<8x128xbf16>, vector<128x128xbf16>, vector<8x128xf32> -> vector<8x128xf32>
    %c0_15 = arith.constant 0 : index
    %c0_16 = arith.constant 0 : index
    %19 = vector.load %arg7[%c0_15, %c0_16] : memref<1x128xf32, #tpu.memory_space<vmem>>, vector<1x128xf32>
    %20 = vector.broadcast %19 : vector<1x128xf32> to vector<8x128xf32>
    %21 = arith.addf %18, %20 : vector<8x128xf32>
    %c0_17 = arith.constant 0 : index
    %c0_18 = arith.constant 0 : index
    %22 = vector.load %arg8[%c0_17, %c0_18] : memref<8x128xf32, #tpu.memory_space<vmem>>, vector<8x128xf32>
    tpu.vector_store %arg8[%c0_17, %c0_18], %21 {strides = array<i32>} : memref<8x128xf32, #tpu.memory_space<vmem>>, vector<8x128xf32>,
    return
  }
  func.func @transform_0(%arg0: i32) -> (i32, i32) {
    %c0_i32 = arith.constant 0 : i32
    %c0_i32_0 = arith.constant 0 : i32
    return %arg0, %c0_i32 : i32, i32
  }
  func.func @transform_1(%arg0: i32) -> (i32, i32) {
    %c0_i32 = arith.constant 0 : i32
    %c0_i32_0 = arith.constant 0 : i32
    %c0_i32_1 = arith.constant 0 : i32
    return %c0_i32, %c0_i32_0 : i32, i32
  }
  func.func @transform_2(%arg0: i32) -> (i32, i32) {
    %c0_i32 = arith.constant 0 : i32
    %c0_i32_0 = arith.constant 0 : i32
    %c0_i32_1 = arith.constant 0 : i32
    return %c0_i32, %c0_i32_0 : i32, i32
  }
  func.func @transform_3(%arg0: i32) -> (i32, i32) {
    %c0_i32 = arith.constant 0 : i32
    %c0_i32_0 = arith.constant 0 : i32
    %c0_i32_1 = arith.constant 0 : i32
    return %c0_i32, %c0_i32_0 : i32, i32
  }
  func.func @transform_4(%arg0: i32) -> (i32, i32) {
    %c0_i32 = arith.constant 0 : i32
    %c0_i32_0 = arith.constant 0 : i32
    %c0_i32_1 = arith.constant 0 : i32
    return %c0_i32, %c0_i32_0 : i32, i32
  }
  func.func @transform_5(%arg0: i32) -> (i32, i32) {
    %c0_i32 = arith.constant 0 : i32
    %c0_i32_0 = arith.constant 0 : i32
    %c0_i32_1 = arith.constant 0 : i32
    return %c0_i32, %c0_i32_0 : i32, i32
  }
  func.func @transform_6(%arg0: i32) -> (i32, i32) {
    %c0_i32 = arith.constant 0 : i32
    %c0_i32_0 = arith.constant 0 : i32
    %c0_i32_1 = arith.constant 0 : i32
    return %c0_i32, %c0_i32_0 : i32, i32
  }
  func.func @transform_7(%arg0: i32) -> (i32, i32) {
    %c0_i32 = arith.constant 0 : i32
    %c0_i32_0 = arith.constant 0 : i32
    return %arg0, %c0_i32 : i32, i32
  }
}

</mosaic_0001>

<llo_original>
// kernel: lenet_forward.3
$region0: #{lenet_forward.3}
  #allocation0 [shape = 'u32[]', space=smem, size = 0x4, offset = 0x4, fixed_abs, tag = 'smem constant byte address 0x4 - core index']
  #allocation1 [shape = 'u32[144,128]{1,0:T(1,128)}', space=vmem, size = 0x12000, scoped, tag = 'internal scratch']
  #allocation2 [shape = 'f32[384,128]{1,0:T(8,128)}', space=vmem, size = 0x30000, scoped, tag = 'scratch operand']
  %s0 = inlined_call_operand.vmem [shape: bf16[4608,75], index: 0, kind: input, shape index: {}]
  %s1 = inlined_call_operand.vmem [shape: bf16[75,128], index: 1, kind: input, shape index: {}]
  %s2 = inlined_call_operand.vmem [shape: f32[1,128], index: 2, kind: input, shape index: {}]
  %s3 = inlined_call_operand.vmem [shape: bf16[1152,128], index: 3, kind: output, shape index: {}]
  %s4 = sld [smem:[#allocation0]]
  $region45: #{lenet_forward.3} parent=0
    _
  %s6 = ssub.s32 1, %s4
  %s7 = scalar_select 0, %s6, %s4
  loop: start=0, step=1, limit=8
  $region2: #{lenet_forward.3} parent=0 // loop_pre_header
    _
  $region3: #{lenet_forward.3} parent=0 // loop_header
    %s9 = sphi 0, %s13
    %p10 = scmp.ge.s32.totalorder %s9, 8
    %s19 = sphi 0, %s21
    %s22 = sphi 0, %s19
    %s23 = sphi 0, %s22
    %s39 = sphi 0, %s23
    %s43 = sphi 0, %s43
    %s45 = sphi 0, %s43
    %s46 = sphi 0, %s45
    %s60 = sphi 0, %s46
    %s64 = sphi 0, %s64
    %s66 = sphi 0, %s64
    %s67 = sphi 0, %s66
    %s81 = sphi 0, %s67
    %s87 = sphi 0, %s89
    %s90 = sphi 0, %s87
    %s91 = sphi 0, %s90
    %s107 = sphi 0, %s91
  $region4: #{lenet_forward.3} parent=0 // loop_header_branch
    %12 = sbr.rel (%p10) target = $region8
  $region5: #{lenet_forward.3} parent=0 // loop_body
    %s14 = ssub.s32 %s9, 1
    %s15 = ssub.s32 %s9, 2
    %s16 = sadd.s32 %s9, 1
    %s17 = ssub.s32 %s9, %s16
    %p18 = scmp.eq.s32.totalorder %s17, 0
    %s20 = sadd.s32 %s19, 1
    %s21 = scalar_select %p18, %s19, %s20
    %p24 = pneg %p18
    %p25 = scmp.eq.s32.totalorder %s9, 5
    %p26 = por %p24, %p25
    %p27 = scmp.ne.s32.totalorder %s19, %s22
    %p28 = scmp.eq.s32.totalorder %s9, 0
    %p29 = por %p27, %p28
    %p30 = scmp.ne.s32.totalorder %s19, %s22
    %p31 = scmp.eq.s32.totalorder %s14, 5
    %p32 = por %p30, %p31
    %p33 = scmp.ne.s32.totalorder %s22, %s23
    %p34 = scmp.eq.s32.totalorder %s14, 0
    %p35 = por %p33, %p34
    %p36 = scmp.ne.s32.totalorder %s22, %s23
    %p37 = scmp.eq.s32.totalorder %s15, 5
    %p38 = por %p36, %p37
    %p40 = scmp.ne.s32.totalorder %s23, %s39
    %p41 = scmp.eq.s32.totalorder %s15, 0
    %p42 = por %p40, %p41
    %s44 = sadd.s32 %s43, 1
    %p47 = scmp.eq.s32.totalorder %s9, 5
    %p48 = scmp.ne.s32.totalorder %s43, %s45
    %p49 = scmp.eq.s32.totalorder %s9, 0
    %p50 = por %p48, %p49
    %p51 = scmp.ne.s32.totalorder %s43, %s45
    %p52 = scmp.eq.s32.totalorder %s14, 5
    %p53 = por %p51, %p52
    %p54 = scmp.ne.s32.totalorder %s45, %s46
    %p55 = scmp.eq.s32.totalorder %s14, 0
    %p56 = por %p54, %p55
    %p57 = scmp.ne.s32.totalorder %s45, %s46
    %p58 = scmp.eq.s32.totalorder %s15, 5
    %p59 = por %p57, %p58
    %p61 = scmp.ne.s32.totalorder %s46, %s60
    %p62 = scmp.eq.s32.totalorder %s15, 0
    %p63 = por %p61, %p62
    %s65 = sadd.s32 %s64, 1
    %p68 = scmp.eq.s32.totalorder %s9, 5
    %p69 = scmp.ne.s32.totalorder %s64, %s66
    %p70 = scmp.eq.s32.totalorder %s9, 0
    %p71 = por %p69, %p70
    %p72 = scmp.ne.s32.totalorder %s64, %s66
    %p73 = scmp.eq.s32.totalorder %s14, 5
    %p74 = por %p72, %p73
    %p75 = scmp.ne.s32.totalorder %s66, %s67
    %p76 = scmp.eq.s32.totalorder %s14, 0
    %p77 = por %p75, %p76
    %p78 = scmp.ne.s32.totalorder %s66, %s67
    %p79 = scmp.eq.s32.totalorder %s15, 5
    %p80 = por %p78, %p79
    %p82 = scmp.ne.s32.totalorder %s67, %s81
    %p83 = scmp.eq.s32.totalorder %s15, 0
    %p84 = por %p82, %p83
    %s85 = ssub.s32 %s9, %s16
    %p86 = scmp.eq.s32.totalorder %s85, 0
    %s88 = sadd.s32 %s87, 1
    %s89 = scalar_select %p86, %s87, %s88
    %p92 = pneg %p86
    %p93 = scmp.eq.s32.totalorder %s9, 5
    %p94 = por %p92, %p93
    %p95 = scmp.ne.s32.totalorder %s87, %s90
    %p96 = scmp.eq.s32.totalorder %s9, 0
    %p97 = por %p95, %p96
    %p98 = scmp.ne.s32.totalorder %s87, %s90
    %p99 = scmp.eq.s32.totalorder %s14, 5
    %p100 = por %p98, %p99
    %p101 = scmp.ne.s32.totalorder %s90, %s91
    %p102 = scmp.eq.s32.totalorder %s14, 0
    %p103 = por %p101, %p102
    %p104 = scmp.ne.s32.totalorder %s90, %s91
    %p105 = scmp.eq.s32.totalorder %s15, 5
    %p106 = por %p104, %p105
    %p108 = scmp.ne.s32.totalorder %s91, %s107
    %p109 = scmp.eq.s32.totalorder %s15, 0
    %p110 = por %p108, %p109
    %p111 = scmp.le.s32.totalorder 1, %s9
    %p112 = scmp.lt.s32.totalorder %s9, 7
    %p113 = pnand %p111, %p112
    %p114 = pneg %p113
    // Predicated region
    $region9: #{lenet_forward.3} parent=5 // pred_check
      _
    $region10: #{lenet_forward.3} parent=5 // pred_check_branch
      %116 = sbr.rel (%p113) target = $region12
    $region11: #{lenet_forward.3} parent=5 // pred_region
      %s117 = ssub.s32 %s9, 1
      // Predicated region
      $region13: #{lenet_forward.3} parent=11 // pred_check
        %p118 = pneg %p56
      $region14: #{lenet_forward.3} parent=11 // pred_check_branch
        %120 = sbr.rel (%p118) target = $region16
      $region15: #{lenet_forward.3} parent=11 // pred_region
        _
      $region16: #{lenet_forward.3} parent=11 // pred_fallthru
        _
      // Predicated region
      $region17: #{lenet_forward.3} parent=11 // pred_check
        %p121 = pneg %p77
      $region18: #{lenet_forward.3} parent=11 // pred_check_branch
        %123 = sbr.rel (%p121) target = $region20
      $region19: #{lenet_forward.3} parent=11 // pred_region
        _
      $region20: #{lenet_forward.3} parent=11 // pred_fallthru
        _
    $region12: #{lenet_forward.3} parent=5 // pred_fallthru
      _
    %p124 = scmp.lt.s32.totalorder %s9, 6
    // Predicated region
    $region21: #{lenet_forward.3} parent=5 // pred_check
      %p125 = pneg %p124
    $region22: #{lenet_forward.3} parent=5 // pred_check_branch
      %127 = sbr.rel (%p125) target = $region24
    $region23: #{lenet_forward.3} parent=5 // pred_region
      // Predicated region
      $region25: #{lenet_forward.3} parent=23 // pred_check
        %p128 = pneg %p29
      $region26: #{lenet_forward.3} parent=23 // pred_check_branch
        %130 = sbr.rel (%p128) target = $region28
      $region27: #{lenet_forward.3} parent=23 // pred_region
        %s131 = smul.u32 96, %s9
        %p132 = scmp.lt.s32.totalorder %s131, 575
        %s133 = scalar_select %p132, %s131, 575
        %s134 = smul.addr %s133, 4
        %s135 = scalar_lea.vmem %s0, %s134
        %s136 = smul.u32 96, %s9
      $region28: #{lenet_forward.3} parent=23 // pred_fallthru
        _
    $region24: #{lenet_forward.3} parent=5 // pred_fallthru
      _
    %p137 = scmp.le.s32.totalorder 1, %s9
    %p138 = scmp.lt.s32.totalorder %s9, 7
    %p139 = pnand %p137, %p138
    %p140 = pneg %p139
    // Predicated region
    $region29: #{lenet_forward.3} parent=5 // pred_check
      _
    $region30: #{lenet_forward.3} parent=5 // pred_check_branch
      %142 = sbr.rel (%p139) target = $region32
    $region31: #{lenet_forward.3} parent=5 // pred_region
      %s143 = ssub.s32 %s9, 1
      %s144 = smul.u32 96, %s14
      %p145 = scmp.lt.s32.totalorder %s144, 575
      %s146 = scalar_select %p145, %s144, 575
      %s147 = smul.addr %s146, 4
      %s148 = scalar_lea.vmem %s0, %s147
      %p149 = pneg %p35
      %p150 = pneg %p32
      %p151 = pneg %p56
      %p152 = pneg %p53
      %p153 = pneg %p77
      %p154 = pneg %p74
      %p155 = pneg %p103
      %p156 = pneg %p100
      %s157 = smul.u32 24, %s14
      %p158 = scmp.lt.s32.totalorder %s157, 143
      %s159 = scalar_select %p158, %s157, 143
      %s160 = smul.addr %s159, 4
      %s161 = scalar_lea.vmem %s3, %s160
      %s162 = smul.u32 96, %s14
      %p163 = scmp.lt.s32.totalorder %s162, 575
      %s164 = scalar_select %p163, %s162, 575
      %s165 = smul.addr %s164, 4
      %s166 = scalar_lea.vmem %s0, %s165
      %s167 = smul.u32 96, %s14
      %s168 = smul.u32 24, %s14
      %p169 = scmp.lt.s32.totalorder %s168, 143
      %s170 = scalar_select %p169, %s168, 143
      %s171 = smul.addr %s170, 4
      %s172 = scalar_lea.vmem %s3, %s171
      %s173 = smul.u32 24, %s14
      %v175 = vld [vmem:[%s166] sm:$0xf]
      %v176 = vld [vmem:[%s166 + $0x4] sm:$0xf]
      %v177 = vld [vmem:[%s166 + $0x8] sm:$0xf]
      %v178 = vld [vmem:[%s166 + $0xc] sm:$0xf]
      %v179 = vld [vmem:[%s166 + $0x10] sm:$0xf]
      %v180 = vld [vmem:[%s166 + $0x14] sm:$0xf]
      %v181 = vld [vmem:[%s166 + $0x18] sm:$0xf]
      %v182 = vld [vmem:[%s166 + $0x1c] sm:$0xf]
      %v183 = vld [vmem:[%s166 + $0x20] sm:$0xf]
      %v184 = vld [vmem:[%s166 + $0x24] sm:$0xf]
      %v185 = vld [vmem:[%s166 + $0x28] sm:$0xf]
      %v186 = vld [vmem:[%s166 + $0x2c] sm:$0xf]
      %v187 = vld [vmem:[%s166 + $0x30] sm:$0xf]
      %v188 = vld [vmem:[%s166 + $0x34] sm:$0xf]
      %v189 = vld [vmem:[%s166 + $0x38] sm:$0xf]
      %v190 = vld [vmem:[%s166 + $0x3c] sm:$0xf]
      %v191 = vld [vmem:[%s166 + $0x40] sm:$0xf]
      %v192 = vld [vmem:[%s166 + $0x44] sm:$0xf]
      %v193 = vld [vmem:[%s166 + $0x48] sm:$0xf]
      %v194 = vld [vmem:[%s166 + $0x4c] sm:$0xf]
      %v195 = vld [vmem:[%s166 + $0x50] sm:$0xf]
      %v196 = vld [vmem:[%s166 + $0x54] sm:$0xf]
      %v197 = vld [vmem:[%s166 + $0x58] sm:$0xf]
      %v198 = vld [vmem:[%s166 + $0x5c] sm:$0xf]
      %v199 = vld [vmem:[%s166 + $0x60] sm:$0xf]
      %v200 = vld [vmem:[%s166 + $0x64] sm:$0xf]
      %v201 = vld [vmem:[%s166 + $0x68] sm:$0xf]
      %v202 = vld [vmem:[%s166 + $0x6c] sm:$0xf]
      %v203 = vld [vmem:[%s166 + $0x70] sm:$0xf]
      %v204 = vld [vmem:[%s166 + $0x74] sm:$0xf]
      %v205 = vld [vmem:[%s166 + $0x78] sm:$0xf]
      %v206 = vld [vmem:[%s166 + $0x7c] sm:$0xf]
      %v207 = vld [vmem:[%s166 + $0x80] sm:$0xf]
      %v208 = vld [vmem:[%s166 + $0x84] sm:$0xf]
      %v209 = vld [vmem:[%s166 + $0x88] sm:$0xf]
      %v210 = vld [vmem:[%s166 + $0x8c] sm:$0xf]
      %v211 = vld [vmem:[%s166 + $0x90] sm:$0xf]
      %v212 = vld [vmem:[%s166 + $0x94] sm:$0xf]
      %v213 = vld [vmem:[%s166 + $0x98] sm:$0xf]
      %v214 = vld [vmem:[%s166 + $0x9c] sm:$0xf]
      %v215 = vld [vmem:[%s166 + $0xa0] sm:$0xf]
      %v216 = vld [vmem:[%s166 + $0xa4] sm:$0xf]
      %v217 = vld [vmem:[%s166 + $0xa8] sm:$0xf]
      %v218 = vld [vmem:[%s166 + $0xac] sm:$0xf]
      %v219 = vld [vmem:[%s166 + $0xb0] sm:$0xf]
      %v220 = vld [vmem:[%s166 + $0xb4] sm:$0xf]
      %v221 = vld [vmem:[%s166 + $0xb8] sm:$0xf]
      %v222 = vld [vmem:[%s166 + $0xbc] sm:$0xf]
      %v223 = vld [vmem:[%s166 + $0xc0] sm:$0xf]
      %v224 = vld [vmem:[%s166 + $0xc4] sm:$0xf]
      %v225 = vld [vmem:[%s166 + $0xc8] sm:$0xf]
      %v226 = vld [vmem:[%s166 + $0xcc] sm:$0xf]
      %v227 = vld [vmem:[%s166 + $0xd0] sm:$0xf]
      %v228 = vld [vmem:[%s166 + $0xd4] sm:$0xf]
      %v229 = vld [vmem:[%s166 + $0xd8] sm:$0xf]
      %v230 = vld [vmem:[%s166 + $0xdc] sm:$0xf]
      %v231 = vld [vmem:[%s166 + $0xe0] sm:$0xf]
      %v232 = vld [vmem:[%s166 + $0xe4] sm:$0xf]
      %v233 = vld [vmem:[%s166 + $0xe8] sm:$0xf]
      %v234 = vld [vmem:[%s166 + $0xec] sm:$0xf]
      %v235 = vld [vmem:[%s166 + $0xf0] sm:$0xf]
      %v236 = vld [vmem:[%s166 + $0xf4] sm:$0xf]
      %v237 = vld [vmem:[%s166 + $0xf8] sm:$0xf]
      %v238 = vld [vmem:[%s166 + $0xfc] sm:$0xf]
      %v239 = vld [vmem:[%s166 + $0x100] sm:$0xf]
      %v240 = vld [vmem:[%s166 + $0x104] sm:$0xf]
      %v241 = vld [vmem:[%s166 + $0x108] sm:$0xf]
      %v242 = vld [vmem:[%s166 + $0x10c] sm:$0xf]
      %v243 = vld [vmem:[%s166 + $0x110] sm:$0xf]
      %v244 = vld [vmem:[%s166 + $0x114] sm:$0xf]
      %v245 = vld [vmem:[%s166 + $0x118] sm:$0xf]
      %v246 = vld [vmem:[%s166 + $0x11c] sm:$0xf]
      %v247 = vld [vmem:[%s166 + $0x120] sm:$0xf]
      %v248 = vld [vmem:[%s166 + $0x124] sm:$0xf]
      %v249 = vld [vmem:[%s166 + $0x128] sm:$0xf]
      %v250 = vld [vmem:[%s166 + $0x12c] sm:$0xf]
      %v251 = vld [vmem:[%s166 + $0x130] sm:$0xf]
      %v252 = vld [vmem:[%s166 + $0x134] sm:$0xf]
      %v253 = vld [vmem:[%s166 + $0x138] sm:$0xf]
      %v254 = vld [vmem:[%s166 + $0x13c] sm:$0xf]
      %v255 = vld [vmem:[%s166 + $0x140] sm:$0xf]
      %v256 = vld [vmem:[%s166 + $0x144] sm:$0xf]
      %v257 = vld [vmem:[%s166 + $0x148] sm:$0xf]
      %v258 = vld [vmem:[%s166 + $0x14c] sm:$0xf]
      %v259 = vld [vmem:[%s166 + $0x150] sm:$0xf]
      %v260 = vld [vmem:[%s166 + $0x154] sm:$0xf]
      %v261 = vld [vmem:[%s166 + $0x158] sm:$0xf]
      %v262 = vld [vmem:[%s166 + $0x15c] sm:$0xf]
      %v263 = vld [vmem:[%s166 + $0x160] sm:$0xf]
      %v264 = vld [vmem:[%s166 + $0x164] sm:$0xf]
      %v265 = vld [vmem:[%s166 + $0x168] sm:$0xf]
      %v266 = vld [vmem:[%s166 + $0x16c] sm:$0xf]
      %v267 = vld [vmem:[%s166 + $0x170] sm:$0xf]
      %v268 = vld [vmem:[%s166 + $0x174] sm:$0xf]
      %v269 = vld [vmem:[%s166 + $0x178] sm:$0xf]
      %v270 = vld [vmem:[%s166 + $0x17c] sm:$0xf]
      %v271 = vld [vmem:[%s1] sm:$0xf]
      %v272 = vld [vmem:[%s1 + $0x4] sm:$0xf]
      %v273 = vld [vmem:[%s1 + $0x8] sm:$0xf]
      %v274 = vld [vmem:[%s1 + $0xc] sm:$0xf]
      %v275 = vld [vmem:[%s1 + $0x10] sm:$0xf]
      %v276 = vld [vmem:[%s1 + $0x14] sm:$0xf]
      %v277 = vld [vmem:[%s1 + $0x18] sm:$0xf]
      %v278 = vld [vmem:[%s1 + $0x1c] sm:$0xf]
      %v279 = vld [vmem:[%s1 + $0x20] sm:$0xf]
      %v280 = vld [vmem:[%s1 + $0x24] sm:$0x3]
      %v281 = vld [vmem:[%s2] sm:$0x1]
      %v283 = vlaneseq
      %v284 = vshrl.u32 %v283, 7
      %v285 = vsub.s32 0, %v284
      %v286 = vrot.slane %v281, %v285
      %v384 = vunpack.c.l.b16 %v175
      %v385 = vunpack.c.l.b16 %v176
      %v386 = vunpack.c.l.b16 %v177
      %v387 = vunpack.c.l.b16 %v178
      %v388 = vunpack.c.l.b16 %v179
      %v389 = vunpack.c.l.b16 %v180
      %v390 = vunpack.c.l.b16 %v181
      %v391 = vunpack.c.l.b16 %v182
      %v392 = vunpack.c.l.b16 %v183
      %v393 = vunpack.c.l.b16 %v184
      %v394 = vunpack.c.l.b16 %v185
      %v395 = vunpack.c.l.b16 %v186
      %v396 = vunpack.c.l.b16 %v187
      %v397 = vunpack.c.l.b16 %v188
      %v398 = vunpack.c.l.b16 %v189
      %v399 = vunpack.c.l.b16 %v190
      %v400 = vunpack.c.l.b16 %v191
      %v401 = vunpack.c.l.b16 %v192
      %v402 = vunpack.c.l.b16 %v193
      %v403 = vunpack.c.l.b16 %v194
      %v404 = vunpack.c.l.b16 %v195
      %v405 = vunpack.c.l.b16 %v196
      %v406 = vunpack.c.l.b16 %v197
      %v407 = vunpack.c.l.b16 %v198
      %v408 = vunpack.c.l.b16 %v199
      %v409 = vunpack.c.l.b16 %v200
      %v410 = vunpack.c.l.b16 %v201
      %v411 = vunpack.c.l.b16 %v202
      %v412 = vunpack.c.l.b16 %v203
      %v413 = vunpack.c.l.b16 %v204
      %v414 = vunpack.c.l.b16 %v205
      %v415 = vunpack.c.l.b16 %v206
      %v416 = vunpack.c.l.b16 %v207
      %v417 = vunpack.c.l.b16 %v208
      %v418 = vunpack.c.l.b16 %v209
      %v419 = vunpack.c.l.b16 %v210
      %v420 = vunpack.c.l.b16 %v211
      %v421 = vunpack.c.l.b16 %v212
      %v422 = vunpack.c.l.b16 %v213
      %v423 = vunpack.c.l.b16 %v214
      %v424 = vunpack.c.l.b16 %v215
      %v425 = vunpack.c.l.b16 %v216
      %v426 = vunpack.c.l.b16 %v217
      %v427 = vunpack.c.l.b16 %v218
      %v428 = vunpack.c.l.b16 %v219
      %v429 = vunpack.c.l.b16 %v220
      %v430 = vunpack.c.l.b16 %v221
      %v431 = vunpack.c.l.b16 %v222
      %v432 = vunpack.c.l.b16 %v223
      %v433 = vunpack.c.l.b16 %v224
      %v434 = vunpack.c.l.b16 %v225
      %v435 = vunpack.c.l.b16 %v226
      %v436 = vunpack.c.l.b16 %v227
      %v437 = vunpack.c.l.b16 %v228
      %v438 = vunpack.c.l.b16 %v229
      %v439 = vunpack.c.l.b16 %v230
      %v440 = vunpack.c.l.b16 %v231
      %v441 = vunpack.c.l.b16 %v232
      %v442 = vunpack.c.l.b16 %v233
      %v443 = vunpack.c.l.b16 %v234
      %v444 = vunpack.c.l.b16 %v235
      %v445 = vunpack.c.l.b16 %v236
      %v446 = vunpack.c.l.b16 %v237
      %v447 = vunpack.c.l.b16 %v238
      %v448 = vunpack.c.l.b16 %v239
      %v449 = vunpack.c.l.b16 %v240
      %v450 = vunpack.c.l.b16 %v241
      %v451 = vunpack.c.l.b16 %v242
      %v452 = vunpack.c.l.b16 %v243
      %v453 = vunpack.c.l.b16 %v244
      %v454 = vunpack.c.l.b16 %v245
      %v455 = vunpack.c.l.b16 %v246
      %v456 = vunpack.c.l.b16 %v247
      %v457 = vunpack.c.l.b16 %v248
      %v458 = vunpack.c.l.b16 %v249
      %v459 = vunpack.c.l.b16 %v250
      %v460 = vunpack.c.l.b16 %v251
      %v461 = vunpack.c.l.b16 %v252
      %v462 = vunpack.c.l.b16 %v253
      %v463 = vunpack.c.l.b16 %v254
      %v464 = vunpack.c.l.b16 %v255
      %v465 = vunpack.c.l.b16 %v256
      %v466 = vunpack.c.l.b16 %v257
      %v467 = vunpack.c.l.b16 %v258
      %v468 = vunpack.c.l.b16 %v259
      %v469 = vunpack.c.l.b16 %v260
      %v470 = vunpack.c.l.b16 %v261
      %v471 = vunpack.c.l.b16 %v262
      %v472 = vunpack.c.l.b16 %v263
      %v473 = vunpack.c.l.b16 %v264
      %v474 = vunpack.c.l.b16 %v265
      %v475 = vunpack.c.l.b16 %v266
      %v476 = vunpack.c.l.b16 %v267
      %v477 = vunpack.c.l.b16 %v268
      %v478 = vunpack.c.l.b16 %v269
      %v479 = vunpack.c.l.b16 %v270
      %v480 = vpack.c.b16 %v385, %v384
      %v481 = vpack.c.b16 %v387, %v386
      %v482 = vpack.c.b16 %v389, %v388
      %v483 = vpack.c.b16 %v391, %v390
      %v484 = vpack.c.b16 %v393, %v392
      %v485 = vpack.c.b16 %v395, %v394
      %v486 = vpack.c.b16 %v397, %v396
      %v487 = vpack.c.b16 %v399, %v398
      %v488 = vpack.c.b16 %v401, %v400
      %v489 = vpack.c.b16 %v403, %v402
      %v490 = vpack.c.b16 %v405, %v404
      %v491 = vpack.c.b16 %v407, %v406
      %v492 = vpack.c.b16 %v409, %v408
      %v493 = vpack.c.b16 %v411, %v410
      %v494 = vpack.c.b16 %v413, %v412
      %v495 = vpack.c.b16 %v415, %v414
      %v496 = vpack.c.b16 %v417, %v416
      %v497 = vpack.c.b16 %v419, %v418
      %v498 = vpack.c.b16 %v421, %v420
      %v499 = vpack.c.b16 %v423, %v422
      %v500 = vpack.c.b16 %v425, %v424
      %v501 = vpack.c.b16 %v427, %v426
      %v502 = vpack.c.b16 %v429, %v428
      %v503 = vpack.c.b16 %v431, %v430
      %v504 = vpack.c.b16 %v433, %v432
      %v505 = vpack.c.b16 %v435, %v434
      %v506 = vpack.c.b16 %v437, %v436
      %v507 = vpack.c.b16 %v439, %v438
      %v508 = vpack.c.b16 %v441, %v440
      %v509 = vpack.c.b16 %v443, %v442
      %v510 = vpack.c.b16 %v445, %v444
      %v511 = vpack.c.b16 %v447, %v446
      %v512 = vpack.c.b16 %v449, %v448
      %v513 = vpack.c.b16 %v451, %v450
      %v514 = vpack.c.b16 %v453, %v452
      %v515 = vpack.c.b16 %v455, %v454
      %v516 = vpack.c.b16 %v457, %v456
      %v517 = vpack.c.b16 %v459, %v458
      %v518 = vpack.c.b16 %v461, %v460
      %v519 = vpack.c.b16 %v463, %v462
      %v520 = vpack.c.b16 %v465, %v464
      %v521 = vpack.c.b16 %v467, %v466
      %v522 = vpack.c.b16 %v469, %v468
      %v523 = vpack.c.b16 %v471, %v470
      %v524 = vpack.c.b16 %v473, %v472
      %v525 = vpack.c.b16 %v475, %v474
      %v526 = vpack.c.b16 %v477, %v476
      %v527 = vpack.c.b16 %v479, %v478
      %v538 = vunpack.c.l.b16 %v271
      %v539 = vunpack.c.l.b16 %v272
      %v540 = vunpack.c.l.b16 %v273
      %v541 = vunpack.c.l.b16 %v274
      %v542 = vunpack.c.l.b16 %v275
      %v543 = vunpack.c.l.b16 %v276
      %v544 = vunpack.c.l.b16 %v277
      %v545 = vunpack.c.l.b16 %v278
      %v546 = vunpack.c.l.b16 %v279
      %v547 = vunpack.c.l.b16 %v280
      %v548 = vpack.c.b16 %v539, %v538
      %v549 = vpack.c.b16 %v541, %v540
      %v550 = vpack.c.b16 %v543, %v542
      %v551 = vpack.c.b16 %v545, %v544
      %v552 = vpack.c.b16 %v547, %v546
      %vm557 = vcmask 613376
      %v559 = vsel %vm557, %v480, 0
      %v562 = vsel %vm557, %v481, 0
      %v565 = vsel %vm557, %v482, 0
      %v568 = vsel %vm557, %v483, 0
      %v571 = vsel %vm557, %v484, 0
      %v574 = vsel %vm557, %v485, 0
      %v577 = vsel %vm557, %v486, 0
      %v580 = vsel %vm557, %v487, 0
      %v583 = vsel %vm557, %v488, 0
      %v586 = vsel %vm557, %v489, 0
      %v589 = vsel %vm557, %v490, 0
      %v592 = vsel %vm557, %v491, 0
      %v595 = vsel %vm557, %v492, 0
      %v598 = vsel %vm557, %v493, 0
      %v601 = vsel %vm557, %v494, 0
      %v604 = vsel %vm557, %v495, 0
      %v607 = vsel %vm557, %v496, 0
      %v610 = vsel %vm557, %v497, 0
      %v613 = vsel %vm557, %v498, 0
      %v616 = vsel %vm557, %v499, 0
      %v619 = vsel %vm557, %v500, 0
      %v622 = vsel %vm557, %v501, 0
      %v625 = vsel %vm557, %v502, 0
      %v628 = vsel %vm557, %v503, 0
      %v631 = vsel %vm557, %v504, 0
      %v634 = vsel %vm557, %v505, 0
      %v637 = vsel %vm557, %v506, 0
      %v640 = vsel %vm557, %v507, 0
      %v643 = vsel %vm557, %v508, 0
      %v646 = vsel %vm557, %v509, 0
      %v649 = vsel %vm557, %v510, 0
      %v652 = vsel %vm557, %v511, 0
      %v655 = vsel %vm557, %v512, 0
      %v658 = vsel %vm557, %v513, 0
      %v661 = vsel %vm557, %v514, 0
      %v664 = vsel %vm557, %v515, 0
      %v667 = vsel %vm557, %v516, 0
      %v670 = vsel %vm557, %v517, 0
      %v673 = vsel %vm557, %v518, 0
      %v676 = vsel %vm557, %v519, 0
      %v679 = vsel %vm557, %v520, 0
      %v682 = vsel %vm557, %v521, 0
      %v685 = vsel %vm557, %v522, 0
      %v688 = vsel %vm557, %v523, 0
      %v691 = vsel %vm557, %v524, 0
      %v694 = vsel %vm557, %v525, 0
      %v697 = vsel %vm557, %v526, 0
      %v700 = vsel %vm557, %v527, 0
      %vm702 = vcmask 1044480
      %vm703 = vcmask 1045504
      %v704 = vsel %vm702, 4294967295, 65535
      %v705 = vsel %vm703, %v704, 0
      %v707 = vand.u32 %v552, %v705
      %709 = vmatprep.subr.bf16.mxu0 0
      %710 = vmatpush1.bf16.msra.mxu0 %v548
      %711 = vmatprep.subr.bf16.mxu0 0
      %712 = vmatpush1.bf16.msra.mxu0 %v549
      %713 = vmatprep.subr.bf16.mxu0 0
      %714 = vmatpush1.bf16.msra.mxu0 %v550
      %715 = vmatprep.subr.bf16.mxu0 0
      %716 = vmatpush1.bf16.msra.mxu0 %v551
      %717 = vmatprep.subr.bf16.mxu0 0
      %718 = vmatpush1.bf16.msra.mxu0 %v707
      %719 = vmatprep.subr.bf16.mxu0 0
      %720 = vmatpush1.bf16.msra.mxu0 0
      %721 = vmatprep.subr.bf16.mxu0 0
      %722 = vmatpush1.bf16.msra.mxu0 0
      %723 = vmatprep.subr.bf16.mxu0 0
      %724 = vmatpush1.bf16.msra.mxu0 0
      %725 = vmatprep.subr.bf16.mxu0 0
      %726 = vmatpush1.bf16.msra.mxu0 0
      %727 = vmatprep.subr.bf16.mxu0 0
      %728 = vmatpush1.bf16.msra.mxu0 0
      %729 = vmatprep.subr.bf16.mxu0 0
      %730 = vmatpush1.bf16.msra.mxu0 0
      %731 = vmatprep.subr.bf16.mxu0 0
      %732 = vmatpush1.bf16.msra.mxu0 0
      %733 = vmatprep.subr.bf16.mxu0 0
      %734 = vmatpush1.bf16.msra.mxu0 0
      %735 = vmatprep.subr.bf16.mxu0 0
      %736 = vmatpush1.bf16.msra.mxu0 0
      %737 = vmatprep.subr.bf16.mxu0 0
      %738 = vmatpush1.bf16.msra.mxu0 0
      %739 = vmatprep.subr.bf16.mxu0 0
      %740 = vmatpush1.bf16.msra.mxu0 0
      %741 = vmatprep.mubr.bf16.mxu0 0
      %742 = vmatmul.mubr.bf16.gmra.mrb[0].mxu0 %v559
      %v743 = vpop.f32.mrb[0].mxu0
      %v744 = vadd.f32 %v286, %v743
      %v745 = vpop.f32.mrb[0].mxu0
      %v746 = vpop.f32.mrb[0].mxu0
      %v747 = vadd.f32 %v286, %v746
      %v748 = vpop.f32.mrb[0].mxu0
      %749 = vmatprep.mubr.bf16.mxu0 0
      %750 = vmatmul.mubr.bf16.gmra.mrb[0].mxu0 %v562
      %v751 = vpop.f32.mrb[0].mxu0
      %v752 = vadd.f32 %v286, %v751
      %v753 = vpop.f32.mrb[0].mxu0
      %v754 = vpop.f32.mrb[0].mxu0
      %v755 = vadd.f32 %v286, %v754
      %v756 = vpop.f32.mrb[0].mxu0
      %757 = vmatprep.mubr.bf16.mxu0 0
      %758 = vmatmul.mubr.bf16.gmra.mrb[0].mxu0 %v565
      %v759 = vpop.f32.mrb[0].mxu0
      %v760 = vadd.f32 %v286, %v759
      %v761 = vpop.f32.mrb[0].mxu0
      %v762 = vpop.f32.mrb[0].mxu0
      %v763 = vadd.f32 %v286, %v762
      %v764 = vpop.f32.mrb[0].mxu0
      %765 = vmatprep.mubr.bf16.mxu0 0
      %766 = vmatmul.mubr.bf16.gmra.mrb[0].mxu0 %v568
      %v767 = vpop.f32.mrb[0].mxu0
      %v768 = vadd.f32 %v286, %v767
      %v769 = vpop.f32.mrb[0].mxu0
      %v770 = vpop.f32.mrb[0].mxu0
      %v771 = vadd.f32 %v286, %v770
      %v772 = vpop.f32.mrb[0].mxu0
      %773 = vmatprep.mubr.bf16.mxu0 0
      %774 = vmatmul.mubr.bf16.gmra.mrb[0].mxu0 %v571
      %v775 = vpop.f32.mrb[0].mxu0
      %v776 = vadd.f32 %v286, %v775
      %v777 = vpop.f32.mrb[0].mxu0
      %v778 = vpop.f32.mrb[0].mxu0
      %v779 = vadd.f32 %v286, %v778
      %v780 = vpop.f32.mrb[0].mxu0
      %781 = vmatprep.mubr.bf16.mxu0 0
      %782 = vmatmul.mubr.bf16.gmra.mrb[0].mxu0 %v574
      %v783 = vpop.f32.mrb[0].mxu0
      %v784 = vadd.f32 %v286, %v783
      %v785 = vpop.f32.mrb[0].mxu0
      %v786 = vpop.f32.mrb[0].mxu0
      %v787 = vadd.f32 %v286, %v786
      %v788 = vpop.f32.mrb[0].mxu0
      %789 = vmatprep.mubr.bf16.mxu0 0
      %790 = vmatmul.mubr.bf16.gmra.mrb[0].mxu0 %v577
      %v791 = vpop.f32.mrb[0].mxu0
      %v792 = vadd.f32 %v286, %v791
      %v793 = vpop.f32.mrb[0].mxu0
      %v794 = vpop.f32.mrb[0].mxu0
      %v795 = vadd.f32 %v286, %v794
      %v796 = vpop.f32.mrb[0].mxu0
      %797 = vmatprep.mubr.bf16.mxu0 0
      %798 = vmatmul.mubr.bf16.gmra.mrb[0].mxu0 %v580
      %v799 = vpop.f32.mrb[0].mxu0
      %v800 = vadd.f32 %v286, %v799
      %v801 = vpop.f32.mrb[0].mxu0
      %v802 = vpop.f32.mrb[0].mxu0
      %v803 = vadd.f32 %v286, %v802
      %v804 = vpop.f32.mrb[0].mxu0
      %805 = vmatprep.mubr.bf16.mxu0 0
      %806 = vmatmul.mubr.bf16.gmra.mrb[0].mxu0 %v583
      %v807 = vpop.f32.mrb[0].mxu0
      %v808 = vadd.f32 %v286, %v807
      %v809 = vpop.f32.mrb[0].mxu0
      %v810 = vpop.f32.mrb[0].mxu0
      %v811 = vadd.f32 %v286, %v810
      %v812 = vpop.f32.mrb[0].mxu0
      %813 = vmatprep.mubr.bf16.mxu0 0
      %814 = vmatmul.mubr.bf16.gmra.mrb[0].mxu0 %v586
      %v815 = vpop.f32.mrb[0].mxu0
      %v816 = vadd.f32 %v286, %v815
      %v817 = vpop.f32.mrb[0].mxu0
      %v818 = vpop.f32.mrb[0].mxu0
      %v819 = vadd.f32 %v286, %v818
      %v820 = vpop.f32.mrb[0].mxu0
      %821 = vmatprep.mubr.bf16.mxu0 0
      %822 = vmatmul.mubr.bf16.gmra.mrb[0].mxu0 %v589
      %v823 = vpop.f32.mrb[0].mxu0
      %v824 = vadd.f32 %v286, %v823
      %v825 = vpop.f32.mrb[0].mxu0
      %v826 = vpop.f32.mrb[0].mxu0
      %v827 = vadd.f32 %v286, %v826
      %v828 = vpop.f32.mrb[0].mxu0
      %829 = vmatprep.mubr.bf16.mxu0 0
      %830 = vmatmul.mubr.bf16.gmra.mrb[0].mxu0 %v592
      %v831 = vpop.f32.mrb[0].mxu0
      %v832 = vadd.f32 %v286, %v831
      %v833 = vpop.f32.mrb[0].mxu0
      %v834 = vpop.f32.mrb[0].mxu0
      %v835 = vadd.f32 %v286, %v834
      %v836 = vpop.f32.mrb[0].mxu0
      %837 = vmatprep.mubr.bf16.mxu0 0
      %838 = vmatmul.mubr.bf16.gmra.mrb[0].mxu0 %v595
      %v839 = vpop.f32.mrb[0].mxu0
      %v840 = vadd.f32 %v286, %v839
      %v841 = vpop.f32.mrb[0].mxu0
      %v842 = vpop.f32.mrb[0].mxu0
      %v843 = vadd.f32 %v286, %v842
      %v844 = vpop.f32.mrb[0].mxu0
      %845 = vmatprep.mubr.bf16.mxu0 0
      %846 = vmatmul.mubr.bf16.gmra.mrb[0].mxu0 %v598
      %v847 = vpop.f32.mrb[0].mxu0
      %v848 = vadd.f32 %v286, %v847
      %v849 = vpop.f32.mrb[0].mxu0
      %v850 = vpop.f32.mrb[0].mxu0
      %v851 = vadd.f32 %v286, %v850
      %v852 = vpop.f32.mrb[0].mxu0
      %853 = vmatprep.mubr.bf16.mxu0 0
      %854 = vmatmul.mubr.bf16.gmra.mrb[0].mxu0 %v601
      %v855 = vpop.f32.mrb[0].mxu0
      %v856 = vadd.f32 %v286, %v855
      %v857 = vpop.f32.mrb[0].mxu0
      %v858 = vpop.f32.mrb[0].mxu0
      %v859 = vadd.f32 %v286, %v858
      %v860 = vpop.f32.mrb[0].mxu0
      %861 = vmatprep.mubr.bf16.mxu0 0
      %862 = vmatmul.mubr.bf16.gmra.mrb[0].mxu0 %v604
      %v863 = vpop.f32.mrb[0].mxu0
      %v864 = vadd.f32 %v286, %v863
      %v865 = vpop.f32.mrb[0].mxu0
      %v866 = vpop.f32.mrb[0].mxu0
      %v867 = vadd.f32 %v286, %v866
      %v868 = vpop.f32.mrb[0].mxu0
      %869 = vmatprep.mubr.bf16.mxu0 0
      %870 = vmatmul.mubr.bf16.gmra.mrb[0].mxu0 %v607
      %v871 = vpop.f32.mrb[0].mxu0
      %v872 = vadd.f32 %v286, %v871
      %v873 = vpop.f32.mrb[0].mxu0
      %v874 = vpop.f32.mrb[0].mxu0
      %v875 = vadd.f32 %v286, %v874
      %v876 = vpop.f32.mrb[0].mxu0
      %877 = vmatprep.mubr.bf16.mxu0 0
      %878 = vmatmul.mubr.bf16.gmra.mrb[0].mxu0 %v610
      %v879 = vpop.f32.mrb[0].mxu0
      %v880 = vadd.f32 %v286, %v879
      %v881 = vpop.f32.mrb[0].mxu0
      %v882 = vpop.f32.mrb[0].mxu0
      %v883 = vadd.f32 %v286, %v882
      %v884 = vpop.f32.mrb[0].mxu0
      %885 = vmatprep.mubr.bf16.mxu0 0
      %886 = vmatmul.mubr.bf16.gmra.mrb[0].mxu0 %v613
      %v887 = vpop.f32.mrb[0].mxu0
      %v888 = vadd.f32 %v286, %v887
      %v889 = vpop.f32.mrb[0].mxu0
      %v890 = vpop.f32.mrb[0].mxu0
      %v891 = vadd.f32 %v286, %v890
      %v892 = vpop.f32.mrb[0].mxu0
      %893 = vmatprep.mubr.bf16.mxu0 0
      %894 = vmatmul.mubr.bf16.gmra.mrb[0].mxu0 %v616
      %v895 = vpop.f32.mrb[0].mxu0
      %v896 = vadd.f32 %v286, %v895
      %v897 = vpop.f32.mrb[0].mxu0
      %v898 = vpop.f32.mrb[0].mxu0
      %v899 = vadd.f32 %v286, %v898
      %v900 = vpop.f32.mrb[0].mxu0
      %901 = vmatprep.mubr.bf16.mxu0 0
      %902 = vmatmul.mubr.bf16.gmra.mrb[0].mxu0 %v619
      %v903 = vpop.f32.mrb[0].mxu0
      %v904 = vadd.f32 %v286, %v903
      %v905 = vpop.f32.mrb[0].mxu0
      %v906 = vpop.f32.mrb[0].mxu0
      %v907 = vadd.f32 %v286, %v906
      %v908 = vpop.f32.mrb[0].mxu0
      %909 = vmatprep.mubr.bf16.mxu0 0
      %910 = vmatmul.mubr.bf16.gmra.mrb[0].mxu0 %v622
      %v911 = vpop.f32.mrb[0].mxu0
      %v912 = vadd.f32 %v286, %v911
      %v913 = vpop.f32.mrb[0].mxu0
      %v914 = vpop.f32.mrb[0].mxu0
      %v915 = vadd.f32 %v286, %v914
      %v916 = vpop.f32.mrb[0].mxu0
      %917 = vmatprep.mubr.bf16.mxu0 0
      %918 = vmatmul.mubr.bf16.gmra.mrb[0].mxu0 %v625
      %v919 = vpop.f32.mrb[0].mxu0
      %v920 = vadd.f32 %v286, %v919
      %v921 = vpop.f32.mrb[0].mxu0
      %v922 = vpop.f32.mrb[0].mxu0
      %v923 = vadd.f32 %v286, %v922
      %v924 = vpop.f32.mrb[0].mxu0
      %925 = vmatprep.mubr.bf16.mxu0 0
      %926 = vmatmul.mubr.bf16.gmra.mrb[0].mxu0 %v628
      %v927 = vpop.f32.mrb[0].mxu0
      %v928 = vadd.f32 %v286, %v927
      %v929 = vpop.f32.mrb[0].mxu0
      %v930 = vpop.f32.mrb[0].mxu0
      %v931 = vadd.f32 %v286, %v930
      %v932 = vpop.f32.mrb[0].mxu0
      %933 = vmatprep.mubr.bf16.mxu0 0
      %934 = vmatmul.mubr.bf16.gmra.mrb[0].mxu0 %v631
      %v935 = vpop.f32.mrb[0].mxu0
      %v936 = vadd.f32 %v286, %v935
      %v937 = vpop.f32.mrb[0].mxu0
      %v938 = vpop.f32.mrb[0].mxu0
      %v939 = vadd.f32 %v286, %v938
      %v940 = vpop.f32.mrb[0].mxu0
      %941 = vmatprep.mubr.bf16.mxu0 0
      %942 = vmatmul.mubr.bf16.gmra.mrb[0].mxu0 %v634
      %v943 = vpop.f32.mrb[0].mxu0
      %v944 = vadd.f32 %v286, %v943
      %v945 = vpop.f32.mrb[0].mxu0
      %v946 = vpop.f32.mrb[0].mxu0
      %v947 = vadd.f32 %v286, %v946
      %v948 = vpop.f32.mrb[0].mxu0
      %949 = vmatprep.mubr.bf16.mxu0 0
      %950 = vmatmul.mubr.bf16.gmra.mrb[0].mxu0 %v637
      %v951 = vpop.f32.mrb[0].mxu0
      %v952 = vadd.f32 %v286, %v951
      %v953 = vpop.f32.mrb[0].mxu0
      %v954 = vpop.f32.mrb[0].mxu0
      %v955 = vadd.f32 %v286, %v954
      %v956 = vpop.f32.mrb[0].mxu0
      %957 = vmatprep.mubr.bf16.mxu0 0
      %958 = vmatmul.mubr.bf16.gmra.mrb[0].mxu0 %v640
      %v959 = vpop.f32.mrb[0].mxu0
      %v960 = vadd.f32 %v286, %v959
      %v961 = vpop.f32.mrb[0].mxu0
      %v962 = vpop.f32.mrb[0].mxu0
      %v963 = vadd.f32 %v286, %v962
      %v964 = vpop.f32.mrb[0].mxu0
      %965 = vmatprep.mubr.bf16.mxu0 0
      %966 = vmatmul.mubr.bf16.gmra.mrb[0].mxu0 %v643
      %v967 = vpop.f32.mrb[0].mxu0
      %v968 = vadd.f32 %v286, %v967
      %v969 = vpop.f32.mrb[0].mxu0
      %v970 = vpop.f32.mrb[0].mxu0
      %v971 = vadd.f32 %v286, %v970
      %v972 = vpop.f32.mrb[0].mxu0
      %973 = vmatprep.mubr.bf16.mxu0 0
      %974 = vmatmul.mubr.bf16.gmra.mrb[0].mxu0 %v646
      %v975 = vpop.f32.mrb[0].mxu0
      %v976 = vadd.f32 %v286, %v975
      %v977 = vpop.f32.mrb[0].mxu0
      %v978 = vpop.f32.mrb[0].mxu0
      %v979 = vadd.f32 %v286, %v978
      %v980 = vpop.f32.mrb[0].mxu0
      %981 = vmatprep.mubr.bf16.mxu0 0
      %982 = vmatmul.mubr.bf16.gmra.mrb[0].mxu0 %v649
      %v983 = vpop.f32.mrb[0].mxu0
      %v984 = vadd.f32 %v286, %v983
      %v985 = vpop.f32.mrb[0].mxu0
      %v986 = vpop.f32.mrb[0].mxu0
      %v987 = vadd.f32 %v286, %v986
      %v988 = vpop.f32.mrb[0].mxu0
      %989 = vmatprep.mubr.bf16.mxu0 0
      %990 = vmatmul.mubr.bf16.gmra.mrb[0].mxu0 %v652
      %v991 = vpop.f32.mrb[0].mxu0
      %v992 = vadd.f32 %v286, %v991
      %v993 = vpop.f32.mrb[0].mxu0
      %v994 = vpop.f32.mrb[0].mxu0
      %v995 = vadd.f32 %v286, %v994
      %v996 = vpop.f32.mrb[0].mxu0
      %997 = vmatprep.mubr.bf16.mxu0 0
      %998 = vmatmul.mubr.bf16.gmra.mrb[0].mxu0 %v655
      %v999 = vpop.f32.mrb[0].mxu0
      %v1000 = vadd.f32 %v286, %v999
      %v1001 = vpop.f32.mrb[0].mxu0
      %v1002 = vpop.f32.mrb[0].mxu0
      %v1003 = vadd.f32 %v286, %v1002
      %v1004 = vpop.f32.mrb[0].mxu0
      %1005 = vmatprep.mubr.bf16.mxu0 0
      %1006 = vmatmul.mubr.bf16.gmra.mrb[0].mxu0 %v658
      %v1007 = vpop.f32.mrb[0].mxu0
      %v1008 = vadd.f32 %v286, %v1007
      %v1009 = vpop.f32.mrb[0].mxu0
      %v1010 = vpop.f32.mrb[0].mxu0
      %v1011 = vadd.f32 %v286, %v1010
      %v1012 = vpop.f32.mrb[0].mxu0
      %1013 = vmatprep.mubr.bf16.mxu0 0
      %1014 = vmatmul.mubr.bf16.gmra.mrb[0].mxu0 %v661
      %v1015 = vpop.f32.mrb[0].mxu0
      %v1016 = vadd.f32 %v286, %v1015
      %v1017 = vpop.f32.mrb[0].mxu0
      %v1018 = vpop.f32.mrb[0].mxu0
      %v1019 = vadd.f32 %v286, %v1018
      %v1020 = vpop.f32.mrb[0].mxu0
      %1021 = vmatprep.mubr.bf16.mxu0 0
      %1022 = vmatmul.mubr.bf16.gmra.mrb[0].mxu0 %v664
      %v1023 = vpop.f32.mrb[0].mxu0
      %v1024 = vadd.f32 %v286, %v1023
      %v1025 = vpop.f32.mrb[0].mxu0
      %v1026 = vpop.f32.mrb[0].mxu0
      %v1027 = vadd.f32 %v286, %v1026
      %v1028 = vpop.f32.mrb[0].mxu0
      %1029 = vmatprep.mubr.bf16.mxu0 0
      %1030 = vmatmul.mubr.bf16.gmra.mrb[0].mxu0 %v667
      %v1031 = vpop.f32.mrb[0].mxu0
      %v1032 = vadd.f32 %v286, %v1031
      %v1033 = vpop.f32.mrb[0].mxu0
      %v1034 = vpop.f32.mrb[0].mxu0
      %v1035 = vadd.f32 %v286, %v1034
      %v1036 = vpop.f32.mrb[0].mxu0
      %1037 = vmatprep.mubr.bf16.mxu0 0
      %1038 = vmatmul.mubr.bf16.gmra.mrb[0].mxu0 %v670
      %v1039 = vpop.f32.mrb[0].mxu0
      %v1040 = vadd.f32 %v286, %v1039
      %v1041 = vpop.f32.mrb[0].mxu0
      %v1042 = vpop.f32.mrb[0].mxu0
      %v1043 = vadd.f32 %v286, %v1042
      %v1044 = vpop.f32.mrb[0].mxu0
      %1045 = vmatprep.mubr.bf16.mxu0 0
      %1046 = vmatmul.mubr.bf16.gmra.mrb[0].mxu0 %v673
      %v1047 = vpop.f32.mrb[0].mxu0
      %v1048 = vadd.f32 %v286, %v1047
      %v1049 = vpop.f32.mrb[0].mxu0
      %v1050 = vpop.f32.mrb[0].mxu0
      %v1051 = vadd.f32 %v286, %v1050
      %v1052 = vpop.f32.mrb[0].mxu0
      %1053 = vmatprep.mubr.bf16.mxu0 0
      %1054 = vmatmul.mubr.bf16.gmra.mrb[0].mxu0 %v676
      %v1055 = vpop.f32.mrb[0].mxu0
      %v1056 = vadd.f32 %v286, %v1055
      %v1057 = vpop.f32.mrb[0].mxu0
      %v1058 = vpop.f32.mrb[0].mxu0
      %v1059 = vadd.f32 %v286, %v1058
      %v1060 = vpop.f32.mrb[0].mxu0
      %1061 = vmatprep.mubr.bf16.mxu0 0
      %1062 = vmatmul.mubr.bf16.gmra.mrb[0].mxu0 %v679
      %v1063 = vpop.f32.mrb[0].mxu0
      %v1064 = vadd.f32 %v286, %v1063
      %v1065 = vpop.f32.mrb[0].mxu0
      %v1066 = vpop.f32.mrb[0].mxu0
      %v1067 = vadd.f32 %v286, %v1066
      %v1068 = vpop.f32.mrb[0].mxu0
      %1069 = vmatprep.mubr.bf16.mxu0 0
      %1070 = vmatmul.mubr.bf16.gmra.mrb[0].mxu0 %v682
      %v1071 = vpop.f32.mrb[0].mxu0
      %v1072 = vadd.f32 %v286, %v1071
      %v1073 = vpop.f32.mrb[0].mxu0
      %v1074 = vpop.f32.mrb[0].mxu0
      %v1075 = vadd.f32 %v286, %v1074
      %v1076 = vpop.f32.mrb[0].mxu0
      %1077 = vmatprep.mubr.bf16.mxu0 0
      %1078 = vmatmul.mubr.bf16.gmra.mrb[0].mxu0 %v685
      %v1079 = vpop.f32.mrb[0].mxu0
      %v1080 = vadd.f32 %v286, %v1079
      %v1081 = vpop.f32.mrb[0].mxu0
      %v1082 = vpop.f32.mrb[0].mxu0
      %v1083 = vadd.f32 %v286, %v1082
      %v1084 = vpop.f32.mrb[0].mxu0
      %1085 = vmatprep.mubr.bf16.mxu0 0
      %1086 = vmatmul.mubr.bf16.gmra.mrb[0].mxu0 %v688
      %v1087 = vpop.f32.mrb[0].mxu0
      %v1088 = vadd.f32 %v286, %v1087
      %v1089 = vpop.f32.mrb[0].mxu0
      %v1090 = vpop.f32.mrb[0].mxu0
      %v1091 = vadd.f32 %v286, %v1090
      %v1092 = vpop.f32.mrb[0].mxu0
      %1093 = vmatprep.mubr.bf16.mxu0 0
      %1094 = vmatmul.mubr.bf16.gmra.mrb[0].mxu0 %v691
      %v1095 = vpop.f32.mrb[0].mxu0
      %v1096 = vadd.f32 %v286, %v1095
      %v1097 = vpop.f32.mrb[0].mxu0
      %v1098 = vpop.f32.mrb[0].mxu0
      %v1099 = vadd.f32 %v286, %v1098
      %v1100 = vpop.f32.mrb[0].mxu0
      %1101 = vmatprep.mubr.bf16.mxu0 0
      %1102 = vmatmul.mubr.bf16.gmra.mrb[0].mxu0 %v694
      %v1103 = vpop.f32.mrb[0].mxu0
      %v1104 = vadd.f32 %v286, %v1103
      %v1105 = vpop.f32.mrb[0].mxu0
      %v1106 = vpop.f32.mrb[0].mxu0
      %v1107 = vadd.f32 %v286, %v1106
      %v1108 = vpop.f32.mrb[0].mxu0
      %1109 = vmatprep.mubr.bf16.mxu0 0
      %1110 = vmatmul.mubr.bf16.gmra.mrb[0].mxu0 %v697
      %v1111 = vpop.f32.mrb[0].mxu0
      %v1112 = vadd.f32 %v286, %v1111
      %v1113 = vpop.f32.mrb[0].mxu0
      %v1114 = vpop.f32.mrb[0].mxu0
      %v1115 = vadd.f32 %v286, %v1114
      %v1116 = vpop.f32.mrb[0].mxu0
      %1117 = vmatprep.mubr.bf16.mxu0 0
      %1118 = vmatmul.mubr.bf16.gmra.mrb[0].mxu0 %v700
      %v1119 = vpop.f32.mrb[0].mxu0
      %v1120 = vadd.f32 %v286, %v1119
      %v1121 = vpop.f32.mrb[0].mxu0
      %v1122 = vpop.f32.mrb[0].mxu0
      %v1123 = vadd.f32 %v286, %v1122
      %v1124 = vpop.f32.mrb[0].mxu0
      %1125 = vdwg.mxu0
      %v1126 = vmax.f32 %v744, 0.0
      %v1127 = vmax.f32 %v747, 0.0
      %v1128 = vmax.f32 %v752, 0.0
      %v1129 = vmax.f32 %v755, 0.0
      %v1130 = vmax.f32 %v760, 0.0
      %v1131 = vmax.f32 %v763, 0.0
      %v1132 = vmax.f32 %v768, 0.0
      %v1133 = vmax.f32 %v771, 0.0
      %v1134 = vmax.f32 %v776, 0.0
      %v1135 = vmax.f32 %v779, 0.0
      %v1136 = vmax.f32 %v784, 0.0
      %v1137 = vmax.f32 %v787, 0.0
      %v1138 = vmax.f32 %v792, 0.0
      %v1139 = vmax.f32 %v795, 0.0
      %v1140 = vmax.f32 %v800, 0.0
      %v1141 = vmax.f32 %v803, 0.0
      %v1142 = vmax.f32 %v808, 0.0
      %v1143 = vmax.f32 %v811, 0.0
      %v1144 = vmax.f32 %v816, 0.0
      %v1145 = vmax.f32 %v819, 0.0
      %v1146 = vmax.f32 %v824, 0.0
      %v1147 = vmax.f32 %v827, 0.0
      %v1148 = vmax.f32 %v832, 0.0
      %v1149 = vmax.f32 %v835, 0.0
      %v1150 = vmax.f32 %v840, 0.0
      %v1151 = vmax.f32 %v843, 0.0
      %v1152 = vmax.f32 %v848, 0.0
      %v1153 = vmax.f32 %v851, 0.0
      %v1154 = vmax.f32 %v856, 0.0
      %v1155 = vmax.f32 %v859, 0.0
      %v1156 = vmax.f32 %v864, 0.0
      %v1157 = vmax.f32 %v867, 0.0
      %v1158 = vmax.f32 %v872, 0.0
      %v1159 = vmax.f32 %v875, 0.0
      %v1160 = vmax.f32 %v880, 0.0
      %v1161 = vmax.f32 %v883, 0.0
      %v1162 = vmax.f32 %v888, 0.0
      %v1163 = vmax.f32 %v891, 0.0
      %v1164 = vmax.f32 %v896, 0.0
      %v1165 = vmax.f32 %v899, 0.0
      %v1166 = vmax.f32 %v904, 0.0
      %v1167 = vmax.f32 %v907, 0.0
      %v1168 = vmax.f32 %v912, 0.0
      %v1169 = vmax.f32 %v915, 0.0
      %v1170 = vmax.f32 %v920, 0.0
      %v1171 = vmax.f32 %v923, 0.0
      %v1172 = vmax.f32 %v928, 0.0
      %v1173 = vmax.f32 %v931, 0.0
      %v1174 = vmax.f32 %v936, 0.0
      %v1175 = vmax.f32 %v939, 0.0
      %v1176 = vmax.f32 %v944, 0.0
      %v1177 = vmax.f32 %v947, 0.0
      %v1178 = vmax.f32 %v952, 0.0
      %v1179 = vmax.f32 %v955, 0.0
      %v1180 = vmax.f32 %v960, 0.0
      %v1181 = vmax.f32 %v963, 0.0
      %v1182 = vmax.f32 %v968, 0.0
      %v1183 = vmax.f32 %v971, 0.0
      %v1184 = vmax.f32 %v976, 0.0
      %v1185 = vmax.f32 %v979, 0.0
      %v1186 = vmax.f32 %v984, 0.0
      %v1187 = vmax.f32 %v987, 0.0
      %v1188 = vmax.f32 %v992, 0.0
      %v1189 = vmax.f32 %v995, 0.0
      %v1190 = vmax.f32 %v1000, 0.0
      %v1191 = vmax.f32 %v1003, 0.0
      %v1192 = vmax.f32 %v1008, 0.0
      %v1193 = vmax.f32 %v1011, 0.0
      %v1194 = vmax.f32 %v1016, 0.0
      %v1195 = vmax.f32 %v1019, 0.0
      %v1196 = vmax.f32 %v1024, 0.0
      %v1197 = vmax.f32 %v1027, 0.0
      %v1198 = vmax.f32 %v1032, 0.0
      %v1199 = vmax.f32 %v1035, 0.0
      %v1200 = vmax.f32 %v1040, 0.0
      %v1201 = vmax.f32 %v1043, 0.0
      %v1202 = vmax.f32 %v1048, 0.0
      %v1203 = vmax.f32 %v1051, 0.0
      %v1204 = vmax.f32 %v1056, 0.0
      %v1205 = vmax.f32 %v1059, 0.0
      %v1206 = vmax.f32 %v1064, 0.0
      %v1207 = vmax.f32 %v1067, 0.0
      %v1208 = vmax.f32 %v1072, 0.0
      %v1209 = vmax.f32 %v1075, 0.0
      %v1210 = vmax.f32 %v1080, 0.0
      %v1211 = vmax.f32 %v1083, 0.0
      %v1212 = vmax.f32 %v1088, 0.0
      %v1213 = vmax.f32 %v1091, 0.0
      %v1214 = vmax.f32 %v1096, 0.0
      %v1215 = vmax.f32 %v1099, 0.0
      %v1216 = vmax.f32 %v1104, 0.0
      %v1217 = vmax.f32 %v1107, 0.0
      %v1218 = vmax.f32 %v1112, 0.0
      %v1219 = vmax.f32 %v1115, 0.0
      %v1220 = vmax.f32 %v1120, 0.0
      %v1221 = vmax.f32 %v1123, 0.0
      %v1222 = vmax.f32 %v1126, %v1132
      %v1223 = vmax.f32 %v1127, %v1133
      %v1224 = vmax.f32 %v1128, %v1134
      %v1225 = vmax.f32 %v1129, %v1135
      %v1226 = vmax.f32 %v1130, %v1136
      %v1227 = vmax.f32 %v1131, %v1137
      %v1228 = vmax.f32 %v1138, %v1144
      %v1229 = vmax.f32 %v1139, %v1145
      %v1230 = vmax.f32 %v1140, %v1146
      %v1231 = vmax.f32 %v1141, %v1147
      %v1232 = vmax.f32 %v1142, %v1148
      %v1233 = vmax.f32 %v1143, %v1149
      %v1234 = vmax.f32 %v1150, %v1156
      %v1235 = vmax.f32 %v1151, %v1157
      %v1236 = vmax.f32 %v1152, %v1158
      %v1237 = vmax.f32 %v1153, %v1159
      %v1238 = vmax.f32 %v1154, %v1160
      %v1239 = vmax.f32 %v1155, %v1161
      %v1240 = vmax.f32 %v1162, %v1168
      %v1241 = vmax.f32 %v1163, %v1169
      %v1242 = vmax.f32 %v1164, %v1170
      %v1243 = vmax.f32 %v1165, %v1171
      %v1244 = vmax.f32 %v1166, %v1172
      %v1245 = vmax.f32 %v1167, %v1173
      %v1246 = vmax.f32 %v1174, %v1180
      %v1247 = vmax.f32 %v1175, %v1181
      %v1248 = vmax.f32 %v1176, %v1182
      %v1249 = vmax.f32 %v1177, %v1183
      %v1250 = vmax.f32 %v1178, %v1184
      %v1251 = vmax.f32 %v1179, %v1185
      %v1252 = vmax.f32 %v1186, %v1192
      %v1253 = vmax.f32 %v1187, %v1193
      %v1254 = vmax.f32 %v1188, %v1194
      %v1255 = vmax.f32 %v1189, %v1195
      %v1256 = vmax.f32 %v1190, %v1196
      %v1257 = vmax.f32 %v1191, %v1197
      %v1258 = vmax.f32 %v1198, %v1204
      %v1259 = vmax.f32 %v1199, %v1205
      %v1260 = vmax.f32 %v1200, %v1206
      %v1261 = vmax.f32 %v1201, %v1207
      %v1262 = vmax.f32 %v1202, %v1208
      %v1263 = vmax.f32 %v1203, %v1209
      %v1264 = vmax.f32 %v1210, %v1216
      %v1265 = vmax.f32 %v1211, %v1217
      %v1266 = vmax.f32 %v1212, %v1218
      %v1267 = vmax.f32 %v1213, %v1219
      %v1268 = vmax.f32 %v1214, %v1220
      %v1269 = vmax.f32 %v1215, %v1221
      %1270 = vst [vmem:[#allocation2] sm:$0xff] %v1222
      %1271 = vst [vmem:[#allocation2 + $0x8] sm:$0xff] %v1223
      %1272 = vst [vmem:[#allocation2 + $0x10] sm:$0xff] %v1224
      %1273 = vst [vmem:[#allocation2 + $0x18] sm:$0xff] %v1225
      %1274 = vst [vmem:[#allocation2 + $0x20] sm:$0xff] %v1226
      %1275 = vst [vmem:[#allocation2 + $0x28] sm:$0xff] %v1227
      %1276 = vst [vmem:[#allocation2 + $0x30] sm:$0xff] %v1228
      %1277 = vst [vmem:[#allocation2 + $0x38] sm:$0xff] %v1229
      %1278 = vst [vmem:[#allocation2 + $0x40] sm:$0xff] %v1230
      %1279 = vst [vmem:[#allocation2 + $0x48] sm:$0xff] %v1231
      %1280 = vst [vmem:[#allocation2 + $0x50] sm:$0xff] %v1232
      %1281 = vst [vmem:[#allocation2 + $0x58] sm:$0xff] %v1233
      %1282 = vst [vmem:[#allocation2 + $0x60] sm:$0xff] %v1234
      %1283 = vst [vmem:[#allocation2 + $0x68] sm:$0xff] %v1235
      %1284 = vst [vmem:[#allocation2 + $0x70] sm:$0xff] %v1236
      %1285 = vst [vmem:[#allocation2 + $0x78] sm:$0xff] %v1237
      %1286 = vst [vmem:[#allocation2 + $0x80] sm:$0xff] %v1238
      %1287 = vst [vmem:[#allocation2 + $0x88] sm:$0xff] %v1239
      %1288 = vst [vmem:[#allocation2 + $0x90] sm:$0xff] %v1240
      %1289 = vst [vmem:[#allocation2 + $0x98] sm:$0xff] %v1241
      %1290 = vst [vmem:[#allocation2 + $0xa0] sm:$0xff] %v1242
      %1291 = vst [vmem:[#allocation2 + $0xa8] sm:$0xff] %v1243
      %1292 = vst [vmem:[#allocation2 + $0xb0] sm:$0xff] %v1244
      %1293 = vst [vmem:[#allocation2 + $0xb8] sm:$0xff] %v1245
      %1294 = vst [vmem:[#allocation2 + $0xc0] sm:$0xff] %v1246
      %1295 = vst [vmem:[#allocation2 + $0xc8] sm:$0xff] %v1247
      %1296 = vst [vmem:[#allocation2 + $0xd0] sm:$0xff] %v1248
      %1297 = vst [vmem:[#allocation2 + $0xd8] sm:$0xff] %v1249
      %1298 = vst [vmem:[#allocation2 + $0xe0] sm:$0xff] %v1250
      %1299 = vst [vmem:[#allocation2 + $0xe8] sm:$0xff] %v1251
      %1300 = vst [vmem:[#allocation2 + $0xf0] sm:$0xff] %v1252
      %1301 = vst [vmem:[#allocation2 + $0xf8] sm:$0xff] %v1253
      %1302 = vst [vmem:[#allocation2 + $0x100] sm:$0xff] %v1254
      %1303 = vst [vmem:[#allocation2 + $0x108] sm:$0xff] %v1255
      %1304 = vst [vmem:[#allocation2 + $0x110] sm:$0xff] %v1256
      %1305 = vst [vmem:[#allocation2 + $0x118] sm:$0xff] %v1257
      %1306 = vst [vmem:[#allocation2 + $0x120] sm:$0xff] %v1258
      %1307 = vst [vmem:[#allocation2 + $0x128] sm:$0xff] %v1259
      %1308 = vst [vmem:[#allocation2 + $0x130] sm:$0xff] %v1260
      %1309 = vst [vmem:[#allocation2 + $0x138] sm:$0xff] %v1261
      %1310 = vst [vmem:[#allocation2 + $0x140] sm:$0xff] %v1262
      %1311 = vst [vmem:[#allocation2 + $0x148] sm:$0xff] %v1263
      %1312 = vst [vmem:[#allocation2 + $0x150] sm:$0xff] %v1264
      %1313 = vst [vmem:[#allocation2 + $0x158] sm:$0xff] %v1265
      %1314 = vst [vmem:[#allocation2 + $0x160] sm:$0xff] %v1266
      %1315 = vst [vmem:[#allocation2 + $0x168] sm:$0xff] %v1267
      %1316 = vst [vmem:[#allocation2 + $0x170] sm:$0xff] %v1268
      %1317 = vst [vmem:[#allocation2 + $0x178] sm:$0xff] %v1269
      %v1318 = vld [vmem:[#allocation2] ss:$2 sm:$0xff]
      %s1319 = scalar_lea.vmem [#allocation2], 16
      %v1320 = vld [vmem:[%s1319] ss:$2 sm:$0xff]
      %s1321 = scalar_lea.vmem [#allocation2], 32
      %v1322 = vld [vmem:[%s1321] ss:$2 sm:$0xff]
      %s1323 = scalar_lea.vmem [#allocation2], 48
      %v1324 = vld [vmem:[%s1323] ss:$2 sm:$0xff]
      %s1325 = scalar_lea.vmem [#allocation2], 64
      %v1326 = vld [vmem:[%s1325] ss:$2 sm:$0xff]
      %s1327 = scalar_lea.vmem [#allocation2], 80
      %v1328 = vld [vmem:[%s1327] ss:$2 sm:$0xff]
      %s1329 = scalar_lea.vmem [#allocation2], 96
      %v1330 = vld [vmem:[%s1329] ss:$2 sm:$0xff]
      %s1331 = scalar_lea.vmem [#allocation2], 112
      %v1332 = vld [vmem:[%s1331] ss:$2 sm:$0xff]
      %s1333 = scalar_lea.vmem [#allocation2], 128
      %v1334 = vld [vmem:[%s1333] ss:$2 sm:$0xff]
      %s1335 = scalar_lea.vmem [#allocation2], 144
      %v1336 = vld [vmem:[%s1335] ss:$2 sm:$0xff]
      %s1337 = scalar_lea.vmem [#allocation2], 160
      %v1338 = vld [vmem:[%s1337] ss:$2 sm:$0xff]
      %s1339 = scalar_lea.vmem [#allocation2], 176
      %v1340 = vld [vmem:[%s1339] ss:$2 sm:$0xff]
      %s1341 = scalar_lea.vmem [#allocation2], 192
      %v1342 = vld [vmem:[%s1341] ss:$2 sm:$0xff]
      %s1343 = scalar_lea.vmem [#allocation2], 208
      %v1344 = vld [vmem:[%s1343] ss:$2 sm:$0xff]
      %s1345 = scalar_lea.vmem [#allocation2], 224
      %v1346 = vld [vmem:[%s1345] ss:$2 sm:$0xff]
      %s1347 = scalar_lea.vmem [#allocation2], 240
      %v1348 = vld [vmem:[%s1347] ss:$2 sm:$0xff]
      %s1349 = scalar_lea.vmem [#allocation2], 256
      %v1350 = vld [vmem:[%s1349] ss:$2 sm:$0xff]
      %s1351 = scalar_lea.vmem [#allocation2], 272
      %v1352 = vld [vmem:[%s1351] ss:$2 sm:$0xff]
      %s1353 = scalar_lea.vmem [#allocation2], 288
      %v1354 = vld [vmem:[%s1353] ss:$2 sm:$0xff]
      %s1355 = scalar_lea.vmem [#allocation2], 304
      %v1356 = vld [vmem:[%s1355] ss:$2 sm:$0xff]
      %s1357 = scalar_lea.vmem [#allocation2], 320
      %v1358 = vld [vmem:[%s1357] ss:$2 sm:$0xff]
      %s1359 = scalar_lea.vmem [#allocation2], 336
      %v1360 = vld [vmem:[%s1359] ss:$2 sm:$0xff]
      %s1361 = scalar_lea.vmem [#allocation2], 352
      %v1362 = vld [vmem:[%s1361] ss:$2 sm:$0xff]
      %s1363 = scalar_lea.vmem [#allocation2], 368
      %v1364 = vld [vmem:[%s1363] ss:$2 sm:$0xff]
      %s1365 = scalar_lea.vmem [#allocation2], 1
      %v1366 = vld [vmem:[%s1365] ss:$2 sm:$0xff]
      %s1367 = scalar_lea.vmem [#allocation2], 17
      %v1368 = vld [vmem:[%s1367] ss:$2 sm:$0xff]
      %s1369 = scalar_lea.vmem [#allocation2], 33
      %v1370 = vld [vmem:[%s1369] ss:$2 sm:$0xff]
      %s1371 = scalar_lea.vmem [#allocation2], 49
      %v1372 = vld [vmem:[%s1371] ss:$2 sm:$0xff]
      %s1373 = scalar_lea.vmem [#allocation2], 65
      %v1374 = vld [vmem:[%s1373] ss:$2 sm:$0xff]
      %s1375 = scalar_lea.vmem [#allocation2], 81
      %v1376 = vld [vmem:[%s1375] ss:$2 sm:$0xff]
      %s1377 = scalar_lea.vmem [#allocation2], 97
      %v1378 = vld [vmem:[%s1377] ss:$2 sm:$0xff]
      %s1379 = scalar_lea.vmem [#allocation2], 113
      %v1380 = vld [vmem:[%s1379] ss:$2 sm:$0xff]
      %s1381 = scalar_lea.vmem [#allocation2], 129
      %v1382 = vld [vmem:[%s1381] ss:$2 sm:$0xff]
      %s1383 = scalar_lea.vmem [#allocation2], 145
      %v1384 = vld [vmem:[%s1383] ss:$2 sm:$0xff]
      %s1385 = scalar_lea.vmem [#allocation2], 161
      %v1386 = vld [vmem:[%s1385] ss:$2 sm:$0xff]
      %s1387 = scalar_lea.vmem [#allocation2], 177
      %v1388 = vld [vmem:[%s1387] ss:$2 sm:$0xff]
      %s1389 = scalar_lea.vmem [#allocation2], 193
      %v1390 = vld [vmem:[%s1389] ss:$2 sm:$0xff]
      %s1391 = scalar_lea.vmem [#allocation2], 209
      %v1392 = vld [vmem:[%s1391] ss:$2 sm:$0xff]
      %s1393 = scalar_lea.vmem [#allocation2], 225
      %v1394 = vld [vmem:[%s1393] ss:$2 sm:$0xff]
      %s1395 = scalar_lea.vmem [#allocation2], 241
      %v1396 = vld [vmem:[%s1395] ss:$2 sm:$0xff]
      %s1397 = scalar_lea.vmem [#allocation2], 257
      %v1398 = vld [vmem:[%s1397] ss:$2 sm:$0xff]
      %s1399 = scalar_lea.vmem [#allocation2], 273
      %v1400 = vld [vmem:[%s1399] ss:$2 sm:$0xff]
      %s1401 = scalar_lea.vmem [#allocation2], 289
      %v1402 = vld [vmem:[%s1401] ss:$2 sm:$0xff]
      %s1403 = scalar_lea.vmem [#allocation2], 305
      %v1404 = vld [vmem:[%s1403] ss:$2 sm:$0xff]
      %s1405 = scalar_lea.vmem [#allocation2], 321
      %v1406 = vld [vmem:[%s1405] ss:$2 sm:$0xff]
      %s1407 = scalar_lea.vmem [#allocation2], 337
      %v1408 = vld [vmem:[%s1407] ss:$2 sm:$0xff]
      %s1409 = scalar_lea.vmem [#allocation2], 353
      %v1410 = vld [vmem:[%s1409] ss:$2 sm:$0xff]
      %s1411 = scalar_lea.vmem [#allocation2], 369
      %v1412 = vld [vmem:[%s1411] ss:$2 sm:$0xff]
      %v1413 = vmax.f32 %v1318, %v1366
      %v1414 = vmax.f32 %v1320, %v1368
      %v1415 = vmax.f32 %v1322, %v1370
      %v1416 = vmax.f32 %v1324, %v1372
      %v1417 = vmax.f32 %v1326, %v1374
      %v1418 = vmax.f32 %v1328, %v1376
      %v1419 = vmax.f32 %v1330, %v1378
      %v1420 = vmax.f32 %v1332, %v1380
      %v1421 = vmax.f32 %v1334, %v1382
      %v1422 = vmax.f32 %v1336, %v1384
      %v1423 = vmax.f32 %v1338, %v1386
      %v1424 = vmax.f32 %v1340, %v1388
      %v1425 = vmax.f32 %v1342, %v1390
      %v1426 = vmax.f32 %v1344, %v1392
      %v1427 = vmax.f32 %v1346, %v1394
      %v1428 = vmax.f32 %v1348, %v1396
      %v1429 = vmax.f32 %v1350, %v1398
      %v1430 = vmax.f32 %v1352, %v1400
      %v1431 = vmax.f32 %v1354, %v1402
      %v1432 = vmax.f32 %v1356, %v1404
      %v1433 = vmax.f32 %v1358, %v1406
      %v1434 = vmax.f32 %v1360, %v1408
      %v1435 = vmax.f32 %v1362, %v1410
      %v1436 = vmax.f32 %v1364, %v1412
      %v1437 = vpack.c.bf16 %v1414, %v1413
      %v1438 = vpack.c.bf16 %v1416, %v1415
      %v1439 = vpack.c.bf16 %v1418, %v1417
      %v1440 = vpack.c.bf16 %v1420, %v1419
      %v1441 = vpack.c.bf16 %v1422, %v1421
      %v1442 = vpack.c.bf16 %v1424, %v1423
      %v1443 = vpack.c.bf16 %v1426, %v1425
      %v1444 = vpack.c.bf16 %v1428, %v1427
      %v1445 = vpack.c.bf16 %v1430, %v1429
      %v1446 = vpack.c.bf16 %v1432, %v1431
      %v1447 = vpack.c.bf16 %v1434, %v1433
      %v1448 = vpack.c.bf16 %v1436, %v1435
      %v1461 = vunpack.c.l.b16 %v1437
      %v1462 = vunpack.c.h.b16 %v1437
      %v1463 = vunpack.c.l.b16 %v1438
      %v1464 = vunpack.c.h.b16 %v1438
      %v1465 = vunpack.c.l.b16 %v1439
      %v1466 = vunpack.c.h.b16 %v1439
      %v1467 = vunpack.c.l.b16 %v1440
      %v1468 = vunpack.c.h.b16 %v1440
      %v1469 = vunpack.c.l.b16 %v1441
      %v1470 = vunpack.c.h.b16 %v1441
      %v1471 = vunpack.c.l.b16 %v1442
      %v1472 = vunpack.c.h.b16 %v1442
      %v1473 = vunpack.c.l.b16 %v1443
      %v1474 = vunpack.c.h.b16 %v1443
      %v1475 = vunpack.c.l.b16 %v1444
      %v1476 = vunpack.c.h.b16 %v1444
      %v1477 = vunpack.c.l.b16 %v1445
      %v1478 = vunpack.c.h.b16 %v1445
      %v1479 = vunpack.c.l.b16 %v1446
      %v1480 = vunpack.c.h.b16 %v1446
      %v1481 = vunpack.c.l.b16 %v1447
      %v1482 = vunpack.c.h.b16 %v1447
      %v1483 = vunpack.c.l.b16 %v1448
      %v1484 = vunpack.c.h.b16 %v1448
      %v1485 = vpack.c.b16 %v1461, %v1461
      %v1486 = vpack.c.b16 %v1462, %v1462
      %v1487 = vpack.c.b16 %v1463, %v1463
      %v1488 = vpack.c.b16 %v1464, %v1464
      %v1489 = vpack.c.b16 %v1465, %v1465
      %v1490 = vpack.c.b16 %v1466, %v1466
      %v1491 = vpack.c.b16 %v1467, %v1467
      %v1492 = vpack.c.b16 %v1468, %v1468
      %v1493 = vpack.c.b16 %v1469, %v1469
      %v1494 = vpack.c.b16 %v1470, %v1470
      %v1495 = vpack.c.b16 %v1471, %v1471
      %v1496 = vpack.c.b16 %v1472, %v1472
      %v1497 = vpack.c.b16 %v1473, %v1473
      %v1498 = vpack.c.b16 %v1474, %v1474
      %v1499 = vpack.c.b16 %v1475, %v1475
      %v1500 = vpack.c.b16 %v1476, %v1476
      %v1501 = vpack.c.b16 %v1477, %v1477
      %v1502 = vpack.c.b16 %v1478, %v1478
      %v1503 = vpack.c.b16 %v1479, %v1479
      %v1504 = vpack.c.b16 %v1480, %v1480
      %v1505 = vpack.c.b16 %v1481, %v1481
      %v1506 = vpack.c.b16 %v1482, %v1482
      %v1507 = vpack.c.b16 %v1483, %v1483
      %v1508 = vpack.c.b16 %v1484, %v1484
      %1533 = vst [vmem:[%s172] sm:$0xf] %v1485
      %1534 = vst [vmem:[%s172 + $0x4] sm:$0xf] %v1486
      %1535 = vst [vmem:[%s172 + $0x8] sm:$0xf] %v1487
      %1536 = vst [vmem:[%s172 + $0xc] sm:$0xf] %v1488
      %1537 = vst [vmem:[%s172 + $0x10] sm:$0xf] %v1489
      %1538 = vst [vmem:[%s172 + $0x14] sm:$0xf] %v1490
      %1539 = vst [vmem:[%s172 + $0x18] sm:$0xf] %v1491
      %1540 = vst [vmem:[%s172 + $0x1c] sm:$0xf] %v1492
      %1541 = vst [vmem:[%s172 + $0x20] sm:$0xf] %v1493
      %1542 = vst [vmem:[%s172 + $0x24] sm:$0xf] %v1494
      %1543 = vst [vmem:[%s172 + $0x28] sm:$0xf] %v1495
      %1544 = vst [vmem:[%s172 + $0x2c] sm:$0xf] %v1496
      %1545 = vst [vmem:[%s172 + $0x30] sm:$0xf] %v1497
      %1546 = vst [vmem:[%s172 + $0x34] sm:$0xf] %v1498
      %1547 = vst [vmem:[%s172 + $0x38] sm:$0xf] %v1499
      %1548 = vst [vmem:[%s172 + $0x3c] sm:$0xf] %v1500
      %1549 = vst [vmem:[%s172 + $0x40] sm:$0xf] %v1501
      %1550 = vst [vmem:[%s172 + $0x44] sm:$0xf] %v1502
      %1551 = vst [vmem:[%s172 + $0x48] sm:$0xf] %v1503
      %1552 = vst [vmem:[%s172 + $0x4c] sm:$0xf] %v1504
      %1553 = vst [vmem:[%s172 + $0x50] sm:$0xf] %v1505
      %1554 = vst [vmem:[%s172 + $0x54] sm:$0xf] %v1506
      %1555 = vst [vmem:[%s172 + $0x58] sm:$0xf] %v1507
      %1556 = vst [vmem:[%s172 + $0x5c] sm:$0xf] %v1508
      %s1557 = smul.u32 24, %s14
      %p1558 = scmp.lt.s32.totalorder %s1557, 143
      %s1559 = scalar_select %p1558, %s1557, 143
      %s1560 = smul.addr %s1559, 4
      %s1561 = scalar_lea.vmem %s3, %s1560
      // Predicated region
      $region33: #{lenet_forward.3} parent=31 // pred_check
        %p1562 = pneg %p100
      $region34: #{lenet_forward.3} parent=31 // pred_check_branch
        %1564 = sbr.rel (%p1562) target = $region36
      $region35: #{lenet_forward.3} parent=31 // pred_region
        %s1565 = smul.u32 24, %s14
      $region36: #{lenet_forward.3} parent=31 // pred_fallthru
        _
    $region32: #{lenet_forward.3} parent=5 // pred_fallthru
      _
    %p1566 = scmp.le.s32.totalorder 2, %s9
    // Predicated region
    $region37: #{lenet_forward.3} parent=5 // pred_check
      %p1567 = pneg %p1566
    $region38: #{lenet_forward.3} parent=5 // pred_check_branch
      %1569 = sbr.rel (%p1567) target = $region40
    $region39: #{lenet_forward.3} parent=5 // pred_region
      %s1570 = ssub.s32 %s9, 2
      // Predicated region
      $region41: #{lenet_forward.3} parent=39 // pred_check
        %p1571 = pneg %p106
      $region42: #{lenet_forward.3} parent=39 // pred_check_branch
        %1573 = sbr.rel (%p1571) target = $region44
      $region43: #{lenet_forward.3} parent=39 // pred_region
        %s1574 = smul.u32 24, %s15
        %p1575 = scmp.lt.s32.totalorder %s1574, 143
        %s1576 = scalar_select %p1575, %s1574, 143
        %s1577 = smul.addr %s1576, 4
        %s1578 = scalar_lea.vmem %s3, %s1577
      $region44: #{lenet_forward.3} parent=39 // pred_fallthru
        _
    $region40: #{lenet_forward.3} parent=5 // pred_fallthru
      _
  $region6: #{lenet_forward.3} parent=0 // loop_footer
    %s13 = sadd.s32 1, %s9
  $region7: #{lenet_forward.3} parent=0 // loop_footer_branch
    %8 = sbr.rel target = $region3
  $region8: #{lenet_forward.3} parent=0 // loop_exit
    _

// kernel: lenet_forward.4
$region0: #{lenet_forward.4}
  #allocation0 [shape = 'u32[]', space=smem, size = 0x4, offset = 0x4, fixed_abs, tag = 'smem constant byte address 0x4 - core index']
  #allocation1 [shape = 'u32[144,128]{1,0:T(1,128)}', space=vmem, size = 0x12000, scoped, tag = 'internal scratch']
  #allocation2 [shape = 'f32[144,128]{1,0:T(8,128)}', space=vmem, size = 0x12000, scoped, tag = 'scratch operand']
  %s0 = inlined_call_operand.vmem [shape: bf16[1152,150], index: 0, kind: input, shape index: {}]
  %s1 = inlined_call_operand.vmem [shape: bf16[150,128], index: 1, kind: input, shape index: {}]
  %s2 = inlined_call_operand.vmem [shape: f32[1,128], index: 2, kind: input, shape index: {}]
  %s3 = inlined_call_operand.vmem [shape: bf16[288,128], index: 3, kind: output, shape index: {}]
  %s4 = sld [smem:[#allocation0]]
  $region45: #{lenet_forward.4} parent=0
    _
  %s6 = ssub.s32 1, %s4
  %s7 = scalar_select 0, %s6, %s4
  loop: start=0, step=1, limit=6
  $region2: #{lenet_forward.4} parent=0 // loop_pre_header
    _
  $region3: #{lenet_forward.4} parent=0 // loop_header
    %s9 = sphi 0, %s13
    %p10 = scmp.ge.s32.totalorder %s9, 6
    %s19 = sphi 0, %s21
    %s22 = sphi 0, %s19
    %s23 = sphi 0, %s22
    %s39 = sphi 0, %s23
    %s43 = sphi 0, %s43
    %s45 = sphi 0, %s43
    %s46 = sphi 0, %s45
    %s60 = sphi 0, %s46
    %s64 = sphi 0, %s64
    %s66 = sphi 0, %s64
    %s67 = sphi 0, %s66
    %s81 = sphi 0, %s67
    %s87 = sphi 0, %s89
    %s90 = sphi 0, %s87
    %s91 = sphi 0, %s90
    %s107 = sphi 0, %s91
  $region4: #{lenet_forward.4} parent=0 // loop_header_branch
    %12 = sbr.rel (%p10) target = $region8
  $region5: #{lenet_forward.4} parent=0 // loop_body
    %s14 = ssub.s32 %s9, 1
    %s15 = ssub.s32 %s9, 2
    %s16 = sadd.s32 %s9, 1
    %s17 = ssub.s32 %s9, %s16
    %p18 = scmp.eq.s32.totalorder %s17, 0
    %s20 = sadd.s32 %s19, 1
    %s21 = scalar_select %p18, %s19, %s20
    %p24 = pneg %p18
    %p25 = scmp.eq.s32.totalorder %s9, 3
    %p26 = por %p24, %p25
    %p27 = scmp.ne.s32.totalorder %s19, %s22
    %p28 = scmp.eq.s32.totalorder %s9, 0
    %p29 = por %p27, %p28
    %p30 = scmp.ne.s32.totalorder %s19, %s22
    %p31 = scmp.eq.s32.totalorder %s14, 3
    %p32 = por %p30, %p31
    %p33 = scmp.ne.s32.totalorder %s22, %s23
    %p34 = scmp.eq.s32.totalorder %s14, 0
    %p35 = por %p33, %p34
    %p36 = scmp.ne.s32.totalorder %s22, %s23
    %p37 = scmp.eq.s32.totalorder %s15, 3
    %p38 = por %p36, %p37
    %p40 = scmp.ne.s32.totalorder %s23, %s39
    %p41 = scmp.eq.s32.totalorder %s15, 0
    %p42 = por %p40, %p41
    %s44 = sadd.s32 %s43, 1
    %p47 = scmp.eq.s32.totalorder %s9, 3
    %p48 = scmp.ne.s32.totalorder %s43, %s45
    %p49 = scmp.eq.s32.totalorder %s9, 0
    %p50 = por %p48, %p49
    %p51 = scmp.ne.s32.totalorder %s43, %s45
    %p52 = scmp.eq.s32.totalorder %s14, 3
    %p53 = por %p51, %p52
    %p54 = scmp.ne.s32.totalorder %s45, %s46
    %p55 = scmp.eq.s32.totalorder %s14, 0
    %p56 = por %p54, %p55
    %p57 = scmp.ne.s32.totalorder %s45, %s46
    %p58 = scmp.eq.s32.totalorder %s15, 3
    %p59 = por %p57, %p58
    %p61 = scmp.ne.s32.totalorder %s46, %s60
    %p62 = scmp.eq.s32.totalorder %s15, 0
    %p63 = por %p61, %p62
    %s65 = sadd.s32 %s64, 1
    %p68 = scmp.eq.s32.totalorder %s9, 3
    %p69 = scmp.ne.s32.totalorder %s64, %s66
    %p70 = scmp.eq.s32.totalorder %s9, 0
    %p71 = por %p69, %p70
    %p72 = scmp.ne.s32.totalorder %s64, %s66
    %p73 = scmp.eq.s32.totalorder %s14, 3
    %p74 = por %p72, %p73
    %p75 = scmp.ne.s32.totalorder %s66, %s67
    %p76 = scmp.eq.s32.totalorder %s14, 0
    %p77 = por %p75, %p76
    %p78 = scmp.ne.s32.totalorder %s66, %s67
    %p79 = scmp.eq.s32.totalorder %s15, 3
    %p80 = por %p78, %p79
    %p82 = scmp.ne.s32.totalorder %s67, %s81
    %p83 = scmp.eq.s32.totalorder %s15, 0
    %p84 = por %p82, %p83
    %s85 = ssub.s32 %s9, %s16
    %p86 = scmp.eq.s32.totalorder %s85, 0
    %s88 = sadd.s32 %s87, 1
    %s89 = scalar_select %p86, %s87, %s88
    %p92 = pneg %p86
    %p93 = scmp.eq.s32.totalorder %s9, 3
    %p94 = por %p92, %p93
    %p95 = scmp.ne.s32.totalorder %s87, %s90
    %p96 = scmp.eq.s32.totalorder %s9, 0
    %p97 = por %p95, %p96
    %p98 = scmp.ne.s32.totalorder %s87, %s90
    %p99 = scmp.eq.s32.totalorder %s14, 3
    %p100 = por %p98, %p99
    %p101 = scmp.ne.s32.totalorder %s90, %s91
    %p102 = scmp.eq.s32.totalorder %s14, 0
    %p103 = por %p101, %p102
    %p104 = scmp.ne.s32.totalorder %s90, %s91
    %p105 = scmp.eq.s32.totalorder %s15, 3
    %p106 = por %p104, %p105
    %p108 = scmp.ne.s32.totalorder %s91, %s107
    %p109 = scmp.eq.s32.totalorder %s15, 0
    %p110 = por %p108, %p109
    %p111 = scmp.le.s32.totalorder 1, %s9
    %p112 = scmp.lt.s32.totalorder %s9, 5
    %p113 = pnand %p111, %p112
    %p114 = pneg %p113
    // Predicated region
    $region9: #{lenet_forward.4} parent=5 // pred_check
      _
    $region10: #{lenet_forward.4} parent=5 // pred_check_branch
      %116 = sbr.rel (%p113) target = $region12
    $region11: #{lenet_forward.4} parent=5 // pred_region
      %s117 = ssub.s32 %s9, 1
      // Predicated region
      $region13: #{lenet_forward.4} parent=11 // pred_check
        %p118 = pneg %p56
      $region14: #{lenet_forward.4} parent=11 // pred_check_branch
        %120 = sbr.rel (%p118) target = $region16
      $region15: #{lenet_forward.4} parent=11 // pred_region
        _
      $region16: #{lenet_forward.4} parent=11 // pred_fallthru
        _
      // Predicated region
      $region17: #{lenet_forward.4} parent=11 // pred_check
        %p121 = pneg %p77
      $region18: #{lenet_forward.4} parent=11 // pred_check_branch
        %123 = sbr.rel (%p121) target = $region20
      $region19: #{lenet_forward.4} parent=11 // pred_region
        _
      $region20: #{lenet_forward.4} parent=11 // pred_fallthru
        _
    $region12: #{lenet_forward.4} parent=5 // pred_fallthru
      _
    %p124 = scmp.lt.s32.totalorder %s9, 4
    // Predicated region
    $region21: #{lenet_forward.4} parent=5 // pred_check
      %p125 = pneg %p124
    $region22: #{lenet_forward.4} parent=5 // pred_check_branch
      %127 = sbr.rel (%p125) target = $region24
    $region23: #{lenet_forward.4} parent=5 // pred_region
      // Predicated region
      $region25: #{lenet_forward.4} parent=23 // pred_check
        %p128 = pneg %p29
      $region26: #{lenet_forward.4} parent=23 // pred_check_branch
        %130 = sbr.rel (%p128) target = $region28
      $region27: #{lenet_forward.4} parent=23 // pred_region
        %s131 = smul.u32 36, %s9
        %p132 = scmp.lt.s32.totalorder %s131, 143
        %s133 = scalar_select %p132, %s131, 143
        %s134 = smul.addr %s133, 2
        %s135 = smul.addr %s134, 4
        %s136 = scalar_lea.vmem %s0, %s135
        %s137 = smul.u32 36, %s9
      $region28: #{lenet_forward.4} parent=23 // pred_fallthru
        _
    $region24: #{lenet_forward.4} parent=5 // pred_fallthru
      _
    %p138 = scmp.le.s32.totalorder 1, %s9
    %p139 = scmp.lt.s32.totalorder %s9, 5
    %p140 = pnand %p138, %p139
    %p141 = pneg %p140
    // Predicated region
    $region29: #{lenet_forward.4} parent=5 // pred_check
      _
    $region30: #{lenet_forward.4} parent=5 // pred_check_branch
      %143 = sbr.rel (%p140) target = $region32
    $region31: #{lenet_forward.4} parent=5 // pred_region
      %s144 = ssub.s32 %s9, 1
      %s145 = smul.u32 36, %s14
      %p146 = scmp.lt.s32.totalorder %s145, 143
      %s147 = scalar_select %p146, %s145, 143
      %s148 = smul.addr %s147, 2
      %s149 = smul.addr %s148, 4
      %s150 = scalar_lea.vmem %s0, %s149
      %p151 = pneg %p35
      %p152 = pneg %p32
      %p153 = pneg %p56
      %p154 = pneg %p53
      %p155 = pneg %p77
      %p156 = pneg %p74
      %p157 = pneg %p103
      %p158 = pneg %p100
      %s159 = smul.u32 9, %s14
      %p160 = scmp.lt.s32.totalorder %s159, 35
      %s161 = scalar_select %p160, %s159, 35
      %s162 = smul.addr %s161, 4
      %s163 = scalar_lea.vmem %s3, %s162
      %s164 = smul.u32 36, %s14
      %p165 = scmp.lt.s32.totalorder %s164, 143
      %s166 = scalar_select %p165, %s164, 143
      %s167 = smul.addr %s166, 2
      %s168 = smul.addr %s167, 4
      %s169 = scalar_lea.vmem %s0, %s168
      %s170 = smul.u32 36, %s14
      %s171 = smul.u32 9, %s14
      %p172 = scmp.lt.s32.totalorder %s171, 35
      %s173 = scalar_select %p172, %s171, 35
      %s174 = smul.addr %s173, 4
      %s175 = scalar_lea.vmem %s3, %s174
      %s176 = smul.u32 9, %s14
      %v178 = vld [vmem:[%s169] sm:$0xff]
      %v179 = vld [vmem:[%s169 + $0x8] sm:$0xff]
      %v180 = vld [vmem:[%s169 + $0x10] sm:$0xff]
      %v181 = vld [vmem:[%s169 + $0x18] sm:$0xff]
      %v182 = vld [vmem:[%s169 + $0x20] sm:$0xff]
      %v183 = vld [vmem:[%s169 + $0x28] sm:$0xff]
      %v184 = vld [vmem:[%s169 + $0x30] sm:$0xff]
      %v185 = vld [vmem:[%s169 + $0x38] sm:$0xff]
      %v186 = vld [vmem:[%s169 + $0x40] sm:$0xff]
      %v187 = vld [vmem:[%s169 + $0x48] sm:$0xff]
      %v188 = vld [vmem:[%s169 + $0x50] sm:$0xff]
      %v189 = vld [vmem:[%s169 + $0x58] sm:$0xff]
      %v190 = vld [vmem:[%s169 + $0x60] sm:$0xff]
      %v191 = vld [vmem:[%s169 + $0x68] sm:$0xff]
      %v192 = vld [vmem:[%s169 + $0x70] sm:$0xff]
      %v193 = vld [vmem:[%s169 + $0x78] sm:$0xff]
      %v194 = vld [vmem:[%s169 + $0x80] sm:$0xff]
      %v195 = vld [vmem:[%s169 + $0x88] sm:$0xff]
      %v196 = vld [vmem:[%s169 + $0x90] sm:$0xff]
      %v197 = vld [vmem:[%s169 + $0x98] sm:$0xff]
      %v198 = vld [vmem:[%s169 + $0xa0] sm:$0xff]
      %v199 = vld [vmem:[%s169 + $0xa8] sm:$0xff]
      %v200 = vld [vmem:[%s169 + $0xb0] sm:$0xff]
      %v201 = vld [vmem:[%s169 + $0xb8] sm:$0xff]
      %v202 = vld [vmem:[%s169 + $0xc0] sm:$0xff]
      %v203 = vld [vmem:[%s169 + $0xc8] sm:$0xff]
      %v204 = vld [vmem:[%s169 + $0xd0] sm:$0xff]
      %v205 = vld [vmem:[%s169 + $0xd8] sm:$0xff]
      %v206 = vld [vmem:[%s169 + $0xe0] sm:$0xff]
      %v207 = vld [vmem:[%s169 + $0xe8] sm:$0xff]
      %v208 = vld [vmem:[%s169 + $0xf0] sm:$0xff]
      %v209 = vld [vmem:[%s169 + $0xf8] sm:$0xff]
      %v210 = vld [vmem:[%s169 + $0x100] sm:$0xff]
      %v211 = vld [vmem:[%s169 + $0x108] sm:$0xff]
      %v212 = vld [vmem:[%s169 + $0x110] sm:$0xff]
      %v213 = vld [vmem:[%s169 + $0x118] sm:$0xff]
      %v214 = vld [vmem:[%s1] sm:$0xf]
      %v215 = vld [vmem:[%s1 + $0x4] sm:$0xf]
      %v216 = vld [vmem:[%s1 + $0x8] sm:$0xf]
      %v217 = vld [vmem:[%s1 + $0xc] sm:$0xf]
      %v218 = vld [vmem:[%s1 + $0x10] sm:$0xf]
      %v219 = vld [vmem:[%s1 + $0x14] sm:$0xf]
      %v220 = vld [vmem:[%s1 + $0x18] sm:$0xf]
      %v221 = vld [vmem:[%s1 + $0x1c] sm:$0xf]
      %v222 = vld [vmem:[%s1 + $0x20] sm:$0xf]
      %v223 = vld [vmem:[%s1 + $0x24] sm:$0xf]
      %v224 = vld [vmem:[%s1 + $0x28] sm:$0xf]
      %v225 = vld [vmem:[%s1 + $0x2c] sm:$0xf]
      %v226 = vld [vmem:[%s1 + $0x30] sm:$0xf]
      %v227 = vld [vmem:[%s1 + $0x34] sm:$0xf]
      %v228 = vld [vmem:[%s1 + $0x38] sm:$0xf]
      %v229 = vld [vmem:[%s1 + $0x3c] sm:$0xf]
      %v230 = vld [vmem:[%s1 + $0x40] sm:$0xf]
      %v231 = vld [vmem:[%s1 + $0x44] sm:$0xf]
      %v232 = vld [vmem:[%s1 + $0x48] sm:$0x7]
      %v233 = vld [vmem:[%s2] sm:$0x1]
      %v235 = vlaneseq
      %v236 = vshrl.u32 %v235, 7
      %v237 = vsub.s32 0, %v236
      %v238 = vrot.slane %v233, %v237
      %v276 = vunpack.c.l.b16 %v178
      %v277 = vunpack.c.h.b16 %v178
      %v278 = vunpack.c.l.b16 %v179
      %v279 = vunpack.c.h.b16 %v179
      %v280 = vunpack.c.l.b16 %v180
      %v281 = vunpack.c.h.b16 %v180
      %v282 = vunpack.c.l.b16 %v181
      %v283 = vunpack.c.h.b16 %v181
      %v284 = vunpack.c.l.b16 %v182
      %v285 = vunpack.c.h.b16 %v182
      %v286 = vunpack.c.l.b16 %v183
      %v287 = vunpack.c.h.b16 %v183
      %v288 = vunpack.c.l.b16 %v184
      %v289 = vunpack.c.h.b16 %v184
      %v290 = vunpack.c.l.b16 %v185
      %v291 = vunpack.c.h.b16 %v185
      %v292 = vunpack.c.l.b16 %v186
      %v293 = vunpack.c.h.b16 %v186
      %v294 = vunpack.c.l.b16 %v187
      %v295 = vunpack.c.h.b16 %v187
      %v296 = vunpack.c.l.b16 %v188
      %v297 = vunpack.c.h.b16 %v188
      %v298 = vunpack.c.l.b16 %v189
      %v299 = vunpack.c.h.b16 %v189
      %v300 = vunpack.c.l.b16 %v190
      %v301 = vunpack.c.h.b16 %v190
      %v302 = vunpack.c.l.b16 %v191
      %v303 = vunpack.c.h.b16 %v191
      %v304 = vunpack.c.l.b16 %v192
      %v305 = vunpack.c.h.b16 %v192
      %v306 = vunpack.c.l.b16 %v193
      %v307 = vunpack.c.h.b16 %v193
      %v308 = vunpack.c.l.b16 %v194
      %v309 = vunpack.c.h.b16 %v194
      %v310 = vunpack.c.l.b16 %v195
      %v311 = vunpack.c.h.b16 %v195
      %v312 = vunpack.c.l.b16 %v196
      %v313 = vunpack.c.h.b16 %v196
      %v314 = vunpack.c.l.b16 %v197
      %v315 = vunpack.c.h.b16 %v197
      %v316 = vunpack.c.l.b16 %v198
      %v317 = vunpack.c.h.b16 %v198
      %v318 = vunpack.c.l.b16 %v199
      %v319 = vunpack.c.h.b16 %v199
      %v320 = vunpack.c.l.b16 %v200
      %v321 = vunpack.c.h.b16 %v200
      %v322 = vunpack.c.l.b16 %v201
      %v323 = vunpack.c.h.b16 %v201
      %v324 = vunpack.c.l.b16 %v202
      %v325 = vunpack.c.h.b16 %v202
      %v326 = vunpack.c.l.b16 %v203
      %v327 = vunpack.c.h.b16 %v203
      %v328 = vunpack.c.l.b16 %v204
      %v329 = vunpack.c.h.b16 %v204
      %v330 = vunpack.c.l.b16 %v205
      %v331 = vunpack.c.h.b16 %v205
      %v332 = vunpack.c.l.b16 %v206
      %v333 = vunpack.c.h.b16 %v206
      %v334 = vunpack.c.l.b16 %v207
      %v335 = vunpack.c.h.b16 %v207
      %v336 = vunpack.c.l.b16 %v208
      %v337 = vunpack.c.h.b16 %v208
      %v338 = vunpack.c.l.b16 %v209
      %v339 = vunpack.c.h.b16 %v209
      %v340 = vunpack.c.l.b16 %v210
      %v341 = vunpack.c.h.b16 %v210
      %v342 = vunpack.c.l.b16 %v211
      %v343 = vunpack.c.h.b16 %v211
      %v344 = vunpack.c.l.b16 %v212
      %v345 = vunpack.c.h.b16 %v212
      %v346 = vunpack.c.l.b16 %v213
      %v347 = vunpack.c.h.b16 %v213
      %v348 = vpack.c.b16 %v278, %v276
      %v349 = vpack.c.b16 %v279, %v277
      %v350 = vpack.c.b16 %v282, %v280
      %v351 = vpack.c.b16 %v283, %v281
      %v352 = vpack.c.b16 %v286, %v284
      %v353 = vpack.c.b16 %v287, %v285
      %v354 = vpack.c.b16 %v290, %v288
      %v355 = vpack.c.b16 %v291, %v289
      %v356 = vpack.c.b16 %v294, %v292
      %v357 = vpack.c.b16 %v295, %v293
      %v358 = vpack.c.b16 %v298, %v296
      %v359 = vpack.c.b16 %v299, %v297
      %v360 = vpack.c.b16 %v302, %v300
      %v361 = vpack.c.b16 %v303, %v301
      %v362 = vpack.c.b16 %v306, %v304
      %v363 = vpack.c.b16 %v307, %v305
      %v364 = vpack.c.b16 %v310, %v308
      %v365 = vpack.c.b16 %v311, %v309
      %v366 = vpack.c.b16 %v314, %v312
      %v367 = vpack.c.b16 %v315, %v313
      %v368 = vpack.c.b16 %v318, %v316
      %v369 = vpack.c.b16 %v319, %v317
      %v370 = vpack.c.b16 %v322, %v320
      %v371 = vpack.c.b16 %v323, %v321
      %v372 = vpack.c.b16 %v326, %v324
      %v373 = vpack.c.b16 %v327, %v325
      %v374 = vpack.c.b16 %v330, %v328
      %v375 = vpack.c.b16 %v331, %v329
      %v376 = vpack.c.b16 %v334, %v332
      %v377 = vpack.c.b16 %v335, %v333
      %v378 = vpack.c.b16 %v338, %v336
      %v379 = vpack.c.b16 %v339, %v337
      %v380 = vpack.c.b16 %v342, %v340
      %v381 = vpack.c.b16 %v343, %v341
      %v382 = vpack.c.b16 %v346, %v344
      %v383 = vpack.c.b16 %v347, %v345
      %v421 = vunpack.c.l.b16 %v214
      %v422 = vunpack.c.l.b16 %v215
      %v423 = vunpack.c.l.b16 %v216
      %v424 = vunpack.c.l.b16 %v217
      %v425 = vunpack.c.l.b16 %v218
      %v426 = vunpack.c.l.b16 %v219
      %v427 = vunpack.c.l.b16 %v220
      %v428 = vunpack.c.l.b16 %v221
      %v429 = vunpack.c.l.b16 %v222
      %v430 = vunpack.c.l.b16 %v223
      %v431 = vunpack.c.l.b16 %v224
      %v432 = vunpack.c.l.b16 %v225
      %v433 = vunpack.c.l.b16 %v226
      %v434 = vunpack.c.l.b16 %v227
      %v435 = vunpack.c.l.b16 %v228
      %v436 = vunpack.c.l.b16 %v229
      %v437 = vunpack.c.l.b16 %v230
      %v438 = vunpack.c.l.b16 %v231
      %v439 = vunpack.c.l.b16 %v232
      %v440 = vpack.c.b16 %v422, %v421
      %v441 = vpack.c.b16 %v424, %v423
      %v442 = vpack.c.b16 %v426, %v425
      %v443 = vpack.c.b16 %v428, %v427
      %v444 = vpack.c.b16 %v430, %v429
      %v445 = vpack.c.b16 %v432, %v431
      %v446 = vpack.c.b16 %v434, %v433
      %v447 = vpack.c.b16 %v436, %v435
      %v448 = vpack.c.b16 %v438, %v437
      %v449 = vpack.c.b16 %v439, %v439
      %vm459 = vcmask 179200
      %v461 = vsel %vm459, %v349, 0
      %v464 = vsel %vm459, %v351, 0
      %v467 = vsel %vm459, %v353, 0
      %v470 = vsel %vm459, %v355, 0
      %v473 = vsel %vm459, %v357, 0
      %v476 = vsel %vm459, %v359, 0
      %v479 = vsel %vm459, %v361, 0
      %v482 = vsel %vm459, %v363, 0
      %v485 = vsel %vm459, %v365, 0
      %v488 = vsel %vm459, %v367, 0
      %v491 = vsel %vm459, %v369, 0
      %v494 = vsel %vm459, %v371, 0
      %v497 = vsel %vm459, %v373, 0
      %v500 = vsel %vm459, %v375, 0
      %v503 = vsel %vm459, %v377, 0
      %v506 = vsel %vm459, %v379, 0
      %v509 = vsel %vm459, %v381, 0
      %v512 = vsel %vm459, %v383, 0
      %vm514 = vcmask 1042432
      %v516 = vsel %vm514, %v449, 0
      %518 = vmatprep.subr.bf16.mxu0 0
      %519 = vmatpush1.bf16.msra.mxu0 %v440
      %520 = vmatprep.subr.bf16.mxu0 0
      %521 = vmatpush1.bf16.msra.mxu0 %v441
      %522 = vmatprep.subr.bf16.mxu0 0
      %523 = vmatpush1.bf16.msra.mxu0 %v442
      %524 = vmatprep.subr.bf16.mxu0 0
      %525 = vmatpush1.bf16.msra.mxu0 %v443
      %526 = vmatprep.subr.bf16.mxu0 0
      %527 = vmatpush1.bf16.msra.mxu0 %v444
      %528 = vmatprep.subr.bf16.mxu0 0
      %529 = vmatpush1.bf16.msra.mxu0 %v445
      %530 = vmatprep.subr.bf16.mxu0 0
      %531 = vmatpush1.bf16.msra.mxu0 %v446
      %532 = vmatprep.subr.bf16.mxu0 0
      %533 = vmatpush1.bf16.msra.mxu0 %v447
      %534 = vmatprep.subr.bf16.mxu0 0
      %535 = vmatpush1.bf16.msra.mxu0 %v448
      %536 = vmatprep.subr.bf16.mxu0 0
      %537 = vmatpush1.bf16.msra.mxu0 %v516
      %538 = vmatprep.subr.bf16.mxu0 0
      %539 = vmatpush1.bf16.msra.mxu0 0
      %540 = vmatprep.subr.bf16.mxu0 0
      %541 = vmatpush1.bf16.msra.mxu0 0
      %542 = vmatprep.subr.bf16.mxu0 0
      %543 = vmatpush1.bf16.msra.mxu0 0
      %544 = vmatprep.subr.bf16.mxu0 0
      %545 = vmatpush1.bf16.msra.mxu0 0
      %546 = vmatprep.subr.bf16.mxu0 0
      %547 = vmatpush1.bf16.msra.mxu0 0
      %548 = vmatprep.subr.bf16.mxu0 0
      %549 = vmatpush1.bf16.msra.mxu0 0
      %550 = vmatprep.mubr.bf16.mxu0 %v461
      %551 = vmatmul.mubr.bf16.gmra.mrb[0].mxu0 %v348
      %v552 = vpop.f32.mrb[0].mxu0
      %v553 = vadd.f32 %v238, %v552
      %v554 = vpop.f32.mrb[0].mxu0
      %v555 = vpop.f32.mrb[0].mxu0
      %v556 = vadd.f32 %v238, %v555
      %v557 = vpop.f32.mrb[0].mxu0
      %558 = vmatprep.mubr.bf16.mxu0 %v464
      %559 = vmatmul.mubr.bf16.gmra.mrb[0].mxu0 %v350
      %v560 = vpop.f32.mrb[0].mxu0
      %v561 = vadd.f32 %v238, %v560
      %v562 = vpop.f32.mrb[0].mxu0
      %v563 = vpop.f32.mrb[0].mxu0
      %v564 = vadd.f32 %v238, %v563
      %v565 = vpop.f32.mrb[0].mxu0
      %566 = vmatprep.mubr.bf16.mxu0 %v467
      %567 = vmatmul.mubr.bf16.gmra.mrb[0].mxu0 %v352
      %v568 = vpop.f32.mrb[0].mxu0
      %v569 = vadd.f32 %v238, %v568
      %v570 = vpop.f32.mrb[0].mxu0
      %v571 = vpop.f32.mrb[0].mxu0
      %v572 = vadd.f32 %v238, %v571
      %v573 = vpop.f32.mrb[0].mxu0
      %574 = vmatprep.mubr.bf16.mxu0 %v470
      %575 = vmatmul.mubr.bf16.gmra.mrb[0].mxu0 %v354
      %v576 = vpop.f32.mrb[0].mxu0
      %v577 = vadd.f32 %v238, %v576
      %v578 = vpop.f32.mrb[0].mxu0
      %v579 = vpop.f32.mrb[0].mxu0
      %v580 = vadd.f32 %v238, %v579
      %v581 = vpop.f32.mrb[0].mxu0
      %582 = vmatprep.mubr.bf16.mxu0 %v473
      %583 = vmatmul.mubr.bf16.gmra.mrb[0].mxu0 %v356
      %v584 = vpop.f32.mrb[0].mxu0
      %v585 = vadd.f32 %v238, %v584
      %v586 = vpop.f32.mrb[0].mxu0
      %v587 = vpop.f32.mrb[0].mxu0
      %v588 = vadd.f32 %v238, %v587
      %v589 = vpop.f32.mrb[0].mxu0
      %590 = vmatprep.mubr.bf16.mxu0 %v476
      %591 = vmatmul.mubr.bf16.gmra.mrb[0].mxu0 %v358
      %v592 = vpop.f32.mrb[0].mxu0
      %v593 = vadd.f32 %v238, %v592
      %v594 = vpop.f32.mrb[0].mxu0
      %v595 = vpop.f32.mrb[0].mxu0
      %v596 = vadd.f32 %v238, %v595
      %v597 = vpop.f32.mrb[0].mxu0
      %598 = vmatprep.mubr.bf16.mxu0 %v479
      %599 = vmatmul.mubr.bf16.gmra.mrb[0].mxu0 %v360
      %v600 = vpop.f32.mrb[0].mxu0
      %v601 = vadd.f32 %v238, %v600
      %v602 = vpop.f32.mrb[0].mxu0
      %v603 = vpop.f32.mrb[0].mxu0
      %v604 = vadd.f32 %v238, %v603
      %v605 = vpop.f32.mrb[0].mxu0
      %606 = vmatprep.mubr.bf16.mxu0 %v482
      %607 = vmatmul.mubr.bf16.gmra.mrb[0].mxu0 %v362
      %v608 = vpop.f32.mrb[0].mxu0
      %v609 = vadd.f32 %v238, %v608
      %v610 = vpop.f32.mrb[0].mxu0
      %v611 = vpop.f32.mrb[0].mxu0
      %v612 = vadd.f32 %v238, %v611
      %v613 = vpop.f32.mrb[0].mxu0
      %614 = vmatprep.mubr.bf16.mxu0 %v485
      %615 = vmatmul.mubr.bf16.gmra.mrb[0].mxu0 %v364
      %v616 = vpop.f32.mrb[0].mxu0
      %v617 = vadd.f32 %v238, %v616
      %v618 = vpop.f32.mrb[0].mxu0
      %v619 = vpop.f32.mrb[0].mxu0
      %v620 = vadd.f32 %v238, %v619
      %v621 = vpop.f32.mrb[0].mxu0
      %622 = vmatprep.mubr.bf16.mxu0 %v488
      %623 = vmatmul.mubr.bf16.gmra.mrb[0].mxu0 %v366
      %v624 = vpop.f32.mrb[0].mxu0
      %v625 = vadd.f32 %v238, %v624
      %v626 = vpop.f32.mrb[0].mxu0
      %v627 = vpop.f32.mrb[0].mxu0
      %v628 = vadd.f32 %v238, %v627
      %v629 = vpop.f32.mrb[0].mxu0
      %630 = vmatprep.mubr.bf16.mxu0 %v491
      %631 = vmatmul.mubr.bf16.gmra.mrb[0].mxu0 %v368
      %v632 = vpop.f32.mrb[0].mxu0
      %v633 = vadd.f32 %v238, %v632
      %v634 = vpop.f32.mrb[0].mxu0
      %v635 = vpop.f32.mrb[0].mxu0
      %v636 = vadd.f32 %v238, %v635
      %v637 = vpop.f32.mrb[0].mxu0
      %638 = vmatprep.mubr.bf16.mxu0 %v494
      %639 = vmatmul.mubr.bf16.gmra.mrb[0].mxu0 %v370
      %v640 = vpop.f32.mrb[0].mxu0
      %v641 = vadd.f32 %v238, %v640
      %v642 = vpop.f32.mrb[0].mxu0
      %v643 = vpop.f32.mrb[0].mxu0
      %v644 = vadd.f32 %v238, %v643
      %v645 = vpop.f32.mrb[0].mxu0
      %646 = vmatprep.mubr.bf16.mxu0 %v497
      %647 = vmatmul.mubr.bf16.gmra.mrb[0].mxu0 %v372
      %v648 = vpop.f32.mrb[0].mxu0
      %v649 = vadd.f32 %v238, %v648
      %v650 = vpop.f32.mrb[0].mxu0
      %v651 = vpop.f32.mrb[0].mxu0
      %v652 = vadd.f32 %v238, %v651
      %v653 = vpop.f32.mrb[0].mxu0
      %654 = vmatprep.mubr.bf16.mxu0 %v500
      %655 = vmatmul.mubr.bf16.gmra.mrb[0].mxu0 %v374
      %v656 = vpop.f32.mrb[0].mxu0
      %v657 = vadd.f32 %v238, %v656
      %v658 = vpop.f32.mrb[0].mxu0
      %v659 = vpop.f32.mrb[0].mxu0
      %v660 = vadd.f32 %v238, %v659
      %v661 = vpop.f32.mrb[0].mxu0
      %662 = vmatprep.mubr.bf16.mxu0 %v503
      %663 = vmatmul.mubr.bf16.gmra.mrb[0].mxu0 %v376
      %v664 = vpop.f32.mrb[0].mxu0
      %v665 = vadd.f32 %v238, %v664
      %v666 = vpop.f32.mrb[0].mxu0
      %v667 = vpop.f32.mrb[0].mxu0
      %v668 = vadd.f32 %v238, %v667
      %v669 = vpop.f32.mrb[0].mxu0
      %670 = vmatprep.mubr.bf16.mxu0 %v506
      %671 = vmatmul.mubr.bf16.gmra.mrb[0].mxu0 %v378
      %v672 = vpop.f32.mrb[0].mxu0
      %v673 = vadd.f32 %v238, %v672
      %v674 = vpop.f32.mrb[0].mxu0
      %v675 = vpop.f32.mrb[0].mxu0
      %v676 = vadd.f32 %v238, %v675
      %v677 = vpop.f32.mrb[0].mxu0
      %678 = vmatprep.mubr.bf16.mxu0 %v509
      %679 = vmatmul.mubr.bf16.gmra.mrb[0].mxu0 %v380
      %v680 = vpop.f32.mrb[0].mxu0
      %v681 = vadd.f32 %v238, %v680
      %v682 = vpop.f32.mrb[0].mxu0
      %v683 = vpop.f32.mrb[0].mxu0
      %v684 = vadd.f32 %v238, %v683
      %v685 = vpop.f32.mrb[0].mxu0
      %686 = vmatprep.mubr.bf16.mxu0 %v512
      %687 = vmatmul.mubr.bf16.gmra.mrb[0].mxu0 %v382
      %v688 = vpop.f32.mrb[0].mxu0
      %v689 = vadd.f32 %v238, %v688
      %v690 = vpop.f32.mrb[0].mxu0
      %v691 = vpop.f32.mrb[0].mxu0
      %v692 = vadd.f32 %v238, %v691
      %v693 = vpop.f32.mrb[0].mxu0
      %694 = vdwg.mxu0
      %v695 = vmax.f32 %v553, 0.0
      %v696 = vmax.f32 %v556, 0.0
      %v697 = vmax.f32 %v561, 0.0
      %v698 = vmax.f32 %v564, 0.0
      %v699 = vmax.f32 %v569, 0.0
      %v700 = vmax.f32 %v572, 0.0
      %v701 = vmax.f32 %v577, 0.0
      %v702 = vmax.f32 %v580, 0.0
      %v703 = vmax.f32 %v585, 0.0
      %v704 = vmax.f32 %v588, 0.0
      %v705 = vmax.f32 %v593, 0.0
      %v706 = vmax.f32 %v596, 0.0
      %v707 = vmax.f32 %v601, 0.0
      %v708 = vmax.f32 %v604, 0.0
      %v709 = vmax.f32 %v609, 0.0
      %v710 = vmax.f32 %v612, 0.0
      %v711 = vmax.f32 %v617, 0.0
      %v712 = vmax.f32 %v620, 0.0
      %v713 = vmax.f32 %v625, 0.0
      %v714 = vmax.f32 %v628, 0.0
      %v715 = vmax.f32 %v633, 0.0
      %v716 = vmax.f32 %v636, 0.0
      %v717 = vmax.f32 %v641, 0.0
      %v718 = vmax.f32 %v644, 0.0
      %v719 = vmax.f32 %v649, 0.0
      %v720 = vmax.f32 %v652, 0.0
      %v721 = vmax.f32 %v657, 0.0
      %v722 = vmax.f32 %v660, 0.0
      %v723 = vmax.f32 %v665, 0.0
      %v724 = vmax.f32 %v668, 0.0
      %v725 = vmax.f32 %v673, 0.0
      %v726 = vmax.f32 %v676, 0.0
      %v727 = vmax.f32 %v681, 0.0
      %v728 = vmax.f32 %v684, 0.0
      %v729 = vmax.f32 %v689, 0.0
      %v730 = vmax.f32 %v692, 0.0
      %v731 = vmax.f32 %v695, %v698
      %v732 = vmax.f32 %v696, %v699
      %v733 = vmax.f32 %v697, %v700
      %v734 = vmax.f32 %v701, %v704
      %v735 = vmax.f32 %v702, %v705
      %v736 = vmax.f32 %v703, %v706
      %v737 = vmax.f32 %v707, %v710
      %v738 = vmax.f32 %v708, %v711
      %v739 = vmax.f32 %v709, %v712
      %v740 = vmax.f32 %v713, %v716
      %v741 = vmax.f32 %v714, %v717
      %v742 = vmax.f32 %v715, %v718
      %v743 = vmax.f32 %v719, %v722
      %v744 = vmax.f32 %v720, %v723
      %v745 = vmax.f32 %v721, %v724
      %v746 = vmax.f32 %v725, %v728
      %v747 = vmax.f32 %v726, %v729
      %v748 = vmax.f32 %v727, %v730
      %749 = vst [vmem:[#allocation2] sm:$0xff] %v731
      %750 = vst [vmem:[#allocation2 + $0x8] sm:$0xff] %v732
      %751 = vst [vmem:[#allocation2 + $0x10] sm:$0xff] %v733
      %752 = vst [vmem:[#allocation2 + $0x18] sm:$0xff] %v734
      %753 = vst [vmem:[#allocation2 + $0x20] sm:$0xff] %v735
      %754 = vst [vmem:[#allocation2 + $0x28] sm:$0xff] %v736
      %755 = vst [vmem:[#allocation2 + $0x30] sm:$0xff] %v737
      %756 = vst [vmem:[#allocation2 + $0x38] sm:$0xff] %v738
      %757 = vst [vmem:[#allocation2 + $0x40] sm:$0xff] %v739
      %758 = vst [vmem:[#allocation2 + $0x48] sm:$0xff] %v740
      %759 = vst [vmem:[#allocation2 + $0x50] sm:$0xff] %v741
      %760 = vst [vmem:[#allocation2 + $0x58] sm:$0xff] %v742
      %761 = vst [vmem:[#allocation2 + $0x60] sm:$0xff] %v743
      %762 = vst [vmem:[#allocation2 + $0x68] sm:$0xff] %v744
      %763 = vst [vmem:[#allocation2 + $0x70] sm:$0xff] %v745
      %764 = vst [vmem:[#allocation2 + $0x78] sm:$0xff] %v746
      %765 = vst [vmem:[#allocation2 + $0x80] sm:$0xff] %v747
      %766 = vst [vmem:[#allocation2 + $0x88] sm:$0xff] %v748
      %v767 = vld [vmem:[#allocation2] ss:$2 sm:$0xff]
      %s768 = scalar_lea.vmem [#allocation2], 16
      %v769 = vld [vmem:[%s768] ss:$2 sm:$0xff]
      %s770 = scalar_lea.vmem [#allocation2], 32
      %v771 = vld [vmem:[%s770] ss:$2 sm:$0xff]
      %s772 = scalar_lea.vmem [#allocation2], 48
      %v773 = vld [vmem:[%s772] ss:$2 sm:$0xff]
      %s774 = scalar_lea.vmem [#allocation2], 64
      %v775 = vld [vmem:[%s774] ss:$2 sm:$0xff]
      %s776 = scalar_lea.vmem [#allocation2], 80
      %v777 = vld [vmem:[%s776] ss:$2 sm:$0xff]
      %s778 = scalar_lea.vmem [#allocation2], 96
      %v779 = vld [vmem:[%s778] ss:$2 sm:$0xff]
      %s780 = scalar_lea.vmem [#allocation2], 112
      %v781 = vld [vmem:[%s780] ss:$2 sm:$0xff]
      %s782 = scalar_lea.vmem [#allocation2], 128
      %v783 = vld [vmem:[%s782] ss:$2 sm:$0xff]
      %s784 = scalar_lea.vmem [#allocation2], 1
      %v785 = vld [vmem:[%s784] ss:$2 sm:$0xff]
      %s786 = scalar_lea.vmem [#allocation2], 17
      %v787 = vld [vmem:[%s786] ss:$2 sm:$0xff]
      %s788 = scalar_lea.vmem [#allocation2], 33
      %v789 = vld [vmem:[%s788] ss:$2 sm:$0xff]
      %s790 = scalar_lea.vmem [#allocation2], 49
      %v791 = vld [vmem:[%s790] ss:$2 sm:$0xff]
      %s792 = scalar_lea.vmem [#allocation2], 65
      %v793 = vld [vmem:[%s792] ss:$2 sm:$0xff]
      %s794 = scalar_lea.vmem [#allocation2], 81
      %v795 = vld [vmem:[%s794] ss:$2 sm:$0xff]
      %s796 = scalar_lea.vmem [#allocation2], 97
      %v797 = vld [vmem:[%s796] ss:$2 sm:$0xff]
      %s798 = scalar_lea.vmem [#allocation2], 113
      %v799 = vld [vmem:[%s798] ss:$2 sm:$0xff]
      %s800 = scalar_lea.vmem [#allocation2], 129
      %v801 = vld [vmem:[%s800] ss:$2 sm:$0xff]
      %v802 = vmax.f32 %v767, %v785
      %v803 = vmax.f32 %v769, %v787
      %v804 = vmax.f32 %v771, %v789
      %v805 = vmax.f32 %v773, %v791
      %v806 = vmax.f32 %v775, %v793
      %v807 = vmax.f32 %v777, %v795
      %v808 = vmax.f32 %v779, %v797
      %v809 = vmax.f32 %v781, %v799
      %v810 = vmax.f32 %v783, %v801
      %v811 = vpack.c.bf16 %v803, %v802
      %v812 = vpack.c.bf16 %v805, %v804
      %v813 = vpack.c.bf16 %v807, %v806
      %v814 = vpack.c.bf16 %v809, %v808
      %v815 = vpack.c.bf16 %v810, %v810
      %v821 = vunpack.c.l.b16 %v811
      %v822 = vunpack.c.h.b16 %v811
      %v823 = vunpack.c.l.b16 %v812
      %v824 = vunpack.c.h.b16 %v812
      %v825 = vunpack.c.l.b16 %v813
      %v826 = vunpack.c.h.b16 %v813
      %v827 = vunpack.c.l.b16 %v814
      %v828 = vunpack.c.h.b16 %v814
      %v829 = vunpack.c.l.b16 %v815
      %v830 = vpack.c.b16 %v821, %v821
      %v831 = vpack.c.b16 %v822, %v822
      %v832 = vpack.c.b16 %v823, %v823
      %v833 = vpack.c.b16 %v824, %v824
      %v834 = vpack.c.b16 %v825, %v825
      %v835 = vpack.c.b16 %v826, %v826
      %v836 = vpack.c.b16 %v827, %v827
      %v837 = vpack.c.b16 %v828, %v828
      %v838 = vpack.c.b16 %v829, %v829
      %848 = vst [vmem:[%s175] sm:$0xf] %v830
      %849 = vst [vmem:[%s175 + $0x4] sm:$0xf] %v831
      %850 = vst [vmem:[%s175 + $0x8] sm:$0xf] %v832
      %851 = vst [vmem:[%s175 + $0xc] sm:$0xf] %v833
      %852 = vst [vmem:[%s175 + $0x10] sm:$0xf] %v834
      %853 = vst [vmem:[%s175 + $0x14] sm:$0xf] %v835
      %854 = vst [vmem:[%s175 + $0x18] sm:$0xf] %v836
      %855 = vst [vmem:[%s175 + $0x1c] sm:$0xf] %v837
      %856 = vst [vmem:[%s175 + $0x20] sm:$0xf] %v838
      %s857 = smul.u32 9, %s14
      %p858 = scmp.lt.s32.totalorder %s857, 35
      %s859 = scalar_select %p858, %s857, 35
      %s860 = smul.addr %s859, 4
      %s861 = scalar_lea.vmem %s3, %s860
      // Predicated region
      $region33: #{lenet_forward.4} parent=31 // pred_check
        %p862 = pneg %p100
      $region34: #{lenet_forward.4} parent=31 // pred_check_branch
        %864 = sbr.rel (%p862) target = $region36
      $region35: #{lenet_forward.4} parent=31 // pred_region
        %s865 = smul.u32 9, %s14
      $region36: #{lenet_forward.4} parent=31 // pred_fallthru
        _
    $region32: #{lenet_forward.4} parent=5 // pred_fallthru
      _
    %p866 = scmp.le.s32.totalorder 2, %s9
    // Predicated region
    $region37: #{lenet_forward.4} parent=5 // pred_check
      %p867 = pneg %p866
    $region38: #{lenet_forward.4} parent=5 // pred_check_branch
      %869 = sbr.rel (%p867) target = $region40
    $region39: #{lenet_forward.4} parent=5 // pred_region
      %s870 = ssub.s32 %s9, 2
      // Predicated region
      $region41: #{lenet_forward.4} parent=39 // pred_check
        %p871 = pneg %p106
      $region42: #{lenet_forward.4} parent=39 // pred_check_branch
        %873 = sbr.rel (%p871) target = $region44
      $region43: #{lenet_forward.4} parent=39 // pred_region
        %s874 = smul.u32 9, %s15
        %p875 = scmp.lt.s32.totalorder %s874, 35
        %s876 = scalar_select %p875, %s874, 35
        %s877 = smul.addr %s876, 4
        %s878 = scalar_lea.vmem %s3, %s877
      $region44: #{lenet_forward.4} parent=39 // pred_fallthru
        _
    $region40: #{lenet_forward.4} parent=5 // pred_fallthru
      _
  $region6: #{lenet_forward.4} parent=0 // loop_footer
    %s13 = sadd.s32 1, %s9
  $region7: #{lenet_forward.4} parent=0 // loop_footer_branch
    %8 = sbr.rel target = $region3
  $region8: #{lenet_forward.4} parent=0 // loop_exit
    _

// kernel: lenet_forward.5
$region0: #{lenet_forward.5}
  #allocation0 [shape = 'u32[]', space=smem, size = 0x4, offset = 0x4, fixed_abs, tag = 'smem constant byte address 0x4 - core index']
  #allocation1 [shape = 'u32[144,128]{1,0:T(1,128)}', space=vmem, size = 0x12000, scoped, tag = 'internal scratch']
  %s0 = inlined_call_operand.vmem [shape: bf16[8,2304], index: 0, kind: input, shape index: {}]
  %s1 = inlined_call_operand.vmem [shape: bf16[2304,128], index: 1, kind: input, shape index: {}]
  %s2 = inlined_call_operand.vmem [shape: f32[1,128], index: 2, kind: input, shape index: {}]
  %s3 = inlined_call_operand.vmem [shape: bf16[128,128], index: 3, kind: input, shape index: {}]
  %s4 = inlined_call_operand.vmem [shape: f32[1,128], index: 4, kind: input, shape index: {}]
  %s5 = inlined_call_operand.vmem [shape: bf16[128,128], index: 5, kind: input, shape index: {}]
  %s6 = inlined_call_operand.vmem [shape: f32[1,128], index: 6, kind: input, shape index: {}]
  %s7 = inlined_call_operand.vmem [shape: f32[8,128], index: 7, kind: output, shape index: {}]
  %s8 = sld [smem:[#allocation0]]
  $region38: #{lenet_forward.5} parent=0
    _
  %s10 = ssub.s32 1, %s8
  %s11 = scalar_select 0, %s10, %s8
  // Predicated region
  $region2: #{lenet_forward.5} parent=0 // pred_check
    _
  $region3: #{lenet_forward.5} parent=0 // pred_check_branch
    %13 = sbr.rel (0) target = $region5
  $region4: #{lenet_forward.5} parent=0 // pred_region
    _
  $region5: #{lenet_forward.5} parent=0 // pred_fallthru
    _
  // Predicated region
  $region6: #{lenet_forward.5} parent=0 // pred_check
    _
  $region7: #{lenet_forward.5} parent=0 // pred_check_branch
    %15 = sbr.rel (0) target = $region9
  $region8: #{lenet_forward.5} parent=0 // pred_region
    _
  $region9: #{lenet_forward.5} parent=0 // pred_fallthru
    _
  // Predicated region
  $region10: #{lenet_forward.5} parent=0 // pred_check
    _
  $region11: #{lenet_forward.5} parent=0 // pred_check_branch
    %17 = sbr.rel (0) target = $region13
  $region12: #{lenet_forward.5} parent=0 // pred_region
    _
  $region13: #{lenet_forward.5} parent=0 // pred_fallthru
    _
  // Predicated region
  $region14: #{lenet_forward.5} parent=0 // pred_check
    _
  $region15: #{lenet_forward.5} parent=0 // pred_check_branch
    %19 = sbr.rel (0) target = $region17
  $region16: #{lenet_forward.5} parent=0 // pred_region
    _
  $region17: #{lenet_forward.5} parent=0 // pred_fallthru
    _
  // Predicated region
  $region18: #{lenet_forward.5} parent=0 // pred_check
    _
  $region19: #{lenet_forward.5} parent=0 // pred_check_branch
    %21 = sbr.rel (0) target = $region21
  $region20: #{lenet_forward.5} parent=0 // pred_region
    _
  $region21: #{lenet_forward.5} parent=0 // pred_fallthru
    _
  // Predicated region
  $region22: #{lenet_forward.5} parent=0 // pred_check
    _
  $region23: #{lenet_forward.5} parent=0 // pred_check_branch
    %23 = sbr.rel (0) target = $region25
  $region24: #{lenet_forward.5} parent=0 // pred_region
    _
  $region25: #{lenet_forward.5} parent=0 // pred_fallthru
    _
  // Predicated region
  $region26: #{lenet_forward.5} parent=0 // pred_check
    _
  $region27: #{lenet_forward.5} parent=0 // pred_check_branch
    %25 = sbr.rel (0) target = $region29
  $region28: #{lenet_forward.5} parent=0 // pred_region
    _
  $region29: #{lenet_forward.5} parent=0 // pred_fallthru
    _
  %v27 = vld [vmem:[%s0] sm:$0xff]
  %v28 = vld [vmem:[%s0 + $0x8] sm:$0xff]
  %v29 = vld [vmem:[%s0 + $0x10] sm:$0xff]
  %v30 = vld [vmem:[%s0 + $0x18] sm:$0xff]
  %v31 = vld [vmem:[%s0 + $0x20] sm:$0xff]
  %v32 = vld [vmem:[%s0 + $0x28] sm:$0xff]
  %v33 = vld [vmem:[%s0 + $0x30] sm:$0xff]
  %v34 = vld [vmem:[%s0 + $0x38] sm:$0xff]
  %v35 = vld [vmem:[%s0 + $0x40] sm:$0xff]
  %v36 = vld [vmem:[%s1] sm:$0xf]
  %v37 = vld [vmem:[%s1 + $0x4] sm:$0xf]
  %v38 = vld [vmem:[%s1 + $0x8] sm:$0xf]
  %v39 = vld [vmem:[%s1 + $0xc] sm:$0xf]
  %v40 = vld [vmem:[%s1 + $0x10] sm:$0xf]
  %v41 = vld [vmem:[%s1 + $0x14] sm:$0xf]
  %v42 = vld [vmem:[%s1 + $0x18] sm:$0xf]
  %v43 = vld [vmem:[%s1 + $0x1c] sm:$0xf]
  %v44 = vld [vmem:[%s1 + $0x20] sm:$0xf]
  %v45 = vld [vmem:[%s1 + $0x24] sm:$0xf]
  %v46 = vld [vmem:[%s1 + $0x28] sm:$0xf]
  %v47 = vld [vmem:[%s1 + $0x2c] sm:$0xf]
  %v48 = vld [vmem:[%s1 + $0x30] sm:$0xf]
  %v49 = vld [vmem:[%s1 + $0x34] sm:$0xf]
  %v50 = vld [vmem:[%s1 + $0x38] sm:$0xf]
  %v51 = vld [vmem:[%s1 + $0x3c] sm:$0xf]
  %v52 = vld [vmem:[%s1 + $0x40] sm:$0xf]
  %v53 = vld [vmem:[%s1 + $0x44] sm:$0xf]
  %v54 = vld [vmem:[%s1 + $0x48] sm:$0xf]
  %v55 = vld [vmem:[%s1 + $0x4c] sm:$0xf]
  %v56 = vld [vmem:[%s1 + $0x50] sm:$0xf]
  %v57 = vld [vmem:[%s1 + $0x54] sm:$0xf]
  %v58 = vld [vmem:[%s1 + $0x58] sm:$0xf]
  %v59 = vld [vmem:[%s1 + $0x5c] sm:$0xf]
  %v60 = vld [vmem:[%s1 + $0x60] sm:$0xf]
  %v61 = vld [vmem:[%s1 + $0x64] sm:$0xf]
  %v62 = vld [vmem:[%s1 + $0x68] sm:$0xf]
  %v63 = vld [vmem:[%s1 + $0x6c] sm:$0xf]
  %v64 = vld [vmem:[%s1 + $0x70] sm:$0xf]
  %v65 = vld [vmem:[%s1 + $0x74] sm:$0xf]
  %v66 = vld [vmem:[%s1 + $0x78] sm:$0xf]
  %v67 = vld [vmem:[%s1 + $0x7c] sm:$0xf]
  %v68 = vld [vmem:[%s1 + $0x80] sm:$0xf]
  %v69 = vld [vmem:[%s1 + $0x84] sm:$0xf]
  %v70 = vld [vmem:[%s1 + $0x88] sm:$0xf]
  %v71 = vld [vmem:[%s1 + $0x8c] sm:$0xf]
  %v72 = vld [vmem:[%s1 + $0x90] sm:$0xf]
  %v73 = vld [vmem:[%s1 + $0x94] sm:$0xf]
  %v74 = vld [vmem:[%s1 + $0x98] sm:$0xf]
  %v75 = vld [vmem:[%s1 + $0x9c] sm:$0xf]
  %v76 = vld [vmem:[%s1 + $0xa0] sm:$0xf]
  %v77 = vld [vmem:[%s1 + $0xa4] sm:$0xf]
  %v78 = vld [vmem:[%s1 + $0xa8] sm:$0xf]
  %v79 = vld [vmem:[%s1 + $0xac] sm:$0xf]
  %v80 = vld [vmem:[%s1 + $0xb0] sm:$0xf]
  %v81 = vld [vmem:[%s1 + $0xb4] sm:$0xf]
  %v82 = vld [vmem:[%s1 + $0xb8] sm:$0xf]
  %v83 = vld [vmem:[%s1 + $0xbc] sm:$0xf]
  %v84 = vld [vmem:[%s1 + $0xc0] sm:$0xf]
  %v85 = vld [vmem:[%s1 + $0xc4] sm:$0xf]
  %v86 = vld [vmem:[%s1 + $0xc8] sm:$0xf]
  %v87 = vld [vmem:[%s1 + $0xcc] sm:$0xf]
  %v88 = vld [vmem:[%s1 + $0xd0] sm:$0xf]
  %v89 = vld [vmem:[%s1 + $0xd4] sm:$0xf]
  %v90 = vld [vmem:[%s1 + $0xd8] sm:$0xf]
  %v91 = vld [vmem:[%s1 + $0xdc] sm:$0xf]
  %v92 = vld [vmem:[%s1 + $0xe0] sm:$0xf]
  %v93 = vld [vmem:[%s1 + $0xe4] sm:$0xf]
  %v94 = vld [vmem:[%s1 + $0xe8] sm:$0xf]
  %v95 = vld [vmem:[%s1 + $0xec] sm:$0xf]
  %v96 = vld [vmem:[%s1 + $0xf0] sm:$0xf]
  %v97 = vld [vmem:[%s1 + $0xf4] sm:$0xf]
  %v98 = vld [vmem:[%s1 + $0xf8] sm:$0xf]
  %v99 = vld [vmem:[%s1 + $0xfc] sm:$0xf]
  %v100 = vld [vmem:[%s1 + $0x100] sm:$0xf]
  %v101 = vld [vmem:[%s1 + $0x104] sm:$0xf]
  %v102 = vld [vmem:[%s1 + $0x108] sm:$0xf]
  %v103 = vld [vmem:[%s1 + $0x10c] sm:$0xf]
  %v104 = vld [vmem:[%s1 + $0x110] sm:$0xf]
  %v105 = vld [vmem:[%s1 + $0x114] sm:$0xf]
  %v106 = vld [vmem:[%s1 + $0x118] sm:$0xf]
  %v107 = vld [vmem:[%s1 + $0x11c] sm:$0xf]
  %v108 = vld [vmem:[%s1 + $0x120] sm:$0xf]
  %v109 = vld [vmem:[%s1 + $0x124] sm:$0xf]
  %v110 = vld [vmem:[%s1 + $0x128] sm:$0xf]
  %v111 = vld [vmem:[%s1 + $0x12c] sm:$0xf]
  %v112 = vld [vmem:[%s1 + $0x130] sm:$0xf]
  %v113 = vld [vmem:[%s1 + $0x134] sm:$0xf]
  %v114 = vld [vmem:[%s1 + $0x138] sm:$0xf]
  %v115 = vld [vmem:[%s1 + $0x13c] sm:$0xf]
  %v116 = vld [vmem:[%s1 + $0x140] sm:$0xf]
  %v117 = vld [vmem:[%s1 + $0x144] sm:$0xf]
  %v118 = vld [vmem:[%s1 + $0x148] sm:$0xf]
  %v119 = vld [vmem:[%s1 + $0x14c] sm:$0xf]
  %v120 = vld [vmem:[%s1 + $0x150] sm:$0xf]
  %v121 = vld [vmem:[%s1 + $0x154] sm:$0xf]
  %v122 = vld [vmem:[%s1 + $0x158] sm:$0xf]
  %v123 = vld [vmem:[%s1 + $0x15c] sm:$0xf]
  %v124 = vld [vmem:[%s1 + $0x160] sm:$0xf]
  %v125 = vld [vmem:[%s1 + $0x164] sm:$0xf]
  %v126 = vld [vmem:[%s1 + $0x168] sm:$0xf]
  %v127 = vld [vmem:[%s1 + $0x16c] sm:$0xf]
  %v128 = vld [vmem:[%s1 + $0x170] sm:$0xf]
  %v129 = vld [vmem:[%s1 + $0x174] sm:$0xf]
  %v130 = vld [vmem:[%s1 + $0x178] sm:$0xf]
  %v131 = vld [vmem:[%s1 + $0x17c] sm:$0xf]
  %v132 = vld [vmem:[%s1 + $0x180] sm:$0xf]
  %v133 = vld [vmem:[%s1 + $0x184] sm:$0xf]
  %v134 = vld [vmem:[%s1 + $0x188] sm:$0xf]
  %v135 = vld [vmem:[%s1 + $0x18c] sm:$0xf]
  %v136 = vld [vmem:[%s1 + $0x190] sm:$0xf]
  %v137 = vld [vmem:[%s1 + $0x194] sm:$0xf]
  %v138 = vld [vmem:[%s1 + $0x198] sm:$0xf]
  %v139 = vld [vmem:[%s1 + $0x19c] sm:$0xf]
  %v140 = vld [vmem:[%s1 + $0x1a0] sm:$0xf]
  %v141 = vld [vmem:[%s1 + $0x1a4] sm:$0xf]
  %v142 = vld [vmem:[%s1 + $0x1a8] sm:$0xf]
  %v143 = vld [vmem:[%s1 + $0x1ac] sm:$0xf]
  %v144 = vld [vmem:[%s1 + $0x1b0] sm:$0xf]
  %v145 = vld [vmem:[%s1 + $0x1b4] sm:$0xf]
  %v146 = vld [vmem:[%s1 + $0x1b8] sm:$0xf]
  %v147 = vld [vmem:[%s1 + $0x1bc] sm:$0xf]
  %v148 = vld [vmem:[%s1 + $0x1c0] sm:$0xf]
  %v149 = vld [vmem:[%s1 + $0x1c4] sm:$0xf]
  %v150 = vld [vmem:[%s1 + $0x1c8] sm:$0xf]
  %v151 = vld [vmem:[%s1 + $0x1cc] sm:$0xf]
  %v152 = vld [vmem:[%s1 + $0x1d0] sm:$0xf]
  %v153 = vld [vmem:[%s1 + $0x1d4] sm:$0xf]
  %v154 = vld [vmem:[%s1 + $0x1d8] sm:$0xf]
  %v155 = vld [vmem:[%s1 + $0x1dc] sm:$0xf]
  %v156 = vld [vmem:[%s1 + $0x1e0] sm:$0xf]
  %v157 = vld [vmem:[%s1 + $0x1e4] sm:$0xf]
  %v158 = vld [vmem:[%s1 + $0x1e8] sm:$0xf]
  %v159 = vld [vmem:[%s1 + $0x1ec] sm:$0xf]
  %v160 = vld [vmem:[%s1 + $0x1f0] sm:$0xf]
  %v161 = vld [vmem:[%s1 + $0x1f4] sm:$0xf]
  %v162 = vld [vmem:[%s1 + $0x1f8] sm:$0xf]
  %v163 = vld [vmem:[%s1 + $0x1fc] sm:$0xf]
  %v164 = vld [vmem:[%s1 + $0x200] sm:$0xf]
  %v165 = vld [vmem:[%s1 + $0x204] sm:$0xf]
  %v166 = vld [vmem:[%s1 + $0x208] sm:$0xf]
  %v167 = vld [vmem:[%s1 + $0x20c] sm:$0xf]
  %v168 = vld [vmem:[%s1 + $0x210] sm:$0xf]
  %v169 = vld [vmem:[%s1 + $0x214] sm:$0xf]
  %v170 = vld [vmem:[%s1 + $0x218] sm:$0xf]
  %v171 = vld [vmem:[%s1 + $0x21c] sm:$0xf]
  %v172 = vld [vmem:[%s1 + $0x220] sm:$0xf]
  %v173 = vld [vmem:[%s1 + $0x224] sm:$0xf]
  %v174 = vld [vmem:[%s1 + $0x228] sm:$0xf]
  %v175 = vld [vmem:[%s1 + $0x22c] sm:$0xf]
  %v176 = vld [vmem:[%s1 + $0x230] sm:$0xf]
  %v177 = vld [vmem:[%s1 + $0x234] sm:$0xf]
  %v178 = vld [vmem:[%s1 + $0x238] sm:$0xf]
  %v179 = vld [vmem:[%s1 + $0x23c] sm:$0xf]
  %v180 = vld [vmem:[%s1 + $0x240] sm:$0xf]
  %v181 = vld [vmem:[%s1 + $0x244] sm:$0xf]
  %v182 = vld [vmem:[%s1 + $0x248] sm:$0xf]
  %v183 = vld [vmem:[%s1 + $0x24c] sm:$0xf]
  %v184 = vld [vmem:[%s1 + $0x250] sm:$0xf]
  %v185 = vld [vmem:[%s1 + $0x254] sm:$0xf]
  %v186 = vld [vmem:[%s1 + $0x258] sm:$0xf]
  %v187 = vld [vmem:[%s1 + $0x25c] sm:$0xf]
  %v188 = vld [vmem:[%s1 + $0x260] sm:$0xf]
  %v189 = vld [vmem:[%s1 + $0x264] sm:$0xf]
  %v190 = vld [vmem:[%s1 + $0x268] sm:$0xf]
  %v191 = vld [vmem:[%s1 + $0x26c] sm:$0xf]
  %v192 = vld [vmem:[%s1 + $0x270] sm:$0xf]
  %v193 = vld [vmem:[%s1 + $0x274] sm:$0xf]
  %v194 = vld [vmem:[%s1 + $0x278] sm:$0xf]
  %v195 = vld [vmem:[%s1 + $0x27c] sm:$0xf]
  %v196 = vld [vmem:[%s1 + $0x280] sm:$0xf]
  %v197 = vld [vmem:[%s1 + $0x284] sm:$0xf]
  %v198 = vld [vmem:[%s1 + $0x288] sm:$0xf]
  %v199 = vld [vmem:[%s1 + $0x28c] sm:$0xf]
  %v200 = vld [vmem:[%s1 + $0x290] sm:$0xf]
  %v201 = vld [vmem:[%s1 + $0x294] sm:$0xf]
  %v202 = vld [vmem:[%s1 + $0x298] sm:$0xf]
  %v203 = vld [vmem:[%s1 + $0x29c] sm:$0xf]
  %v204 = vld [vmem:[%s1 + $0x2a0] sm:$0xf]
  %v205 = vld [vmem:[%s1 + $0x2a4] sm:$0xf]
  %v206 = vld [vmem:[%s1 + $0x2a8] sm:$0xf]
  %v207 = vld [vmem:[%s1 + $0x2ac] sm:$0xf]
  %v208 = vld [vmem:[%s1 + $0x2b0] sm:$0xf]
  %v209 = vld [vmem:[%s1 + $0x2b4] sm:$0xf]
  %v210 = vld [vmem:[%s1 + $0x2b8] sm:$0xf]
  %v211 = vld [vmem:[%s1 + $0x2bc] sm:$0xf]
  %v212 = vld [vmem:[%s1 + $0x2c0] sm:$0xf]
  %v213 = vld [vmem:[%s1 + $0x2c4] sm:$0xf]
  %v214 = vld [vmem:[%s1 + $0x2c8] sm:$0xf]
  %v215 = vld [vmem:[%s1 + $0x2cc] sm:$0xf]
  %v216 = vld [vmem:[%s1 + $0x2d0] sm:$0xf]
  %v217 = vld [vmem:[%s1 + $0x2d4] sm:$0xf]
  %v218 = vld [vmem:[%s1 + $0x2d8] sm:$0xf]
  %v219 = vld [vmem:[%s1 + $0x2dc] sm:$0xf]
  %v220 = vld [vmem:[%s1 + $0x2e0] sm:$0xf]
  %v221 = vld [vmem:[%s1 + $0x2e4] sm:$0xf]
  %v222 = vld [vmem:[%s1 + $0x2e8] sm:$0xf]
  %v223 = vld [vmem:[%s1 + $0x2ec] sm:$0xf]
  %v224 = vld [vmem:[%s1 + $0x2f0] sm:$0xf]
  %v225 = vld [vmem:[%s1 + $0x2f4] sm:$0xf]
  %v226 = vld [vmem:[%s1 + $0x2f8] sm:$0xf]
  %v227 = vld [vmem:[%s1 + $0x2fc] sm:$0xf]
  %v228 = vld [vmem:[%s1 + $0x300] sm:$0xf]
  %v229 = vld [vmem:[%s1 + $0x304] sm:$0xf]
  %v230 = vld [vmem:[%s1 + $0x308] sm:$0xf]
  %v231 = vld [vmem:[%s1 + $0x30c] sm:$0xf]
  %v232 = vld [vmem:[%s1 + $0x310] sm:$0xf]
  %v233 = vld [vmem:[%s1 + $0x314] sm:$0xf]
  %v234 = vld [vmem:[%s1 + $0x318] sm:$0xf]
  %v235 = vld [vmem:[%s1 + $0x31c] sm:$0xf]
  %v236 = vld [vmem:[%s1 + $0x320] sm:$0xf]
  %v237 = vld [vmem:[%s1 + $0x324] sm:$0xf]
  %v238 = vld [vmem:[%s1 + $0x328] sm:$0xf]
  %v239 = vld [vmem:[%s1 + $0x32c] sm:$0xf]
  %v240 = vld [vmem:[%s1 + $0x330] sm:$0xf]
  %v241 = vld [vmem:[%s1 + $0x334] sm:$0xf]
  %v242 = vld [vmem:[%s1 + $0x338] sm:$0xf]
  %v243 = vld [vmem:[%s1 + $0x33c] sm:$0xf]
  %v244 = vld [vmem:[%s1 + $0x340] sm:$0xf]
  %v245 = vld [vmem:[%s1 + $0x344] sm:$0xf]
  %v246 = vld [vmem:[%s1 + $0x348] sm:$0xf]
  %v247 = vld [vmem:[%s1 + $0x34c] sm:$0xf]
  %v248 = vld [vmem:[%s1 + $0x350] sm:$0xf]
  %v249 = vld [vmem:[%s1 + $0x354] sm:$0xf]
  %v250 = vld [vmem:[%s1 + $0x358] sm:$0xf]
  %v251 = vld [vmem:[%s1 + $0x35c] sm:$0xf]
  %v252 = vld [vmem:[%s1 + $0x360] sm:$0xf]
  %v253 = vld [vmem:[%s1 + $0x364] sm:$0xf]
  %v254 = vld [vmem:[%s1 + $0x368] sm:$0xf]
  %v255 = vld [vmem:[%s1 + $0x36c] sm:$0xf]
  %v256 = vld [vmem:[%s1 + $0x370] sm:$0xf]
  %v257 = vld [vmem:[%s1 + $0x374] sm:$0xf]
  %v258 = vld [vmem:[%s1 + $0x378] sm:$0xf]
  %v259 = vld [vmem:[%s1 + $0x37c] sm:$0xf]
  %v260 = vld [vmem:[%s1 + $0x380] sm:$0xf]
  %v261 = vld [vmem:[%s1 + $0x384] sm:$0xf]
  %v262 = vld [vmem:[%s1 + $0x388] sm:$0xf]
  %v263 = vld [vmem:[%s1 + $0x38c] sm:$0xf]
  %v264 = vld [vmem:[%s1 + $0x390] sm:$0xf]
  %v265 = vld [vmem:[%s1 + $0x394] sm:$0xf]
  %v266 = vld [vmem:[%s1 + $0x398] sm:$0xf]
  %v267 = vld [vmem:[%s1 + $0x39c] sm:$0xf]
  %v268 = vld [vmem:[%s1 + $0x3a0] sm:$0xf]
  %v269 = vld [vmem:[%s1 + $0x3a4] sm:$0xf]
  %v270 = vld [vmem:[%s1 + $0x3a8] sm:$0xf]
  %v271 = vld [vmem:[%s1 + $0x3ac] sm:$0xf]
  %v272 = vld [vmem:[%s1 + $0x3b0] sm:$0xf]
  %v273 = vld [vmem:[%s1 + $0x3b4] sm:$0xf]
  %v274 = vld [vmem:[%s1 + $0x3b8] sm:$0xf]
  %v275 = vld [vmem:[%s1 + $0x3bc] sm:$0xf]
  %v276 = vld [vmem:[%s1 + $0x3c0] sm:$0xf]
  %v277 = vld [vmem:[%s1 + $0x3c4] sm:$0xf]
  %v278 = vld [vmem:[%s1 + $0x3c8] sm:$0xf]
  %v279 = vld [vmem:[%s1 + $0x3cc] sm:$0xf]
  %v280 = vld [vmem:[%s1 + $0x3d0] sm:$0xf]
  %v281 = vld [vmem:[%s1 + $0x3d4] sm:$0xf]
  %v282 = vld [vmem:[%s1 + $0x3d8] sm:$0xf]
  %v283 = vld [vmem:[%s1 + $0x3dc] sm:$0xf]
  %v284 = vld [vmem:[%s1 + $0x3e0] sm:$0xf]
  %v285 = vld [vmem:[%s1 + $0x3e4] sm:$0xf]
  %v286 = vld [vmem:[%s1 + $0x3e8] sm:$0xf]
  %v287 = vld [vmem:[%s1 + $0x3ec] sm:$0xf]
  %v288 = vld [vmem:[%s1 + $0x3f0] sm:$0xf]
  %v289 = vld [vmem:[%s1 + $0x3f4] sm:$0xf]
  %v290 = vld [vmem:[%s1 + $0x3f8] sm:$0xf]
  %v291 = vld [vmem:[%s1 + $0x3fc] sm:$0xf]
  %v292 = vld [vmem:[%s1 + $0x400] sm:$0xf]
  %v293 = vld [vmem:[%s1 + $0x404] sm:$0xf]
  %v294 = vld [vmem:[%s1 + $0x408] sm:$0xf]
  %v295 = vld [vmem:[%s1 + $0x40c] sm:$0xf]
  %v296 = vld [vmem:[%s1 + $0x410] sm:$0xf]
  %v297 = vld [vmem:[%s1 + $0x414] sm:$0xf]
  %v298 = vld [vmem:[%s1 + $0x418] sm:$0xf]
  %v299 = vld [vmem:[%s1 + $0x41c] sm:$0xf]
  %v300 = vld [vmem:[%s1 + $0x420] sm:$0xf]
  %v301 = vld [vmem:[%s1 + $0x424] sm:$0xf]
  %v302 = vld [vmem:[%s1 + $0x428] sm:$0xf]
  %v303 = vld [vmem:[%s1 + $0x42c] sm:$0xf]
  %v304 = vld [vmem:[%s1 + $0x430] sm:$0xf]
  %v305 = vld [vmem:[%s1 + $0x434] sm:$0xf]
  %v306 = vld [vmem:[%s1 + $0x438] sm:$0xf]
  %v307 = vld [vmem:[%s1 + $0x43c] sm:$0xf]
  %v308 = vld [vmem:[%s1 + $0x440] sm:$0xf]
  %v309 = vld [vmem:[%s1 + $0x444] sm:$0xf]
  %v310 = vld [vmem:[%s1 + $0x448] sm:$0xf]
  %v311 = vld [vmem:[%s1 + $0x44c] sm:$0xf]
  %v312 = vld [vmem:[%s1 + $0x450] sm:$0xf]
  %v313 = vld [vmem:[%s1 + $0x454] sm:$0xf]
  %v314 = vld [vmem:[%s1 + $0x458] sm:$0xf]
  %v315 = vld [vmem:[%s1 + $0x45c] sm:$0xf]
  %v316 = vld [vmem:[%s1 + $0x460] sm:$0xf]
  %v317 = vld [vmem:[%s1 + $0x464] sm:$0xf]
  %v318 = vld [vmem:[%s1 + $0x468] sm:$0xf]
  %v319 = vld [vmem:[%s1 + $0x46c] sm:$0xf]
  %v320 = vld [vmem:[%s1 + $0x470] sm:$0xf]
  %v321 = vld [vmem:[%s1 + $0x474] sm:$0xf]
  %v322 = vld [vmem:[%s1 + $0x478] sm:$0xf]
  %v323 = vld [vmem:[%s1 + $0x47c] sm:$0xf]
  %v324 = vld [vmem:[%s2] sm:$0x1]
  %v326 = vlaneseq
  %v327 = vshrl.u32 %v326, 7
  %v328 = vsub.s32 0, %v327
  %v329 = vrot.slane %v324, %v328
  %v340 = vunpack.c.l.b16 %v27
  %v341 = vunpack.c.h.b16 %v27
  %v342 = vunpack.c.l.b16 %v28
  %v343 = vunpack.c.h.b16 %v28
  %v344 = vunpack.c.l.b16 %v29
  %v345 = vunpack.c.h.b16 %v29
  %v346 = vunpack.c.l.b16 %v30
  %v347 = vunpack.c.h.b16 %v30
  %v348 = vunpack.c.l.b16 %v31
  %v349 = vunpack.c.h.b16 %v31
  %v350 = vunpack.c.l.b16 %v32
  %v351 = vunpack.c.h.b16 %v32
  %v352 = vunpack.c.l.b16 %v33
  %v353 = vunpack.c.h.b16 %v33
  %v354 = vunpack.c.l.b16 %v34
  %v355 = vunpack.c.h.b16 %v34
  %v356 = vunpack.c.l.b16 %v35
  %v357 = vunpack.c.h.b16 %v35
  %v358 = vpack.c.b16 %v340, %v340
  %v359 = vpack.c.b16 %v341, %v341
  %v360 = vpack.c.b16 %v342, %v342
  %v361 = vpack.c.b16 %v343, %v343
  %v362 = vpack.c.b16 %v344, %v344
  %v363 = vpack.c.b16 %v345, %v345
  %v364 = vpack.c.b16 %v346, %v346
  %v365 = vpack.c.b16 %v347, %v347
  %v366 = vpack.c.b16 %v348, %v348
  %v367 = vpack.c.b16 %v349, %v349
  %v368 = vpack.c.b16 %v350, %v350
  %v369 = vpack.c.b16 %v351, %v351
  %v370 = vpack.c.b16 %v352, %v352
  %v371 = vpack.c.b16 %v353, %v353
  %v372 = vpack.c.b16 %v354, %v354
  %v373 = vpack.c.b16 %v355, %v355
  %v374 = vpack.c.b16 %v356, %v356
  %v375 = vpack.c.b16 %v357, %v357
  %v682 = vunpack.c.l.b16 %v36
  %v683 = vunpack.c.l.b16 %v37
  %v684 = vunpack.c.l.b16 %v38
  %v685 = vunpack.c.l.b16 %v39
  %v686 = vunpack.c.l.b16 %v40
  %v687 = vunpack.c.l.b16 %v41
  %v688 = vunpack.c.l.b16 %v42
  %v689 = vunpack.c.l.b16 %v43
  %v690 = vunpack.c.l.b16 %v44
  %v691 = vunpack.c.l.b16 %v45
  %v692 = vunpack.c.l.b16 %v46
  %v693 = vunpack.c.l.b16 %v47
  %v694 = vunpack.c.l.b16 %v48
  %v695 = vunpack.c.l.b16 %v49
  %v696 = vunpack.c.l.b16 %v50
  %v697 = vunpack.c.l.b16 %v51
  %v698 = vunpack.c.l.b16 %v52
  %v699 = vunpack.c.l.b16 %v53
  %v700 = vunpack.c.l.b16 %v54
  %v701 = vunpack.c.l.b16 %v55
  %v702 = vunpack.c.l.b16 %v56
  %v703 = vunpack.c.l.b16 %v57
  %v704 = vunpack.c.l.b16 %v58
  %v705 = vunpack.c.l.b16 %v59
  %v706 = vunpack.c.l.b16 %v60
  %v707 = vunpack.c.l.b16 %v61
  %v708 = vunpack.c.l.b16 %v62
  %v709 = vunpack.c.l.b16 %v63
  %v710 = vunpack.c.l.b16 %v64
  %v711 = vunpack.c.l.b16 %v65
  %v712 = vunpack.c.l.b16 %v66
  %v713 = vunpack.c.l.b16 %v67
  %v714 = vunpack.c.l.b16 %v68
  %v715 = vunpack.c.l.b16 %v69
  %v716 = vunpack.c.l.b16 %v70
  %v717 = vunpack.c.l.b16 %v71
  %v718 = vunpack.c.l.b16 %v72
  %v719 = vunpack.c.l.b16 %v73
  %v720 = vunpack.c.l.b16 %v74
  %v721 = vunpack.c.l.b16 %v75
  %v722 = vunpack.c.l.b16 %v76
  %v723 = vunpack.c.l.b16 %v77
  %v724 = vunpack.c.l.b16 %v78
  %v725 = vunpack.c.l.b16 %v79
  %v726 = vunpack.c.l.b16 %v80
  %v727 = vunpack.c.l.b16 %v81
  %v728 = vunpack.c.l.b16 %v82
  %v729 = vunpack.c.l.b16 %v83
  %v730 = vunpack.c.l.b16 %v84
  %v731 = vunpack.c.l.b16 %v85
  %v732 = vunpack.c.l.b16 %v86
  %v733 = vunpack.c.l.b16 %v87
  %v734 = vunpack.c.l.b16 %v88
  %v735 = vunpack.c.l.b16 %v89
  %v736 = vunpack.c.l.b16 %v90
  %v737 = vunpack.c.l.b16 %v91
  %v738 = vunpack.c.l.b16 %v92
  %v739 = vunpack.c.l.b16 %v93
  %v740 = vunpack.c.l.b16 %v94
  %v741 = vunpack.c.l.b16 %v95
  %v742 = vunpack.c.l.b16 %v96
  %v743 = vunpack.c.l.b16 %v97
  %v744 = vunpack.c.l.b16 %v98
  %v745 = vunpack.c.l.b16 %v99
  %v746 = vunpack.c.l.b16 %v100
  %v747 = vunpack.c.l.b16 %v101
  %v748 = vunpack.c.l.b16 %v102
  %v749 = vunpack.c.l.b16 %v103
  %v750 = vunpack.c.l.b16 %v104
  %v751 = vunpack.c.l.b16 %v105
  %v752 = vunpack.c.l.b16 %v106
  %v753 = vunpack.c.l.b16 %v107
  %v754 = vunpack.c.l.b16 %v108
  %v755 = vunpack.c.l.b16 %v109
  %v756 = vunpack.c.l.b16 %v110
  %v757 = vunpack.c.l.b16 %v111
  %v758 = vunpack.c.l.b16 %v112
  %v759 = vunpack.c.l.b16 %v113
  %v760 = vunpack.c.l.b16 %v114
  %v761 = vunpack.c.l.b16 %v115
  %v762 = vunpack.c.l.b16 %v116
  %v763 = vunpack.c.l.b16 %v117
  %v764 = vunpack.c.l.b16 %v118
  %v765 = vunpack.c.l.b16 %v119
  %v766 = vunpack.c.l.b16 %v120
  %v767 = vunpack.c.l.b16 %v121
  %v768 = vunpack.c.l.b16 %v122
  %v769 = vunpack.c.l.b16 %v123
  %v770 = vunpack.c.l.b16 %v124
  %v771 = vunpack.c.l.b16 %v125
  %v772 = vunpack.c.l.b16 %v126
  %v773 = vunpack.c.l.b16 %v127
  %v774 = vunpack.c.l.b16 %v128
  %v775 = vunpack.c.l.b16 %v129
  %v776 = vunpack.c.l.b16 %v130
  %v777 = vunpack.c.l.b16 %v131
  %v778 = vunpack.c.l.b16 %v132
  %v779 = vunpack.c.l.b16 %v133
  %v780 = vunpack.c.l.b16 %v134
  %v781 = vunpack.c.l.b16 %v135
  %v782 = vunpack.c.l.b16 %v136
  %v783 = vunpack.c.l.b16 %v137
  %v784 = vunpack.c.l.b16 %v138
  %v785 = vunpack.c.l.b16 %v139
  %v786 = vunpack.c.l.b16 %v140
  %v787 = vunpack.c.l.b16 %v141
  %v788 = vunpack.c.l.b16 %v142
  %v789 = vunpack.c.l.b16 %v143
  %v790 = vunpack.c.l.b16 %v144
  %v791 = vunpack.c.l.b16 %v145
  %v792 = vunpack.c.l.b16 %v146
  %v793 = vunpack.c.l.b16 %v147
  %v794 = vunpack.c.l.b16 %v148
  %v795 = vunpack.c.l.b16 %v149
  %v796 = vunpack.c.l.b16 %v150
  %v797 = vunpack.c.l.b16 %v151
  %v798 = vunpack.c.l.b16 %v152
  %v799 = vunpack.c.l.b16 %v153
  %v800 = vunpack.c.l.b16 %v154
  %v801 = vunpack.c.l.b16 %v155
  %v802 = vunpack.c.l.b16 %v156
  %v803 = vunpack.c.l.b16 %v157
  %v804 = vunpack.c.l.b16 %v158
  %v805 = vunpack.c.l.b16 %v159
  %v806 = vunpack.c.l.b16 %v160
  %v807 = vunpack.c.l.b16 %v161
  %v808 = vunpack.c.l.b16 %v162
  %v809 = vunpack.c.l.b16 %v163
  %v810 = vunpack.c.l.b16 %v164
  %v811 = vunpack.c.l.b16 %v165
  %v812 = vunpack.c.l.b16 %v166
  %v813 = vunpack.c.l.b16 %v167
  %v814 = vunpack.c.l.b16 %v168
  %v815 = vunpack.c.l.b16 %v169
  %v816 = vunpack.c.l.b16 %v170
  %v817 = vunpack.c.l.b16 %v171
  %v818 = vunpack.c.l.b16 %v172
  %v819 = vunpack.c.l.b16 %v173
  %v820 = vunpack.c.l.b16 %v174
  %v821 = vunpack.c.l.b16 %v175
  %v822 = vunpack.c.l.b16 %v176
  %v823 = vunpack.c.l.b16 %v177
  %v824 = vunpack.c.l.b16 %v178
  %v825 = vunpack.c.l.b16 %v179
  %v826 = vunpack.c.l.b16 %v180
  %v827 = vunpack.c.l.b16 %v181
  %v828 = vunpack.c.l.b16 %v182
  %v829 = vunpack.c.l.b16 %v183
  %v830 = vunpack.c.l.b16 %v184
  %v831 = vunpack.c.l.b16 %v185
  %v832 = vunpack.c.l.b16 %v186
  %v833 = vunpack.c.l.b16 %v187
  %v834 = vunpack.c.l.b16 %v188
  %v835 = vunpack.c.l.b16 %v189
  %v836 = vunpack.c.l.b16 %v190
  %v837 = vunpack.c.l.b16 %v191
  %v838 = vunpack.c.l.b16 %v192
  %v839 = vunpack.c.l.b16 %v193
  %v840 = vunpack.c.l.b16 %v194
  %v841 = vunpack.c.l.b16 %v195
  %v842 = vunpack.c.l.b16 %v196
  %v843 = vunpack.c.l.b16 %v197
  %v844 = vunpack.c.l.b16 %v198
  %v845 = vunpack.c.l.b16 %v199
  %v846 = vunpack.c.l.b16 %v200
  %v847 = vunpack.c.l.b16 %v201
  %v848 = vunpack.c.l.b16 %v202
  %v849 = vunpack.c.l.b16 %v203
  %v850 = vunpack.c.l.b16 %v204
  %v851 = vunpack.c.l.b16 %v205
  %v852 = vunpack.c.l.b16 %v206
  %v853 = vunpack.c.l.b16 %v207
  %v854 = vunpack.c.l.b16 %v208
  %v855 = vunpack.c.l.b16 %v209
  %v856 = vunpack.c.l.b16 %v210
  %v857 = vunpack.c.l.b16 %v211
  %v858 = vunpack.c.l.b16 %v212
  %v859 = vunpack.c.l.b16 %v213
  %v860 = vunpack.c.l.b16 %v214
  %v861 = vunpack.c.l.b16 %v215
  %v862 = vunpack.c.l.b16 %v216
  %v863 = vunpack.c.l.b16 %v217
  %v864 = vunpack.c.l.b16 %v218
  %v865 = vunpack.c.l.b16 %v219
  %v866 = vunpack.c.l.b16 %v220
  %v867 = vunpack.c.l.b16 %v221
  %v868 = vunpack.c.l.b16 %v222
  %v869 = vunpack.c.l.b16 %v223
  %v870 = vunpack.c.l.b16 %v224
  %v871 = vunpack.c.l.b16 %v225
  %v872 = vunpack.c.l.b16 %v226
  %v873 = vunpack.c.l.b16 %v227
  %v874 = vunpack.c.l.b16 %v228
  %v875 = vunpack.c.l.b16 %v229
  %v876 = vunpack.c.l.b16 %v230
  %v877 = vunpack.c.l.b16 %v231
  %v878 = vunpack.c.l.b16 %v232
  %v879 = vunpack.c.l.b16 %v233
  %v880 = vunpack.c.l.b16 %v234
  %v881 = vunpack.c.l.b16 %v235
  %v882 = vunpack.c.l.b16 %v236
  %v883 = vunpack.c.l.b16 %v237
  %v884 = vunpack.c.l.b16 %v238
  %v885 = vunpack.c.l.b16 %v239
  %v886 = vunpack.c.l.b16 %v240
  %v887 = vunpack.c.l.b16 %v241
  %v888 = vunpack.c.l.b16 %v242
  %v889 = vunpack.c.l.b16 %v243
  %v890 = vunpack.c.l.b16 %v244
  %v891 = vunpack.c.l.b16 %v245
  %v892 = vunpack.c.l.b16 %v246
  %v893 = vunpack.c.l.b16 %v247
  %v894 = vunpack.c.l.b16 %v248
  %v895 = vunpack.c.l.b16 %v249
  %v896 = vunpack.c.l.b16 %v250
  %v897 = vunpack.c.l.b16 %v251
  %v898 = vunpack.c.l.b16 %v252
  %v899 = vunpack.c.l.b16 %v253
  %v900 = vunpack.c.l.b16 %v254
  %v901 = vunpack.c.l.b16 %v255
  %v902 = vunpack.c.l.b16 %v256
  %v903 = vunpack.c.l.b16 %v257
  %v904 = vunpack.c.l.b16 %v258
  %v905 = vunpack.c.l.b16 %v259
  %v906 = vunpack.c.l.b16 %v260
  %v907 = vunpack.c.l.b16 %v261
  %v908 = vunpack.c.l.b16 %v262
  %v909 = vunpack.c.l.b16 %v263
  %v910 = vunpack.c.l.b16 %v264
  %v911 = vunpack.c.l.b16 %v265
  %v912 = vunpack.c.l.b16 %v266
  %v913 = vunpack.c.l.b16 %v267
  %v914 = vunpack.c.l.b16 %v268
  %v915 = vunpack.c.l.b16 %v269
  %v916 = vunpack.c.l.b16 %v270
  %v917 = vunpack.c.l.b16 %v271
  %v918 = vunpack.c.l.b16 %v272
  %v919 = vunpack.c.l.b16 %v273
  %v920 = vunpack.c.l.b16 %v274
  %v921 = vunpack.c.l.b16 %v275
  %v922 = vunpack.c.l.b16 %v276
  %v923 = vunpack.c.l.b16 %v277
  %v924 = vunpack.c.l.b16 %v278
  %v925 = vunpack.c.l.b16 %v279
  %v926 = vunpack.c.l.b16 %v280
  %v927 = vunpack.c.l.b16 %v281
  %v928 = vunpack.c.l.b16 %v282
  %v929 = vunpack.c.l.b16 %v283
  %v930 = vunpack.c.l.b16 %v284
  %v931 = vunpack.c.l.b16 %v285
  %v932 = vunpack.c.l.b16 %v286
  %v933 = vunpack.c.l.b16 %v287
  %v934 = vunpack.c.l.b16 %v288
  %v935 = vunpack.c.l.b16 %v289
  %v936 = vunpack.c.l.b16 %v290
  %v937 = vunpack.c.l.b16 %v291
  %v938 = vunpack.c.l.b16 %v292
  %v939 = vunpack.c.l.b16 %v293
  %v940 = vunpack.c.l.b16 %v294
  %v941 = vunpack.c.l.b16 %v295
  %v942 = vunpack.c.l.b16 %v296
  %v943 = vunpack.c.l.b16 %v297
  %v944 = vunpack.c.l.b16 %v298
  %v945 = vunpack.c.l.b16 %v299
  %v946 = vunpack.c.l.b16 %v300
  %v947 = vunpack.c.l.b16 %v301
  %v948 = vunpack.c.l.b16 %v302
  %v949 = vunpack.c.l.b16 %v303
  %v950 = vunpack.c.l.b16 %v304
  %v951 = vunpack.c.l.b16 %v305
  %v952 = vunpack.c.l.b16 %v306
  %v953 = vunpack.c.l.b16 %v307
  %v954 = vunpack.c.l.b16 %v308
  %v955 = vunpack.c.l.b16 %v309
  %v956 = vunpack.c.l.b16 %v310
  %v957 = vunpack.c.l.b16 %v311
  %v958 = vunpack.c.l.b16 %v312
  %v959 = vunpack.c.l.b16 %v313
  %v960 = vunpack.c.l.b16 %v314
  %v961 = vunpack.c.l.b16 %v315
  %v962 = vunpack.c.l.b16 %v316
  %v963 = vunpack.c.l.b16 %v317
  %v964 = vunpack.c.l.b16 %v318
  %v965 = vunpack.c.l.b16 %v319
  %v966 = vunpack.c.l.b16 %v320
  %v967 = vunpack.c.l.b16 %v321
  %v968 = vunpack.c.l.b16 %v322
  %v969 = vunpack.c.l.b16 %v323
  %v970 = vpack.c.b16 %v683, %v682
  %v971 = vpack.c.b16 %v685, %v684
  %v972 = vpack.c.b16 %v687, %v686
  %v973 = vpack.c.b16 %v689, %v688
  %v974 = vpack.c.b16 %v691, %v690
  %v975 = vpack.c.b16 %v693, %v692
  %v976 = vpack.c.b16 %v695, %v694
  %v977 = vpack.c.b16 %v697, %v696
  %v978 = vpack.c.b16 %v699, %v698
  %v979 = vpack.c.b16 %v701, %v700
  %v980 = vpack.c.b16 %v703, %v702
  %v981 = vpack.c.b16 %v705, %v704
  %v982 = vpack.c.b16 %v707, %v706
  %v983 = vpack.c.b16 %v709, %v708
  %v984 = vpack.c.b16 %v711, %v710
  %v985 = vpack.c.b16 %v713, %v712
  %v986 = vpack.c.b16 %v715, %v714
  %v987 = vpack.c.b16 %v717, %v716
  %v988 = vpack.c.b16 %v719, %v718
  %v989 = vpack.c.b16 %v721, %v720
  %v990 = vpack.c.b16 %v723, %v722
  %v991 = vpack.c.b16 %v725, %v724
  %v992 = vpack.c.b16 %v727, %v726
  %v993 = vpack.c.b16 %v729, %v728
  %v994 = vpack.c.b16 %v731, %v730
  %v995 = vpack.c.b16 %v733, %v732
  %v996 = vpack.c.b16 %v735, %v734
  %v997 = vpack.c.b16 %v737, %v736
  %v998 = vpack.c.b16 %v739, %v738
  %v999 = vpack.c.b16 %v741, %v740
  %v1000 = vpack.c.b16 %v743, %v742
  %v1001 = vpack.c.b16 %v745, %v744
  %v1002 = vpack.c.b16 %v747, %v746
  %v1003 = vpack.c.b16 %v749, %v748
  %v1004 = vpack.c.b16 %v751, %v750
  %v1005 = vpack.c.b16 %v753, %v752
  %v1006 = vpack.c.b16 %v755, %v754
  %v1007 = vpack.c.b16 %v757, %v756
  %v1008 = vpack.c.b16 %v759, %v758
  %v1009 = vpack.c.b16 %v761, %v760
  %v1010 = vpack.c.b16 %v763, %v762
  %v1011 = vpack.c.b16 %v765, %v764
  %v1012 = vpack.c.b16 %v767, %v766
  %v1013 = vpack.c.b16 %v769, %v768
  %v1014 = vpack.c.b16 %v771, %v770
  %v1015 = vpack.c.b16 %v773, %v772
  %v1016 = vpack.c.b16 %v775, %v774
  %v1017 = vpack.c.b16 %v777, %v776
  %v1018 = vpack.c.b16 %v779, %v778
  %v1019 = vpack.c.b16 %v781, %v780
  %v1020 = vpack.c.b16 %v783, %v782
  %v1021 = vpack.c.b16 %v785, %v784
  %v1022 = vpack.c.b16 %v787, %v786
  %v1023 = vpack.c.b16 %v789, %v788
  %v1024 = vpack.c.b16 %v791, %v790
  %v1025 = vpack.c.b16 %v793, %v792
  %v1026 = vpack.c.b16 %v795, %v794
  %v1027 = vpack.c.b16 %v797, %v796
  %v1028 = vpack.c.b16 %v799, %v798
  %v1029 = vpack.c.b16 %v801, %v800
  %v1030 = vpack.c.b16 %v803, %v802
  %v1031 = vpack.c.b16 %v805, %v804
  %v1032 = vpack.c.b16 %v807, %v806
  %v1033 = vpack.c.b16 %v809, %v808
  %v1034 = vpack.c.b16 %v811, %v810
  %v1035 = vpack.c.b16 %v813, %v812
  %v1036 = vpack.c.b16 %v815, %v814
  %v1037 = vpack.c.b16 %v817, %v816
  %v1038 = vpack.c.b16 %v819, %v818
  %v1039 = vpack.c.b16 %v821, %v820
  %v1040 = vpack.c.b16 %v823, %v822
  %v1041 = vpack.c.b16 %v825, %v824
  %v1042 = vpack.c.b16 %v827, %v826
  %v1043 = vpack.c.b16 %v829, %v828
  %v1044 = vpack.c.b16 %v831, %v830
  %v1045 = vpack.c.b16 %v833, %v832
  %v1046 = vpack.c.b16 %v835, %v834
  %v1047 = vpack.c.b16 %v837, %v836
  %v1048 = vpack.c.b16 %v839, %v838
  %v1049 = vpack.c.b16 %v841, %v840
  %v1050 = vpack.c.b16 %v843, %v842
  %v1051 = vpack.c.b16 %v845, %v844
  %v1052 = vpack.c.b16 %v847, %v846
  %v1053 = vpack.c.b16 %v849, %v848
  %v1054 = vpack.c.b16 %v851, %v850
  %v1055 = vpack.c.b16 %v853, %v852
  %v1056 = vpack.c.b16 %v855, %v854
  %v1057 = vpack.c.b16 %v857, %v856
  %v1058 = vpack.c.b16 %v859, %v858
  %v1059 = vpack.c.b16 %v861, %v860
  %v1060 = vpack.c.b16 %v863, %v862
  %v1061 = vpack.c.b16 %v865, %v864
  %v1062 = vpack.c.b16 %v867, %v866
  %v1063 = vpack.c.b16 %v869, %v868
  %v1064 = vpack.c.b16 %v871, %v870
  %v1065 = vpack.c.b16 %v873, %v872
  %v1066 = vpack.c.b16 %v875, %v874
  %v1067 = vpack.c.b16 %v877, %v876
  %v1068 = vpack.c.b16 %v879, %v878
  %v1069 = vpack.c.b16 %v881, %v880
  %v1070 = vpack.c.b16 %v883, %v882
  %v1071 = vpack.c.b16 %v885, %v884
  %v1072 = vpack.c.b16 %v887, %v886
  %v1073 = vpack.c.b16 %v889, %v888
  %v1074 = vpack.c.b16 %v891, %v890
  %v1075 = vpack.c.b16 %v893, %v892
  %v1076 = vpack.c.b16 %v895, %v894
  %v1077 = vpack.c.b16 %v897, %v896
  %v1078 = vpack.c.b16 %v899, %v898
  %v1079 = vpack.c.b16 %v901, %v900
  %v1080 = vpack.c.b16 %v903, %v902
  %v1081 = vpack.c.b16 %v905, %v904
  %v1082 = vpack.c.b16 %v907, %v906
  %v1083 = vpack.c.b16 %v909, %v908
  %v1084 = vpack.c.b16 %v911, %v910
  %v1085 = vpack.c.b16 %v913, %v912
  %v1086 = vpack.c.b16 %v915, %v914
  %v1087 = vpack.c.b16 %v917, %v916
  %v1088 = vpack.c.b16 %v919, %v918
  %v1089 = vpack.c.b16 %v921, %v920
  %v1090 = vpack.c.b16 %v923, %v922
  %v1091 = vpack.c.b16 %v925, %v924
  %v1092 = vpack.c.b16 %v927, %v926
  %v1093 = vpack.c.b16 %v929, %v928
  %v1094 = vpack.c.b16 %v931, %v930
  %v1095 = vpack.c.b16 %v933, %v932
  %v1096 = vpack.c.b16 %v935, %v934
  %v1097 = vpack.c.b16 %v937, %v936
  %v1098 = vpack.c.b16 %v939, %v938
  %v1099 = vpack.c.b16 %v941, %v940
  %v1100 = vpack.c.b16 %v943, %v942
  %v1101 = vpack.c.b16 %v945, %v944
  %v1102 = vpack.c.b16 %v947, %v946
  %v1103 = vpack.c.b16 %v949, %v948
  %v1104 = vpack.c.b16 %v951, %v950
  %v1105 = vpack.c.b16 %v953, %v952
  %v1106 = vpack.c.b16 %v955, %v954
  %v1107 = vpack.c.b16 %v957, %v956
  %v1108 = vpack.c.b16 %v959, %v958
  %v1109 = vpack.c.b16 %v961, %v960
  %v1110 = vpack.c.b16 %v963, %v962
  %v1111 = vpack.c.b16 %v965, %v964
  %v1112 = vpack.c.b16 %v967, %v966
  %v1113 = vpack.c.b16 %v969, %v968
  %1258 = vmatprep.subr.bf16.mxu0 0
  %1259 = vmatpush1.bf16.msra.mxu0 %v970
  %1260 = vmatprep.subr.bf16.mxu0 0
  %1261 = vmatpush1.bf16.msra.mxu0 %v971
  %1262 = vmatprep.subr.bf16.mxu0 0
  %1263 = vmatpush1.bf16.msra.mxu0 %v972
  %1264 = vmatprep.subr.bf16.mxu0 0
  %1265 = vmatpush1.bf16.msra.mxu0 %v973
  %1266 = vmatprep.subr.bf16.mxu0 0
  %1267 = vmatpush1.bf16.msra.mxu0 %v974
  %1268 = vmatprep.subr.bf16.mxu0 0
  %1269 = vmatpush1.bf16.msra.mxu0 %v975
  %1270 = vmatprep.subr.bf16.mxu0 0
  %1271 = vmatpush1.bf16.msra.mxu0 %v976
  %1272 = vmatprep.subr.bf16.mxu0 0
  %1273 = vmatpush1.bf16.msra.mxu0 %v977
  %1274 = vmatprep.subr.bf16.mxu0 0
  %1275 = vmatpush1.bf16.msra.mxu0 %v978
  %1276 = vmatprep.subr.bf16.mxu0 0
  %1277 = vmatpush1.bf16.msra.mxu0 %v979
  %1278 = vmatprep.subr.bf16.mxu0 0
  %1279 = vmatpush1.bf16.msra.mxu0 %v980
  %1280 = vmatprep.subr.bf16.mxu0 0
  %1281 = vmatpush1.bf16.msra.mxu0 %v981
  %1282 = vmatprep.subr.bf16.mxu0 0
  %1283 = vmatpush1.bf16.msra.mxu0 %v982
  %1284 = vmatprep.subr.bf16.mxu0 0
  %1285 = vmatpush1.bf16.msra.mxu0 %v983
  %1286 = vmatprep.subr.bf16.mxu0 0
  %1287 = vmatpush1.bf16.msra.mxu0 %v984
  %1288 = vmatprep.subr.bf16.mxu0 0
  %1289 = vmatpush1.bf16.msra.mxu0 %v985
  %1290 = vmatprep.mubr.bf16.mxu0 %v359
  %1291 = vmatmul.mubr.bf16.gmra.mrb[0].mxu0 %v358
  %v1292 = vpop.f32.mrb[0].mxu0
  %v1293 = vadd.f32 %v329, %v1292
  %v1294 = vpop.f32.mrb[0].mxu0
  %v1295 = vpop.f32.mrb[0].mxu0
  %v1296 = vpop.f32.mrb[0].mxu0
  %1297 = vdwg.mxu0
  %1298 = vmatprep.subr.bf16.mxu0 0
  %1299 = vmatpush1.bf16.msra.mxu0 %v986
  %1300 = vmatprep.subr.bf16.mxu0 0
  %1301 = vmatpush1.bf16.msra.mxu0 %v987
  %1302 = vmatprep.subr.bf16.mxu0 0
  %1303 = vmatpush1.bf16.msra.mxu0 %v988
  %1304 = vmatprep.subr.bf16.mxu0 0
  %1305 = vmatpush1.bf16.msra.mxu0 %v989
  %1306 = vmatprep.subr.bf16.mxu0 0
  %1307 = vmatpush1.bf16.msra.mxu0 %v990
  %1308 = vmatprep.subr.bf16.mxu0 0
  %1309 = vmatpush1.bf16.msra.mxu0 %v991
  %1310 = vmatprep.subr.bf16.mxu0 0
  %1311 = vmatpush1.bf16.msra.mxu0 %v992
  %1312 = vmatprep.subr.bf16.mxu0 0
  %1313 = vmatpush1.bf16.msra.mxu0 %v993
  %1314 = vmatprep.subr.bf16.mxu0 0
  %1315 = vmatpush1.bf16.msra.mxu0 %v994
  %1316 = vmatprep.subr.bf16.mxu0 0
  %1317 = vmatpush1.bf16.msra.mxu0 %v995
  %1318 = vmatprep.subr.bf16.mxu0 0
  %1319 = vmatpush1.bf16.msra.mxu0 %v996
  %1320 = vmatprep.subr.bf16.mxu0 0
  %1321 = vmatpush1.bf16.msra.mxu0 %v997
  %1322 = vmatprep.subr.bf16.mxu0 0
  %1323 = vmatpush1.bf16.msra.mxu0 %v998
  %1324 = vmatprep.subr.bf16.mxu0 0
  %1325 = vmatpush1.bf16.msra.mxu0 %v999
  %1326 = vmatprep.subr.bf16.mxu0 0
  %1327 = vmatpush1.bf16.msra.mxu0 %v1000
  %1328 = vmatprep.subr.bf16.mxu0 0
  %1329 = vmatpush1.bf16.msra.mxu0 %v1001
  %1330 = vmatprep.mubr.bf16.mxu0 %v361
  %1331 = vmatmul.mubr.bf16.gmra.mrb[0].mxu0 %v360
  %v1332 = vpop.f32.mrb[0].mxu0
  %v1333 = vadd.f32 %v1293, %v1332
  %v1334 = vpop.f32.mrb[0].mxu0
  %v1335 = vpop.f32.mrb[0].mxu0
  %v1336 = vpop.f32.mrb[0].mxu0
  %1337 = vdwg.mxu0
  %1338 = vmatprep.subr.bf16.mxu0 0
  %1339 = vmatpush1.bf16.msra.mxu0 %v1002
  %1340 = vmatprep.subr.bf16.mxu0 0
  %1341 = vmatpush1.bf16.msra.mxu0 %v1003
  %1342 = vmatprep.subr.bf16.mxu0 0
  %1343 = vmatpush1.bf16.msra.mxu0 %v1004
  %1344 = vmatprep.subr.bf16.mxu0 0
  %1345 = vmatpush1.bf16.msra.mxu0 %v1005
  %1346 = vmatprep.subr.bf16.mxu0 0
  %1347 = vmatpush1.bf16.msra.mxu0 %v1006
  %1348 = vmatprep.subr.bf16.mxu0 0
  %1349 = vmatpush1.bf16.msra.mxu0 %v1007
  %1350 = vmatprep.subr.bf16.mxu0 0
  %1351 = vmatpush1.bf16.msra.mxu0 %v1008
  %1352 = vmatprep.subr.bf16.mxu0 0
  %1353 = vmatpush1.bf16.msra.mxu0 %v1009
  %1354 = vmatprep.subr.bf16.mxu0 0
  %1355 = vmatpush1.bf16.msra.mxu0 %v1010
  %1356 = vmatprep.subr.bf16.mxu0 0
  %1357 = vmatpush1.bf16.msra.mxu0 %v1011
  %1358 = vmatprep.subr.bf16.mxu0 0
  %1359 = vmatpush1.bf16.msra.mxu0 %v1012
  %1360 = vmatprep.subr.bf16.mxu0 0
  %1361 = vmatpush1.bf16.msra.mxu0 %v1013
  %1362 = vmatprep.subr.bf16.mxu0 0
  %1363 = vmatpush1.bf16.msra.mxu0 %v1014
  %1364 = vmatprep.subr.bf16.mxu0 0
  %1365 = vmatpush1.bf16.msra.mxu0 %v1015
  %1366 = vmatprep.subr.bf16.mxu0 0
  %1367 = vmatpush1.bf16.msra.mxu0 %v1016
  %1368 = vmatprep.subr.bf16.mxu0 0
  %1369 = vmatpush1.bf16.msra.mxu0 %v1017
  %1370 = vmatprep.mubr.bf16.mxu0 %v363
  %1371 = vmatmul.mubr.bf16.gmra.mrb[0].mxu0 %v362
  %v1372 = vpop.f32.mrb[0].mxu0
  %v1373 = vadd.f32 %v1333, %v1372
  %v1374 = vpop.f32.mrb[0].mxu0
  %v1375 = vpop.f32.mrb[0].mxu0
  %v1376 = vpop.f32.mrb[0].mxu0
  %1377 = vdwg.mxu0
  %1378 = vmatprep.subr.bf16.mxu0 0
  %1379 = vmatpush1.bf16.msra.mxu0 %v1018
  %1380 = vmatprep.subr.bf16.mxu0 0
  %1381 = vmatpush1.bf16.msra.mxu0 %v1019
  %1382 = vmatprep.subr.bf16.mxu0 0
  %1383 = vmatpush1.bf16.msra.mxu0 %v1020
  %1384 = vmatprep.subr.bf16.mxu0 0
  %1385 = vmatpush1.bf16.msra.mxu0 %v1021
  %1386 = vmatprep.subr.bf16.mxu0 0
  %1387 = vmatpush1.bf16.msra.mxu0 %v1022
  %1388 = vmatprep.subr.bf16.mxu0 0
  %1389 = vmatpush1.bf16.msra.mxu0 %v1023
  %1390 = vmatprep.subr.bf16.mxu0 0
  %1391 = vmatpush1.bf16.msra.mxu0 %v1024
  %1392 = vmatprep.subr.bf16.mxu0 0
  %1393 = vmatpush1.bf16.msra.mxu0 %v1025
  %1394 = vmatprep.subr.bf16.mxu0 0
  %1395 = vmatpush1.bf16.msra.mxu0 %v1026
  %1396 = vmatprep.subr.bf16.mxu0 0
  %1397 = vmatpush1.bf16.msra.mxu0 %v1027
  %1398 = vmatprep.subr.bf16.mxu0 0
  %1399 = vmatpush1.bf16.msra.mxu0 %v1028
  %1400 = vmatprep.subr.bf16.mxu0 0
  %1401 = vmatpush1.bf16.msra.mxu0 %v1029
  %1402 = vmatprep.subr.bf16.mxu0 0
  %1403 = vmatpush1.bf16.msra.mxu0 %v1030
  %1404 = vmatprep.subr.bf16.mxu0 0
  %1405 = vmatpush1.bf16.msra.mxu0 %v1031
  %1406 = vmatprep.subr.bf16.mxu0 0
  %1407 = vmatpush1.bf16.msra.mxu0 %v1032
  %1408 = vmatprep.subr.bf16.mxu0 0
  %1409 = vmatpush1.bf16.msra.mxu0 %v1033
  %1410 = vmatprep.mubr.bf16.mxu0 %v365
  %1411 = vmatmul.mubr.bf16.gmra.mrb[0].mxu0 %v364
  %v1412 = vpop.f32.mrb[0].mxu0
  %v1413 = vadd.f32 %v1373, %v1412
  %v1414 = vpop.f32.mrb[0].mxu0
  %v1415 = vpop.f32.mrb[0].mxu0
  %v1416 = vpop.f32.mrb[0].mxu0
  %1417 = vdwg.mxu0
  %1418 = vmatprep.subr.bf16.mxu0 0
  %1419 = vmatpush1.bf16.msra.mxu0 %v1034
  %1420 = vmatprep.subr.bf16.mxu0 0
  %1421 = vmatpush1.bf16.msra.mxu0 %v1035
  %1422 = vmatprep.subr.bf16.mxu0 0
  %1423 = vmatpush1.bf16.msra.mxu0 %v1036
  %1424 = vmatprep.subr.bf16.mxu0 0
  %1425 = vmatpush1.bf16.msra.mxu0 %v1037
  %1426 = vmatprep.subr.bf16.mxu0 0
  %1427 = vmatpush1.bf16.msra.mxu0 %v1038
  %1428 = vmatprep.subr.bf16.mxu0 0
  %1429 = vmatpush1.bf16.msra.mxu0 %v1039
  %1430 = vmatprep.subr.bf16.mxu0 0
  %1431 = vmatpush1.bf16.msra.mxu0 %v1040
  %1432 = vmatprep.subr.bf16.mxu0 0
  %1433 = vmatpush1.bf16.msra.mxu0 %v1041
  %1434 = vmatprep.subr.bf16.mxu0 0
  %1435 = vmatpush1.bf16.msra.mxu0 %v1042
  %1436 = vmatprep.subr.bf16.mxu0 0
  %1437 = vmatpush1.bf16.msra.mxu0 %v1043
  %1438 = vmatprep.subr.bf16.mxu0 0
  %1439 = vmatpush1.bf16.msra.mxu0 %v1044
  %1440 = vmatprep.subr.bf16.mxu0 0
  %1441 = vmatpush1.bf16.msra.mxu0 %v1045
  %1442 = vmatprep.subr.bf16.mxu0 0
  %1443 = vmatpush1.bf16.msra.mxu0 %v1046
  %1444 = vmatprep.subr.bf16.mxu0 0
  %1445 = vmatpush1.bf16.msra.mxu0 %v1047
  %1446 = vmatprep.subr.bf16.mxu0 0
  %1447 = vmatpush1.bf16.msra.mxu0 %v1048
  %1448 = vmatprep.subr.bf16.mxu0 0
  %1449 = vmatpush1.bf16.msra.mxu0 %v1049
  %1450 = vmatprep.mubr.bf16.mxu0 %v367
  %1451 = vmatmul.mubr.bf16.gmra.mrb[0].mxu0 %v366
  %v1452 = vpop.f32.mrb[0].mxu0
  %v1453 = vadd.f32 %v1413, %v1452
  %v1454 = vpop.f32.mrb[0].mxu0
  %v1455 = vpop.f32.mrb[0].mxu0
  %v1456 = vpop.f32.mrb[0].mxu0
  %1457 = vdwg.mxu0
  %1458 = vmatprep.subr.bf16.mxu0 0
  %1459 = vmatpush1.bf16.msra.mxu0 %v1050
  %1460 = vmatprep.subr.bf16.mxu0 0
  %1461 = vmatpush1.bf16.msra.mxu0 %v1051
  %1462 = vmatprep.subr.bf16.mxu0 0
  %1463 = vmatpush1.bf16.msra.mxu0 %v1052
  %1464 = vmatprep.subr.bf16.mxu0 0
  %1465 = vmatpush1.bf16.msra.mxu0 %v1053
  %1466 = vmatprep.subr.bf16.mxu0 0
  %1467 = vmatpush1.bf16.msra.mxu0 %v1054
  %1468 = vmatprep.subr.bf16.mxu0 0
  %1469 = vmatpush1.bf16.msra.mxu0 %v1055
  %1470 = vmatprep.subr.bf16.mxu0 0
  %1471 = vmatpush1.bf16.msra.mxu0 %v1056
  %1472 = vmatprep.subr.bf16.mxu0 0
  %1473 = vmatpush1.bf16.msra.mxu0 %v1057
  %1474 = vmatprep.subr.bf16.mxu0 0
  %1475 = vmatpush1.bf16.msra.mxu0 %v1058
  %1476 = vmatprep.subr.bf16.mxu0 0
  %1477 = vmatpush1.bf16.msra.mxu0 %v1059
  %1478 = vmatprep.subr.bf16.mxu0 0
  %1479 = vmatpush1.bf16.msra.mxu0 %v1060
  %1480 = vmatprep.subr.bf16.mxu0 0
  %1481 = vmatpush1.bf16.msra.mxu0 %v1061
  %1482 = vmatprep.subr.bf16.mxu0 0
  %1483 = vmatpush1.bf16.msra.mxu0 %v1062
  %1484 = vmatprep.subr.bf16.mxu0 0
  %1485 = vmatpush1.bf16.msra.mxu0 %v1063
  %1486 = vmatprep.subr.bf16.mxu0 0
  %1487 = vmatpush1.bf16.msra.mxu0 %v1064
  %1488 = vmatprep.subr.bf16.mxu0 0
  %1489 = vmatpush1.bf16.msra.mxu0 %v1065
  %1490 = vmatprep.mubr.bf16.mxu0 %v369
  %1491 = vmatmul.mubr.bf16.gmra.mrb[0].mxu0 %v368
  %v1492 = vpop.f32.mrb[0].mxu0
  %v1493 = vadd.f32 %v1453, %v1492
  %v1494 = vpop.f32.mrb[0].mxu0
  %v1495 = vpop.f32.mrb[0].mxu0
  %v1496 = vpop.f32.mrb[0].mxu0
  %1497 = vdwg.mxu0
  %1498 = vmatprep.subr.bf16.mxu0 0
  %1499 = vmatpush1.bf16.msra.mxu0 %v1066
  %1500 = vmatprep.subr.bf16.mxu0 0
  %1501 = vmatpush1.bf16.msra.mxu0 %v1067
  %1502 = vmatprep.subr.bf16.mxu0 0
  %1503 = vmatpush1.bf16.msra.mxu0 %v1068
  %1504 = vmatprep.subr.bf16.mxu0 0
  %1505 = vmatpush1.bf16.msra.mxu0 %v1069
  %1506 = vmatprep.subr.bf16.mxu0 0
  %1507 = vmatpush1.bf16.msra.mxu0 %v1070
  %1508 = vmatprep.subr.bf16.mxu0 0
  %1509 = vmatpush1.bf16.msra.mxu0 %v1071
  %1510 = vmatprep.subr.bf16.mxu0 0
  %1511 = vmatpush1.bf16.msra.mxu0 %v1072
  %1512 = vmatprep.subr.bf16.mxu0 0
  %1513 = vmatpush1.bf16.msra.mxu0 %v1073
  %1514 = vmatprep.subr.bf16.mxu0 0
  %1515 = vmatpush1.bf16.msra.mxu0 %v1074
  %1516 = vmatprep.subr.bf16.mxu0 0
  %1517 = vmatpush1.bf16.msra.mxu0 %v1075
  %1518 = vmatprep.subr.bf16.mxu0 0
  %1519 = vmatpush1.bf16.msra.mxu0 %v1076
  %1520 = vmatprep.subr.bf16.mxu0 0
  %1521 = vmatpush1.bf16.msra.mxu0 %v1077
  %1522 = vmatprep.subr.bf16.mxu0 0
  %1523 = vmatpush1.bf16.msra.mxu0 %v1078
  %1524 = vmatprep.subr.bf16.mxu0 0
  %1525 = vmatpush1.bf16.msra.mxu0 %v1079
  %1526 = vmatprep.subr.bf16.mxu0 0
  %1527 = vmatpush1.bf16.msra.mxu0 %v1080
  %1528 = vmatprep.subr.bf16.mxu0 0
  %1529 = vmatpush1.bf16.msra.mxu0 %v1081
  %1530 = vmatprep.mubr.bf16.mxu0 %v371
  %1531 = vmatmul.mubr.bf16.gmra.mrb[0].mxu0 %v370
  %v1532 = vpop.f32.mrb[0].mxu0
  %v1533 = vadd.f32 %v1493, %v1532
  %v1534 = vpop.f32.mrb[0].mxu0
  %v1535 = vpop.f32.mrb[0].mxu0
  %v1536 = vpop.f32.mrb[0].mxu0
  %1537 = vdwg.mxu0
  %1538 = vmatprep.subr.bf16.mxu0 0
  %1539 = vmatpush1.bf16.msra.mxu0 %v1082
  %1540 = vmatprep.subr.bf16.mxu0 0
  %1541 = vmatpush1.bf16.msra.mxu0 %v1083
  %1542 = vmatprep.subr.bf16.mxu0 0
  %1543 = vmatpush1.bf16.msra.mxu0 %v1084
  %1544 = vmatprep.subr.bf16.mxu0 0
  %1545 = vmatpush1.bf16.msra.mxu0 %v1085
  %1546 = vmatprep.subr.bf16.mxu0 0
  %1547 = vmatpush1.bf16.msra.mxu0 %v1086
  %1548 = vmatprep.subr.bf16.mxu0 0
  %1549 = vmatpush1.bf16.msra.mxu0 %v1087
  %1550 = vmatprep.subr.bf16.mxu0 0
  %1551 = vmatpush1.bf16.msra.mxu0 %v1088
  %1552 = vmatprep.subr.bf16.mxu0 0
  %1553 = vmatpush1.bf16.msra.mxu0 %v1089
  %1554 = vmatprep.subr.bf16.mxu0 0
  %1555 = vmatpush1.bf16.msra.mxu0 %v1090
  %1556 = vmatprep.subr.bf16.mxu0 0
  %1557 = vmatpush1.bf16.msra.mxu0 %v1091
  %1558 = vmatprep.subr.bf16.mxu0 0
  %1559 = vmatpush1.bf16.msra.mxu0 %v1092
  %1560 = vmatprep.subr.bf16.mxu0 0
  %1561 = vmatpush1.bf16.msra.mxu0 %v1093
  %1562 = vmatprep.subr.bf16.mxu0 0
  %1563 = vmatpush1.bf16.msra.mxu0 %v1094
  %1564 = vmatprep.subr.bf16.mxu0 0
  %1565 = vmatpush1.bf16.msra.mxu0 %v1095
  %1566 = vmatprep.subr.bf16.mxu0 0
  %1567 = vmatpush1.bf16.msra.mxu0 %v1096
  %1568 = vmatprep.subr.bf16.mxu0 0
  %1569 = vmatpush1.bf16.msra.mxu0 %v1097
  %1570 = vmatprep.mubr.bf16.mxu0 %v373
  %1571 = vmatmul.mubr.bf16.gmra.mrb[0].mxu0 %v372
  %v1572 = vpop.f32.mrb[0].mxu0
  %v1573 = vadd.f32 %v1533, %v1572
  %v1574 = vpop.f32.mrb[0].mxu0
  %v1575 = vpop.f32.mrb[0].mxu0
  %v1576 = vpop.f32.mrb[0].mxu0
  %1577 = vdwg.mxu0
  %1578 = vmatprep.subr.bf16.mxu0 0
  %1579 = vmatpush1.bf16.msra.mxu0 %v1098
  %1580 = vmatprep.subr.bf16.mxu0 0
  %1581 = vmatpush1.bf16.msra.mxu0 %v1099
  %1582 = vmatprep.subr.bf16.mxu0 0
  %1583 = vmatpush1.bf16.msra.mxu0 %v1100
  %1584 = vmatprep.subr.bf16.mxu0 0
  %1585 = vmatpush1.bf16.msra.mxu0 %v1101
  %1586 = vmatprep.subr.bf16.mxu0 0
  %1587 = vmatpush1.bf16.msra.mxu0 %v1102
  %1588 = vmatprep.subr.bf16.mxu0 0
  %1589 = vmatpush1.bf16.msra.mxu0 %v1103
  %1590 = vmatprep.subr.bf16.mxu0 0
  %1591 = vmatpush1.bf16.msra.mxu0 %v1104
  %1592 = vmatprep.subr.bf16.mxu0 0
  %1593 = vmatpush1.bf16.msra.mxu0 %v1105
  %1594 = vmatprep.subr.bf16.mxu0 0
  %1595 = vmatpush1.bf16.msra.mxu0 %v1106
  %1596 = vmatprep.subr.bf16.mxu0 0
  %1597 = vmatpush1.bf16.msra.mxu0 %v1107
  %1598 = vmatprep.subr.bf16.mxu0 0
  %1599 = vmatpush1.bf16.msra.mxu0 %v1108
  %1600 = vmatprep.subr.bf16.mxu0 0
  %1601 = vmatpush1.bf16.msra.mxu0 %v1109
  %1602 = vmatprep.subr.bf16.mxu0 0
  %1603 = vmatpush1.bf16.msra.mxu0 %v1110
  %1604 = vmatprep.subr.bf16.mxu0 0
  %1605 = vmatpush1.bf16.msra.mxu0 %v1111
  %1606 = vmatprep.subr.bf16.mxu0 0
  %1607 = vmatpush1.bf16.msra.mxu0 %v1112
  %1608 = vmatprep.subr.bf16.mxu0 0
  %1609 = vmatpush1.bf16.msra.mxu0 %v1113
  %1610 = vmatprep.mubr.bf16.mxu0 %v375
  %1611 = vmatmul.mubr.bf16.gmra.mrb[0].mxu0 %v374
  %v1612 = vpop.f32.mrb[0].mxu0
  %v1613 = vadd.f32 %v1573, %v1612
  %v1614 = vpop.f32.mrb[0].mxu0
  %v1615 = vpop.f32.mrb[0].mxu0
  %v1616 = vpop.f32.mrb[0].mxu0
  %1617 = vdwg.mxu0
  %v1618 = vmax.f32 %v1613, 0.0
  %v1619 = vpack.c.bf16 %v1618, %v1618
  %v1620 = vld [vmem:[%s3] sm:$0xf]
  %v1621 = vld [vmem:[%s3 + $0x4] sm:$0xf]
  %v1622 = vld [vmem:[%s3 + $0x8] sm:$0xf]
  %v1623 = vld [vmem:[%s3 + $0xc] sm:$0xf]
  %v1624 = vld [vmem:[%s3 + $0x10] sm:$0xf]
  %v1625 = vld [vmem:[%s3 + $0x14] sm:$0xf]
  %v1626 = vld [vmem:[%s3 + $0x18] sm:$0xf]
  %v1627 = vld [vmem:[%s3 + $0x1c] sm:$0xf]
  %v1628 = vld [vmem:[%s3 + $0x20] sm:$0xf]
  %v1629 = vld [vmem:[%s3 + $0x24] sm:$0xf]
  %v1630 = vld [vmem:[%s3 + $0x28] sm:$0xf]
  %v1631 = vld [vmem:[%s3 + $0x2c] sm:$0xf]
  %v1632 = vld [vmem:[%s3 + $0x30] sm:$0xf]
  %v1633 = vld [vmem:[%s3 + $0x34] sm:$0xf]
  %v1634 = vld [vmem:[%s3 + $0x38] sm:$0xf]
  %v1635 = vld [vmem:[%s3 + $0x3c] sm:$0xf]
  %v1636 = vld [vmem:[%s4] sm:$0x1]
  %v1638 = vlaneseq
  %v1639 = vshrl.u32 %v1638, 7
  %v1640 = vsub.s32 0, %v1639
  %v1641 = vrot.slane %v1636, %v1640
  %v1659 = vunpack.c.l.b16 %v1620
  %v1660 = vunpack.c.l.b16 %v1621
  %v1661 = vunpack.c.l.b16 %v1622
  %v1662 = vunpack.c.l.b16 %v1623
  %v1663 = vunpack.c.l.b16 %v1624
  %v1664 = vunpack.c.l.b16 %v1625
  %v1665 = vunpack.c.l.b16 %v1626
  %v1666 = vunpack.c.l.b16 %v1627
  %v1667 = vunpack.c.l.b16 %v1628
  %v1668 = vunpack.c.l.b16 %v1629
  %v1669 = vunpack.c.l.b16 %v1630
  %v1670 = vunpack.c.l.b16 %v1631
  %v1671 = vunpack.c.l.b16 %v1632
  %v1672 = vunpack.c.l.b16 %v1633
  %v1673 = vunpack.c.l.b16 %v1634
  %v1674 = vunpack.c.l.b16 %v1635
  %v1675 = vpack.c.b16 %v1660, %v1659
  %v1676 = vpack.c.b16 %v1662, %v1661
  %v1677 = vpack.c.b16 %v1664, %v1663
  %v1678 = vpack.c.b16 %v1666, %v1665
  %v1679 = vpack.c.b16 %v1668, %v1667
  %v1680 = vpack.c.b16 %v1670, %v1669
  %v1681 = vpack.c.b16 %v1672, %v1671
  %v1682 = vpack.c.b16 %v1674, %v1673
  %1691 = vmatprep.subr.bf16.mxu0 0
  %1692 = vmatpush1.bf16.msra.mxu0 %v1675
  %1693 = vmatprep.subr.bf16.mxu0 0
  %1694 = vmatpush1.bf16.msra.mxu0 %v1676
  %1695 = vmatprep.subr.bf16.mxu0 0
  %1696 = vmatpush1.bf16.msra.mxu0 %v1677
  %1697 = vmatprep.subr.bf16.mxu0 0
  %1698 = vmatpush1.bf16.msra.mxu0 %v1678
  %1699 = vmatprep.subr.bf16.mxu0 0
  %1700 = vmatpush1.bf16.msra.mxu0 %v1679
  %1701 = vmatprep.subr.bf16.mxu0 0
  %1702 = vmatpush1.bf16.msra.mxu0 %v1680
  %1703 = vmatprep.subr.bf16.mxu0 0
  %1704 = vmatpush1.bf16.msra.mxu0 %v1681
  %1705 = vmatprep.subr.bf16.mxu0 0
  %1706 = vmatpush1.bf16.msra.mxu0 %v1682
  %1707 = vmatprep.subr.bf16.mxu0 0
  %1708 = vmatpush1.bf16.msra.mxu0 0
  %1709 = vmatprep.subr.bf16.mxu0 0
  %1710 = vmatpush1.bf16.msra.mxu0 0
  %1711 = vmatprep.subr.bf16.mxu0 0
  %1712 = vmatpush1.bf16.msra.mxu0 0
  %1713 = vmatprep.subr.bf16.mxu0 0
  %1714 = vmatpush1.bf16.msra.mxu0 0
  %1715 = vmatprep.subr.bf16.mxu0 0
  %1716 = vmatpush1.bf16.msra.mxu0 0
  %1717 = vmatprep.subr.bf16.mxu0 0
  %1718 = vmatpush1.bf16.msra.mxu0 0
  %1719 = vmatprep.subr.bf16.mxu0 0
  %1720 = vmatpush1.bf16.msra.mxu0 0
  %1721 = vmatprep.subr.bf16.mxu0 0
  %1722 = vmatpush1.bf16.msra.mxu0 0
  %1723 = vmatprep.mubr.bf16.mxu0 0
  %1724 = vmatmul.mubr.bf16.gmra.mrb[0].mxu0 %v1619
  %v1725 = vpop.f32.mrb[0].mxu0
  %v1726 = vadd.f32 %v1641, %v1725
  %v1727 = vpop.f32.mrb[0].mxu0
  %v1728 = vpop.f32.mrb[0].mxu0
  %v1729 = vpop.f32.mrb[0].mxu0
  %1730 = vdwg.mxu0
  %v1731 = vmax.f32 %v1726, 0.0
  %v1732 = vpack.c.bf16 %v1731, %v1731
  %v1733 = vld [vmem:[%s5] sm:$0xf]
  %v1734 = vld [vmem:[%s5 + $0x4] sm:$0xf]
  %v1735 = vld [vmem:[%s5 + $0x8] sm:$0xf]
  %v1736 = vld [vmem:[%s5 + $0xc] sm:$0xf]
  %v1737 = vld [vmem:[%s5 + $0x10] sm:$0xf]
  %v1738 = vld [vmem:[%s5 + $0x14] sm:$0xf]
  %v1739 = vld [vmem:[%s5 + $0x18] sm:$0xf]
  %v1740 = vld [vmem:[%s5 + $0x1c] sm:$0xf]
  %v1741 = vld [vmem:[%s5 + $0x20] sm:$0xf]
  %v1742 = vld [vmem:[%s5 + $0x24] sm:$0xf]
  %v1743 = vld [vmem:[%s5 + $0x28] sm:$0xf]
  %v1744 = vld [vmem:[%s5 + $0x2c] sm:$0xf]
  %v1745 = vld [vmem:[%s5 + $0x30] sm:$0xf]
  %v1746 = vld [vmem:[%s5 + $0x34] sm:$0xf]
  %v1747 = vld [vmem:[%s5 + $0x38] sm:$0xf]
  %v1748 = vld [vmem:[%s5 + $0x3c] sm:$0xf]
  %v1749 = vld [vmem:[%s6] sm:$0x1]
  %v1751 = vlaneseq
  %v1752 = vshrl.u32 %v1751, 7
  %v1753 = vsub.s32 0, %v1752
  %v1754 = vrot.slane %v1749, %v1753
  %v1772 = vunpack.c.l.b16 %v1733
  %v1773 = vunpack.c.l.b16 %v1734
  %v1774 = vunpack.c.l.b16 %v1735
  %v1775 = vunpack.c.l.b16 %v1736
  %v1776 = vunpack.c.l.b16 %v1737
  %v1777 = vunpack.c.l.b16 %v1738
  %v1778 = vunpack.c.l.b16 %v1739
  %v1779 = vunpack.c.l.b16 %v1740
  %v1780 = vunpack.c.l.b16 %v1741
  %v1781 = vunpack.c.l.b16 %v1742
  %v1782 = vunpack.c.l.b16 %v1743
  %v1783 = vunpack.c.l.b16 %v1744
  %v1784 = vunpack.c.l.b16 %v1745
  %v1785 = vunpack.c.l.b16 %v1746
  %v1786 = vunpack.c.l.b16 %v1747
  %v1787 = vunpack.c.l.b16 %v1748
  %v1788 = vpack.c.b16 %v1773, %v1772
  %v1789 = vpack.c.b16 %v1775, %v1774
  %v1790 = vpack.c.b16 %v1777, %v1776
  %v1791 = vpack.c.b16 %v1779, %v1778
  %v1792 = vpack.c.b16 %v1781, %v1780
  %v1793 = vpack.c.b16 %v1783, %v1782
  %v1794 = vpack.c.b16 %v1785, %v1784
  %v1795 = vpack.c.b16 %v1787, %v1786
  %1804 = vmatprep.subr.bf16.mxu0 0
  %1805 = vmatpush1.bf16.msra.mxu0 %v1788
  %1806 = vmatprep.subr.bf16.mxu0 0
  %1807 = vmatpush1.bf16.msra.mxu0 %v1789
  %1808 = vmatprep.subr.bf16.mxu0 0
  %1809 = vmatpush1.bf16.msra.mxu0 %v1790
  %1810 = vmatprep.subr.bf16.mxu0 0
  %1811 = vmatpush1.bf16.msra.mxu0 %v1791
  %1812 = vmatprep.subr.bf16.mxu0 0
  %1813 = vmatpush1.bf16.msra.mxu0 %v1792
  %1814 = vmatprep.subr.bf16.mxu0 0
  %1815 = vmatpush1.bf16.msra.mxu0 %v1793
  %1816 = vmatprep.subr.bf16.mxu0 0
  %1817 = vmatpush1.bf16.msra.mxu0 %v1794
  %1818 = vmatprep.subr.bf16.mxu0 0
  %1819 = vmatpush1.bf16.msra.mxu0 %v1795
  %1820 = vmatprep.subr.bf16.mxu0 0
  %1821 = vmatpush1.bf16.msra.mxu0 0
  %1822 = vmatprep.subr.bf16.mxu0 0
  %1823 = vmatpush1.bf16.msra.mxu0 0
  %1824 = vmatprep.subr.bf16.mxu0 0
  %1825 = vmatpush1.bf16.msra.mxu0 0
  %1826 = vmatprep.subr.bf16.mxu0 0
  %1827 = vmatpush1.bf16.msra.mxu0 0
  %1828 = vmatprep.subr.bf16.mxu0 0
  %1829 = vmatpush1.bf16.msra.mxu0 0
  %1830 = vmatprep.subr.bf16.mxu0 0
  %1831 = vmatpush1.bf16.msra.mxu0 0
  %1832 = vmatprep.subr.bf16.mxu0 0
  %1833 = vmatpush1.bf16.msra.mxu0 0
  %1834 = vmatprep.subr.bf16.mxu0 0
  %1835 = vmatpush1.bf16.msra.mxu0 0
  %1836 = vmatprep.mubr.bf16.mxu0 0
  %1837 = vmatmul.mubr.bf16.gmra.mrb[0].mxu0 %v1732
  %v1838 = vpop.f32.mrb[0].mxu0
  %v1839 = vadd.f32 %v1754, %v1838
  %v1840 = vpop.f32.mrb[0].mxu0
  %v1841 = vpop.f32.mrb[0].mxu0
  %v1842 = vpop.f32.mrb[0].mxu0
  %1843 = vdwg.mxu0
  %1844 = vst [vmem:[%s7] sm:$0xff] %v1839
  // Predicated region
  $region30: #{lenet_forward.5} parent=0 // pred_check
    _
  $region31: #{lenet_forward.5} parent=0 // pred_check_branch
    %1846 = sbr.rel (0) target = $region33
  $region32: #{lenet_forward.5} parent=0 // pred_region
    _
  $region33: #{lenet_forward.5} parent=0 // pred_fallthru
    _
  // Predicated region
  $region34: #{lenet_forward.5} parent=0 // pred_check
    _
  $region35: #{lenet_forward.5} parent=0 // pred_check_branch
    %1848 = sbr.rel (0) target = $region37
  $region36: #{lenet_forward.5} parent=0 // pred_region
    _
  $region37: #{lenet_forward.5} parent=0 // pred_fallthru
    _

</llo_original>
